<compile_context>
chip_gen: v7x
topology: tpu7x:2x2x1
jax: 0.10.0
libtpu: 0.0.40
codegen_flags: <defaults>
</compile_context>

<pallas_src>
import functools

import jax
import jax.numpy as jnp
from jax.experimental import pallas as pl
from jax.experimental.pallas import tpu as pltpu


def _conv3x3_phase_im2col_kernel(ph_ref, w_ref, o_ref, col_ref, *,
                                 S, Ho, Wo, C_in, C_out):
    """3x3 conv for one image: in-kernel im2col + a single MXU matmul.

    ph_ref:  (1, S*S, Hp, Wp, C_in)  polyphase, zero-padded NHWC input (bf16).
                                     For stride 1 this is the padded image
                                     itself (S == 1).
    w_ref:   (9*C_in, C_out)         weights, rows ordered (kh, kw, c_in).
    o_ref:   (1, Ho*Wo, C_out)       output tile (bf16).
    col_ref: (Ho*Wo, 9*C_in)         VMEM im2col scratch (bf16).
    """
    M = Ho * Wo
    for kh in range(3):
        for kw in range(3):
            p = (kh % S) * S + (kw % S)   # which polyphase image
            r0 = kh // S                  # static row/col offset inside it
            c0 = kw // S
            tap = kh * 3 + kw
            # Static, contiguous slice only (no strided ds, no dynamic idx).
            patch = ph_ref[0, p, r0:r0 + Ho, c0:c0 + Wo, :]   # (Ho, Wo, C_in)
            if Wo % 8 == 0:
                # Lane dim untouched, sublane dim a multiple of 8 -> cheap
                # retiling reshape.
                col_ref[:, tap * C_in:(tap + 1) * C_in] = patch.reshape(M, C_in)
            else:
                # Tiny outputs (Wo not a sublane multiple): store row by row to
                # avoid a misaligned relayout reshape.
                for ho in range(Ho):
                    col_ref[ho * Wo:(ho + 1) * Wo,
                            tap * C_in:(tap + 1) * C_in] = patch[ho]

    # Single big-K matmul: (Ho*Wo, 9*C_in) x (9*C_in, C_out), f32 accumulation.
    acc = jnp.dot(col_ref[...], w_ref[...],
                  preferred_element_type=jnp.float32)
    o_ref[0] = acc.astype(o_ref.dtype)


def _polyphase(x_pad, stride, Ho, Wo):
    """(N, H+2, W+2, C) padded input -> (N, S*S, Hp, Wp, C) phase images.

    phase[ph*S + pw][a, b, :] == x_pad[S*a + ph, S*b + pw, :], so every tap of
    the strided conv becomes a unit-stride window into one phase image.
    """
    if stride == 1:
        return x_pad[:, None], x_pad.shape[1], x_pad.shape[2]
    Hp, Wp = Ho + 1, Wo + 1
    phases = []
    for ph in range(stride):
        for pw in range(stride):
            p = x_pad[:, ph::stride, pw::stride, :]
            p = p[:, :Hp, :Wp, :]
            pad_h, pad_w = Hp - p.shape[1], Wp - p.shape[2]
            if pad_h or pad_w:
                p = jnp.pad(p, ((0, 0), (0, pad_h), (0, pad_w), (0, 0)))
            phases.append(p)
    return jnp.stack(phases, axis=1), Hp, Wp


def conv3x3_nhwc(x_nhwc, w_hwio, stride):
    """kernel=3 / padding=1 conv (stride 1 or 2), NHWC, bf16 MXU / f32 accum."""
    N, H, W, C_in = x_nhwc.shape
    C_out = w_hwio.shape[-1]
    Ho = (H - 1) // stride + 1
    Wo = (W - 1) // stride + 1
    S = stride

    x_pad = jnp.pad(x_nhwc.astype(jnp.bfloat16),
                    ((0, 0), (1, 1), (1, 1), (0, 0)))
    phases, Hp, Wp = _polyphase(x_pad, stride, Ho, Wo)   # (N, S*S, Hp, Wp, C)

    # HWIO (3, 3, C_in, C_out) -> (9*C_in, C_out), row order (kh, kw, c_in).
    w_mat = w_hwio.astype(jnp.bfloat16).reshape(9 * C_in, C_out)

    kernel = functools.partial(_conv3x3_phase_im2col_kernel,
                               S=S, Ho=Ho, Wo=Wo, C_in=C_in, C_out=C_out)

    out = pl.pallas_call(
        kernel,
        out_shape=jax.ShapeDtypeStruct((N, Ho * Wo, C_out), jnp.bfloat16),
        grid_spec=pltpu.PrefetchScalarGridSpec(
            num_scalar_prefetch=0,
            grid=(N,),
            in_specs=[
                pl.BlockSpec((1, S * S, Hp, Wp, C_in),
                             lambda n: (n, 0, 0, 0, 0)),
                pl.BlockSpec((9 * C_in, C_out), lambda n: (0, 0)),
            ],
            out_specs=pl.BlockSpec((1, Ho * Wo, C_out), lambda n: (n, 0, 0)),
            scratch_shapes=[pltpu.VMEM((Ho * Wo, 9 * C_in), jnp.bfloat16)],
        ),
        compiler_params=pltpu.CompilerParams(
            dimension_semantics=("parallel",)),
    )(phases, w_mat)

    return out.reshape(N, Ho, Wo, C_out)


class REFOverlapPatchEmbedPallas:
    """JAX/Pallas port of REFOverlapPatchEmbed(in_c, embed_dim, bias=False)."""

    def __init__(self, in_c=2, embed_dim=48, bias=False,
                 key=jax.random.PRNGKey(0)):
        assert not bias, "reference module uses bias=False"
        k1, k2, k3 = jax.random.split(key, 3)

        def init(k, cin, cout):
            # deterministic Kaiming-uniform-like init, stored HWIO (f32 master)
            fan_in = cin * 9
            bound = 1.0 / (fan_in ** 0.5)
            return jax.random.uniform(k, (3, 3, cin, cout), jnp.float32,
                                      -bound, bound)

        self.w1 = init(k1, in_c, embed_dim)        # proj_1: stride 1
        self.w2 = init(k2, embed_dim, embed_dim)   # proj_2: stride 2
        self.w3 = init(k3, embed_dim, embed_dim)   # proj_3: stride 2

    def __call__(self, x_nchw):
        x = jnp.transpose(x_nchw, (0, 2, 3, 1))          # NCHW -> NHWC
        x = conv3x3_nhwc(x, self.w1, stride=1)
        x = conv3x3_nhwc(x, self.w2, stride=2)
        x = conv3x3_nhwc(x, self.w3, stride=2)
        x = jnp.transpose(x, (0, 3, 1, 2))               # NHWC -> NCHW
        return x.astype(jnp.float32)


def _reference_forward(x_nchw, weights_hwio):
    """lax.conv reference with the same bf16-input / f32-accum precision policy."""
    x = jnp.transpose(x_nchw, (0, 2, 3, 1))
    for w, s in zip(weights_hwio, (1, 2, 2)):
        y = jax.lax.conv_general_dilated(
            x.astype(jnp.bfloat16), w.astype(jnp.bfloat16),
            window_strides=(s, s), padding=((1, 1), (1, 1)),
            dimension_numbers=("NHWC", "HWIO", "NHWC"),
            preferred_element_type=jnp.float32)
        x = y.astype(jnp.bfloat16)
    return jnp.transpose(x, (0, 3, 1, 2)).astype(jnp.float32)


if __name__ == "__main__":
    key = jax.random.PRNGKey(0)
    kx, kp = jax.random.split(key)

    in_c, embed_dim = 2, 48
    x = jax.random.normal(kx, (2, in_c, 16, 16), jnp.float32)    # NCHW input

    model = REFOverlapPatchEmbedPallas(in_c=in_c, embed_dim=embed_dim, key=kp)
    fwd = jax.jit(model.__call__)
    out = jax.block_until_ready(fwd(x))

    # shape check: H = 16 -> 16 -> 8 -> 4
    assert out.shape == (2, embed_dim, 4, 4), out.shape

    expected = _reference_forward(x, (model.w1, model.w2, model.w3))
    max_err = float(jnp.max(jnp.abs(out - expected)))
    assert jnp.allclose(out, expected, atol=2e-2, rtol=2e-2), max_err

    print("KERNEL_OK")
</pallas_src>

<mosaic_0001>
module attributes {stable_mosaic.version = 11 : i64} {
  func.func @_conv3x3_phase_im2col_kernel(%arg0: i32, %arg1: memref<1x1x18x18x2xbf16, #tpu.memory_space<vmem>>, %arg2: memref<18x48xbf16, #tpu.memory_space<vmem>>, %arg3: memref<1x256x48xbf16, #tpu.memory_space<vmem>>, %arg4: memref<256x18xbf16, #tpu.memory_space<vmem>>) attributes {dimension_semantics = [#tpu.dimension_semantics<parallel>], iteration_bounds = array<i64: 2>, scalar_prefetch = 0 : i64, scratch_operands = 1 : i64, tpu.core_type = #tpu.core_type<tc>, window_params = [{transform_indices = @transform_0, window_bounds = array<i64: 1, 1, 18, 18, 2>}, {pipeline_mode = #tpu.pipeline_mode<synchronous>, transform_indices = @transform_1, window_bounds = array<i64: 18, 48>}, {transform_indices = @transform_2, window_bounds = array<i64: 1, 256, 48>}]} {
    %c0 = arith.constant 0 : index
    %c0_0 = arith.constant 0 : index
    %c0_1 = arith.constant 0 : index
    %c0_2 = arith.constant 0 : index
    %c0_3 = arith.constant 0 : index
    %0 = vector.load %arg1[%c0, %c0_0, %c0_1, %c0_2, %c0_3] : memref<1x1x18x18x2xbf16, #tpu.memory_space<vmem>>, vector<1x1x16x16x2xbf16>
    %1 = vector.shape_cast %0 : vector<1x1x16x16x2xbf16> to vector<16x16x2xbf16>
    %2 = vector.shape_cast %1 : vector<16x16x2xbf16> to vector<256x2xbf16>
    %c0_4 = arith.constant 0 : index
    %c0_5 = arith.constant 0 : index
    %3 = vector.load %arg4[%c0_4, %c0_5] : memref<256x18xbf16, #tpu.memory_space<vmem>>, vector<256x2xbf16>
    tpu.vector_store %arg4[%c0_4, %c0_5], %2 {strides = array<i32>} : memref<256x18xbf16, #tpu.memory_space<vmem>>, vector<256x2xbf16>,
    %c0_6 = arith.constant 0 : index
    %c0_7 = arith.constant 0 : index
    %c0_8 = arith.constant 0 : index
    %c1 = arith.constant 1 : index
    %c0_9 = arith.constant 0 : index
    %4 = vector.load %arg1[%c0_6, %c0_7, %c0_8, %c1, %c0_9] : memref<1x1x18x18x2xbf16, #tpu.memory_space<vmem>>, vector<1x1x16x16x2xbf16>
    %5 = vector.shape_cast %4 : vector<1x1x16x16x2xbf16> to vector<16x16x2xbf16>
    %6 = vector.shape_cast %5 : vector<16x16x2xbf16> to vector<256x2xbf16>
    %c0_10 = arith.constant 0 : index
    %c2 = arith.constant 2 : index
    %7 = vector.load %arg4[%c0_10, %c2] : memref<256x18xbf16, #tpu.memory_space<vmem>>, vector<256x2xbf16>
    tpu.vector_store %arg4[%c0_10, %c2], %6 {strides = array<i32>} : memref<256x18xbf16, #tpu.memory_space<vmem>>, vector<256x2xbf16>,
    %c0_11 = arith.constant 0 : index
    %c0_12 = arith.constant 0 : index
    %c0_13 = arith.constant 0 : index
    %c2_14 = arith.constant 2 : index
    %c0_15 = arith.constant 0 : index
    %8 = vector.load %arg1[%c0_11, %c0_12, %c0_13, %c2_14, %c0_15] : memref<1x1x18x18x2xbf16, #tpu.memory_space<vmem>>, vector<1x1x16x16x2xbf16>
    %9 = vector.shape_cast %8 : vector<1x1x16x16x2xbf16> to vector<16x16x2xbf16>
    %10 = vector.shape_cast %9 : vector<16x16x2xbf16> to vector<256x2xbf16>
    %c0_16 = arith.constant 0 : index
    %c4 = arith.constant 4 : index
    %11 = vector.load %arg4[%c0_16, %c4] : memref<256x18xbf16, #tpu.memory_space<vmem>>, vector<256x2xbf16>
    tpu.vector_store %arg4[%c0_16, %c4], %10 {strides = array<i32>} : memref<256x18xbf16, #tpu.memory_space<vmem>>, vector<256x2xbf16>,
    %c0_17 = arith.constant 0 : index
    %c0_18 = arith.constant 0 : index
    %c1_19 = arith.constant 1 : index
    %c0_20 = arith.constant 0 : index
    %c0_21 = arith.constant 0 : index
    %12 = vector.load %arg1[%c0_17, %c0_18, %c1_19, %c0_20, %c0_21] : memref<1x1x18x18x2xbf16, #tpu.memory_space<vmem>>, vector<1x1x16x16x2xbf16>
    %13 = vector.shape_cast %12 : vector<1x1x16x16x2xbf16> to vector<16x16x2xbf16>
    %14 = vector.shape_cast %13 : vector<16x16x2xbf16> to vector<256x2xbf16>
    %c0_22 = arith.constant 0 : index
    %c6 = arith.constant 6 : index
    %15 = vector.load %arg4[%c0_22, %c6] : memref<256x18xbf16, #tpu.memory_space<vmem>>, vector<256x2xbf16>
    tpu.vector_store %arg4[%c0_22, %c6], %14 {strides = array<i32>} : memref<256x18xbf16, #tpu.memory_space<vmem>>, vector<256x2xbf16>,
    %c0_23 = arith.constant 0 : index
    %c0_24 = arith.constant 0 : index
    %c1_25 = arith.constant 1 : index
    %c1_26 = arith.constant 1 : index
    %c0_27 = arith.constant 0 : index
    %16 = vector.load %arg1[%c0_23, %c0_24, %c1_25, %c1_26, %c0_27] : memref<1x1x18x18x2xbf16, #tpu.memory_space<vmem>>, vector<1x1x16x16x2xbf16>
    %17 = vector.shape_cast %16 : vector<1x1x16x16x2xbf16> to vector<16x16x2xbf16>
    %18 = vector.shape_cast %17 : vector<16x16x2xbf16> to vector<256x2xbf16>
    %c0_28 = arith.constant 0 : index
    %c8 = arith.constant 8 : index
    %19 = vector.load %arg4[%c0_28, %c8] : memref<256x18xbf16, #tpu.memory_space<vmem>>, vector<256x2xbf16>
    tpu.vector_store %arg4[%c0_28, %c8], %18 {strides = array<i32>} : memref<256x18xbf16, #tpu.memory_space<vmem>>, vector<256x2xbf16>,
    %c0_29 = arith.constant 0 : index
    %c0_30 = arith.constant 0 : index
    %c1_31 = arith.constant 1 : index
    %c2_32 = arith.constant 2 : index
    %c0_33 = arith.constant 0 : index
    %20 = vector.load %arg1[%c0_29, %c0_30, %c1_31, %c2_32, %c0_33] : memref<1x1x18x18x2xbf16, #tpu.memory_space<vmem>>, vector<1x1x16x16x2xbf16>
    %21 = vector.shape_cast %20 : vector<1x1x16x16x2xbf16> to vector<16x16x2xbf16>
    %22 = vector.shape_cast %21 : vector<16x16x2xbf16> to vector<256x2xbf16>
    %c0_34 = arith.constant 0 : index
    %c10 = arith.constant 10 : index
    %23 = vector.load %arg4[%c0_34, %c10] : memref<256x18xbf16, #tpu.memory_space<vmem>>, vector<256x2xbf16>
    tpu.vector_store %arg4[%c0_34, %c10], %22 {strides = array<i32>} : memref<256x18xbf16, #tpu.memory_space<vmem>>, vector<256x2xbf16>,
    %c0_35 = arith.constant 0 : index
    %c0_36 = arith.constant 0 : index
    %c2_37 = arith.constant 2 : index
    %c0_38 = arith.constant 0 : index
    %c0_39 = arith.constant 0 : index
    %24 = vector.load %arg1[%c0_35, %c0_36, %c2_37, %c0_38, %c0_39] : memref<1x1x18x18x2xbf16, #tpu.memory_space<vmem>>, vector<1x1x16x16x2xbf16>
    %25 = vector.shape_cast %24 : vector<1x1x16x16x2xbf16> to vector<16x16x2xbf16>
    %26 = vector.shape_cast %25 : vector<16x16x2xbf16> to vector<256x2xbf16>
    %c0_40 = arith.constant 0 : index
    %c12 = arith.constant 12 : index
    %27 = vector.load %arg4[%c0_40, %c12] : memref<256x18xbf16, #tpu.memory_space<vmem>>, vector<256x2xbf16>
    tpu.vector_store %arg4[%c0_40, %c12], %26 {strides = array<i32>} : memref<256x18xbf16, #tpu.memory_space<vmem>>, vector<256x2xbf16>,
    %c0_41 = arith.constant 0 : index
    %c0_42 = arith.constant 0 : index
    %c2_43 = arith.constant 2 : index
    %c1_44 = arith.constant 1 : index
    %c0_45 = arith.constant 0 : index
    %28 = vector.load %arg1[%c0_41, %c0_42, %c2_43, %c1_44, %c0_45] : memref<1x1x18x18x2xbf16, #tpu.memory_space<vmem>>, vector<1x1x16x16x2xbf16>
    %29 = vector.shape_cast %28 : vector<1x1x16x16x2xbf16> to vector<16x16x2xbf16>
    %30 = vector.shape_cast %29 : vector<16x16x2xbf16> to vector<256x2xbf16>
    %c0_46 = arith.constant 0 : index
    %c14 = arith.constant 14 : index
    %31 = vector.load %arg4[%c0_46, %c14] : memref<256x18xbf16, #tpu.memory_space<vmem>>, vector<256x2xbf16>
    tpu.vector_store %arg4[%c0_46, %c14], %30 {strides = array<i32>} : memref<256x18xbf16, #tpu.memory_space<vmem>>, vector<256x2xbf16>,
    %c0_47 = arith.constant 0 : index
    %c0_48 = arith.constant 0 : index
    %c2_49 = arith.constant 2 : index
    %c2_50 = arith.constant 2 : index
    %c0_51 = arith.constant 0 : index
    %32 = vector.load %arg1[%c0_47, %c0_48, %c2_49, %c2_50, %c0_51] : memref<1x1x18x18x2xbf16, #tpu.memory_space<vmem>>, vector<1x1x16x16x2xbf16>
    %33 = vector.shape_cast %32 : vector<1x1x16x16x2xbf16> to vector<16x16x2xbf16>
    %34 = vector.shape_cast %33 : vector<16x16x2xbf16> to vector<256x2xbf16>
    %c0_52 = arith.constant 0 : index
    %c16 = arith.constant 16 : index
    %35 = vector.load %arg4[%c0_52, %c16] : memref<256x18xbf16, #tpu.memory_space<vmem>>, vector<256x2xbf16>
    tpu.vector_store %arg4[%c0_52, %c16], %34 {strides = array<i32>} : memref<256x18xbf16, #tpu.memory_space<vmem>>, vector<256x2xbf16>,
    %c0_53 = arith.constant 0 : index
    %c0_54 = arith.constant 0 : index
    %36 = vector.load %arg4[%c0_53, %c0_54] : memref<256x18xbf16, #tpu.memory_space<vmem>>, vector<256x18xbf16>
    %c0_55 = arith.constant 0 : index
    %c0_56 = arith.constant 0 : index
    %37 = vector.load %arg2[%c0_55, %c0_56] : memref<18x48xbf16, #tpu.memory_space<vmem>>, vector<18x48xbf16>
    %cst = arith.constant dense<0.000000e+00> : vector<256x48xf32>
    %38 = tpu.matmul %36, %37, %cst {dimension_numbers = #tpu.dot_dimension_numbers<[1], [0], [0], [1], [0, 0, 1, 1], [], []>} : vector<256x18xbf16>, vector<18x48xbf16>, vector<256x48xf32> -> vector<256x48xf32>
    %39 = arith.truncf %38 : vector<256x48xf32> to vector<256x48xbf16>
    %c0_57 = arith.constant 0 : index
    %c0_58 = arith.constant 0 : index
    %c0_59 = arith.constant 0 : index
    %40 = vector.load %arg3[%c0_57, %c0_58, %c0_59] : memref<1x256x48xbf16, #tpu.memory_space<vmem>>, vector<1x256x48xbf16>
    %41 = vector.shape_cast %40 : vector<1x256x48xbf16> to vector<256x48xbf16>
    %42 = vector.shape_cast %39 : vector<256x48xbf16> to vector<1x256x48xbf16>
    tpu.vector_store %arg3[%c0_57, %c0_58, %c0_59], %42 {strides = array<i32>} : memref<1x256x48xbf16, #tpu.memory_space<vmem>>, vector<1x256x48xbf16>,
    return
  }
  func.func @transform_0(%arg0: i32) -> (i32, i32, i32, i32, i32) {
    %c0_i32 = arith.constant 0 : i32
    %c0_i32_0 = arith.constant 0 : i32
    %c0_i32_1 = arith.constant 0 : i32
    %c0_i32_2 = arith.constant 0 : i32
    %c0_i32_3 = arith.constant 0 : i32
    return %arg0, %c0_i32, %c0_i32_0, %c0_i32_1, %c0_i32_2 : i32, i32, i32, i32, i32
  }
  func.func @transform_1(%arg0: i32) -> (i32, i32) {
    %c0_i32 = arith.constant 0 : i32
    %c0_i32_0 = arith.constant 0 : i32
    %c0_i32_1 = arith.constant 0 : i32
    return %c0_i32, %c0_i32_0 : i32, i32
  }
  func.func @transform_2(%arg0: i32) -> (i32, i32, i32) {
    %c0_i32 = arith.constant 0 : i32
    %c0_i32_0 = arith.constant 0 : i32
    %c0_i32_1 = arith.constant 0 : i32
    return %arg0, %c0_i32, %c0_i32_0 : i32, i32, i32
  }
}

module attributes {stable_mosaic.version = 11 : i64} {
  func.func @_conv3x3_phase_im2col_kernel(%arg0: i32, %arg1: memref<1x4x9x9x48xbf16, #tpu.memory_space<vmem>>, %arg2: memref<432x48xbf16, #tpu.memory_space<vmem>>, %arg3: memref<1x64x48xbf16, #tpu.memory_space<vmem>>, %arg4: memref<64x432xbf16, #tpu.memory_space<vmem>>) attributes {dimension_semantics = [#tpu.dimension_semantics<parallel>], iteration_bounds = array<i64: 2>, scalar_prefetch = 0 : i64, scratch_operands = 1 : i64, tpu.core_type = #tpu.core_type<tc>, window_params = [{transform_indices = @transform_0, window_bounds = array<i64: 1, 4, 9, 9, 48>}, {pipeline_mode = #tpu.pipeline_mode<synchronous>, transform_indices = @transform_1, window_bounds = array<i64: 432, 48>}, {transform_indices = @transform_2, window_bounds = array<i64: 1, 64, 48>}]} {
    %c0 = arith.constant 0 : index
    %c0_0 = arith.constant 0 : index
    %c0_1 = arith.constant 0 : index
    %c0_2 = arith.constant 0 : index
    %c0_3 = arith.constant 0 : index
    %0 = vector.load %arg1[%c0, %c0_0, %c0_1, %c0_2, %c0_3] : memref<1x4x9x9x48xbf16, #tpu.memory_space<vmem>>, vector<1x1x8x8x48xbf16>
    %1 = vector.shape_cast %0 : vector<1x1x8x8x48xbf16> to vector<8x8x48xbf16>
    %2 = vector.shape_cast %1 : vector<8x8x48xbf16> to vector<64x48xbf16>
    %c0_4 = arith.constant 0 : index
    %c0_5 = arith.constant 0 : index
    %3 = vector.load %arg4[%c0_4, %c0_5] : memref<64x432xbf16, #tpu.memory_space<vmem>>, vector<64x48xbf16>
    tpu.vector_store %arg4[%c0_4, %c0_5], %2 {strides = array<i32>} : memref<64x432xbf16, #tpu.memory_space<vmem>>, vector<64x48xbf16>,
    %c0_6 = arith.constant 0 : index
    %c1 = arith.constant 1 : index
    %c0_7 = arith.constant 0 : index
    %c0_8 = arith.constant 0 : index
    %c0_9 = arith.constant 0 : index
    %4 = vector.load %arg1[%c0_6, %c1, %c0_7, %c0_8, %c0_9] : memref<1x4x9x9x48xbf16, #tpu.memory_space<vmem>>, vector<1x1x8x8x48xbf16>
    %5 = vector.shape_cast %4 : vector<1x1x8x8x48xbf16> to vector<8x8x48xbf16>
    %6 = vector.shape_cast %5 : vector<8x8x48xbf16> to vector<64x48xbf16>
    %c0_10 = arith.constant 0 : index
    %c48 = arith.constant 48 : index
    %7 = vector.load %arg4[%c0_10, %c48] : memref<64x432xbf16, #tpu.memory_space<vmem>>, vector<64x48xbf16>
    tpu.vector_store %arg4[%c0_10, %c48], %6 {strides = array<i32>} : memref<64x432xbf16, #tpu.memory_space<vmem>>, vector<64x48xbf16>,
    %c0_11 = arith.constant 0 : index
    %c0_12 = arith.constant 0 : index
    %c0_13 = arith.constant 0 : index
    %c1_14 = arith.constant 1 : index
    %c0_15 = arith.constant 0 : index
    %8 = vector.load %arg1[%c0_11, %c0_12, %c0_13, %c1_14, %c0_15] : memref<1x4x9x9x48xbf16, #tpu.memory_space<vmem>>, vector<1x1x8x8x48xbf16>
    %9 = vector.shape_cast %8 : vector<1x1x8x8x48xbf16> to vector<8x8x48xbf16>
    %10 = vector.shape_cast %9 : vector<8x8x48xbf16> to vector<64x48xbf16>
    %c0_16 = arith.constant 0 : index
    %c96 = arith.constant 96 : index
    %11 = vector.load %arg4[%c0_16, %c96] : memref<64x432xbf16, #tpu.memory_space<vmem>>, vector<64x48xbf16>
    tpu.vector_store %arg4[%c0_16, %c96], %10 {strides = array<i32>} : memref<64x432xbf16, #tpu.memory_space<vmem>>, vector<64x48xbf16>,
    %c0_17 = arith.constant 0 : index
    %c2 = arith.constant 2 : index
    %c0_18 = arith.constant 0 : index
    %c0_19 = arith.constant 0 : index
    %c0_20 = arith.constant 0 : index
    %12 = vector.load %arg1[%c0_17, %c2, %c0_18, %c0_19, %c0_20] : memref<1x4x9x9x48xbf16, #tpu.memory_space<vmem>>, vector<1x1x8x8x48xbf16>
    %13 = vector.shape_cast %12 : vector<1x1x8x8x48xbf16> to vector<8x8x48xbf16>
    %14 = vector.shape_cast %13 : vector<8x8x48xbf16> to vector<64x48xbf16>
    %c0_21 = arith.constant 0 : index
    %c144 = arith.constant 144 : index
    %15 = vector.load %arg4[%c0_21, %c144] : memref<64x432xbf16, #tpu.memory_space<vmem>>, vector<64x48xbf16>
    tpu.vector_store %arg4[%c0_21, %c144], %14 {strides = array<i32>} : memref<64x432xbf16, #tpu.memory_space<vmem>>, vector<64x48xbf16>,
    %c0_22 = arith.constant 0 : index
    %c3 = arith.constant 3 : index
    %c0_23 = arith.constant 0 : index
    %c0_24 = arith.constant 0 : index
    %c0_25 = arith.constant 0 : index
    %16 = vector.load %arg1[%c0_22, %c3, %c0_23, %c0_24, %c0_25] : memref<1x4x9x9x48xbf16, #tpu.memory_space<vmem>>, vector<1x1x8x8x48xbf16>
    %17 = vector.shape_cast %16 : vector<1x1x8x8x48xbf16> to vector<8x8x48xbf16>
    %18 = vector.shape_cast %17 : vector<8x8x48xbf16> to vector<64x48xbf16>
    %c0_26 = arith.constant 0 : index
    %c192 = arith.constant 192 : index
    %19 = vector.load %arg4[%c0_26, %c192] : memref<64x432xbf16, #tpu.memory_space<vmem>>, vector<64x48xbf16>
    tpu.vector_store %arg4[%c0_26, %c192], %18 {strides = array<i32>} : memref<64x432xbf16, #tpu.memory_space<vmem>>, vector<64x48xbf16>,
    %c0_27 = arith.constant 0 : index
    %c2_28 = arith.constant 2 : index
    %c0_29 = arith.constant 0 : index
    %c1_30 = arith.constant 1 : index
    %c0_31 = arith.constant 0 : index
    %20 = vector.load %arg1[%c0_27, %c2_28, %c0_29, %c1_30, %c0_31] : memref<1x4x9x9x48xbf16, #tpu.memory_space<vmem>>, vector<1x1x8x8x48xbf16>
    %21 = vector.shape_cast %20 : vector<1x1x8x8x48xbf16> to vector<8x8x48xbf16>
    %22 = vector.shape_cast %21 : vector<8x8x48xbf16> to vector<64x48xbf16>
    %c0_32 = arith.constant 0 : index
    %c240 = arith.constant 240 : index
    %23 = vector.load %arg4[%c0_32, %c240] : memref<64x432xbf16, #tpu.memory_space<vmem>>, vector<64x48xbf16>
    tpu.vector_store %arg4[%c0_32, %c240], %22 {strides = array<i32>} : memref<64x432xbf16, #tpu.memory_space<vmem>>, vector<64x48xbf16>,
    %c0_33 = arith.constant 0 : index
    %c0_34 = arith.constant 0 : index
    %c1_35 = arith.constant 1 : index
    %c0_36 = arith.constant 0 : index
    %c0_37 = arith.constant 0 : index
    %24 = vector.load %arg1[%c0_33, %c0_34, %c1_35, %c0_36, %c0_37] : memref<1x4x9x9x48xbf16, #tpu.memory_space<vmem>>, vector<1x1x8x8x48xbf16>
    %25 = vector.shape_cast %24 : vector<1x1x8x8x48xbf16> to vector<8x8x48xbf16>
    %26 = vector.shape_cast %25 : vector<8x8x48xbf16> to vector<64x48xbf16>
    %c0_38 = arith.constant 0 : index
    %c288 = arith.constant 288 : index
    %27 = vector.load %arg4[%c0_38, %c288] : memref<64x432xbf16, #tpu.memory_space<vmem>>, vector<64x48xbf16>
    tpu.vector_store %arg4[%c0_38, %c288], %26 {strides = array<i32>} : memref<64x432xbf16, #tpu.memory_space<vmem>>, vector<64x48xbf16>,
    %c0_39 = arith.constant 0 : index
    %c1_40 = arith.constant 1 : index
    %c1_41 = arith.constant 1 : index
    %c0_42 = arith.constant 0 : index
    %c0_43 = arith.constant 0 : index
    %28 = vector.load %arg1[%c0_39, %c1_40, %c1_41, %c0_42, %c0_43] : memref<1x4x9x9x48xbf16, #tpu.memory_space<vmem>>, vector<1x1x8x8x48xbf16>
    %29 = vector.shape_cast %28 : vector<1x1x8x8x48xbf16> to vector<8x8x48xbf16>
    %30 = vector.shape_cast %29 : vector<8x8x48xbf16> to vector<64x48xbf16>
    %c0_44 = arith.constant 0 : index
    %c336 = arith.constant 336 : index
    %31 = vector.load %arg4[%c0_44, %c336] : memref<64x432xbf16, #tpu.memory_space<vmem>>, vector<64x48xbf16>
    tpu.vector_store %arg4[%c0_44, %c336], %30 {strides = array<i32>} : memref<64x432xbf16, #tpu.memory_space<vmem>>, vector<64x48xbf16>,
    %c0_45 = arith.constant 0 : index
    %c0_46 = arith.constant 0 : index
    %c1_47 = arith.constant 1 : index
    %c1_48 = arith.constant 1 : index
    %c0_49 = arith.constant 0 : index
    %32 = vector.load %arg1[%c0_45, %c0_46, %c1_47, %c1_48, %c0_49] : memref<1x4x9x9x48xbf16, #tpu.memory_space<vmem>>, vector<1x1x8x8x48xbf16>
    %33 = vector.shape_cast %32 : vector<1x1x8x8x48xbf16> to vector<8x8x48xbf16>
    %34 = vector.shape_cast %33 : vector<8x8x48xbf16> to vector<64x48xbf16>
    %c0_50 = arith.constant 0 : index
    %c384 = arith.constant 384 : index
    %35 = vector.load %arg4[%c0_50, %c384] : memref<64x432xbf16, #tpu.memory_space<vmem>>, vector<64x48xbf16>
    tpu.vector_store %arg4[%c0_50, %c384], %34 {strides = array<i32>} : memref<64x432xbf16, #tpu.memory_space<vmem>>, vector<64x48xbf16>,
    %c0_51 = arith.constant 0 : index
    %c0_52 = arith.constant 0 : index
    %36 = vector.load %arg4[%c0_51, %c0_52] : memref<64x432xbf16, #tpu.memory_space<vmem>>, vector<64x432xbf16>
    %c0_53 = arith.constant 0 : index
    %c0_54 = arith.constant 0 : index
    %37 = vector.load %arg2[%c0_53, %c0_54] : memref<432x48xbf16, #tpu.memory_space<vmem>>, vector<432x48xbf16>
    %cst = arith.constant dense<0.000000e+00> : vector<64x48xf32>
    %38 = tpu.matmul %36, %37, %cst {dimension_numbers = #tpu.dot_dimension_numbers<[1], [0], [0], [1], [0, 0, 1, 1], [], []>} : vector<64x432xbf16>, vector<432x48xbf16>, vector<64x48xf32> -> vector<64x48xf32>
    %39 = arith.truncf %38 : vector<64x48xf32> to vector<64x48xbf16>
    %c0_55 = arith.constant 0 : index
    %c0_56 = arith.constant 0 : index
    %c0_57 = arith.constant 0 : index
    %40 = vector.load %arg3[%c0_55, %c0_56, %c0_57] : memref<1x64x48xbf16, #tpu.memory_space<vmem>>, vector<1x64x48xbf16>
    %41 = vector.shape_cast %40 : vector<1x64x48xbf16> to vector<64x48xbf16>
    %42 = vector.shape_cast %39 : vector<64x48xbf16> to vector<1x64x48xbf16>
    tpu.vector_store %arg3[%c0_55, %c0_56, %c0_57], %42 {strides = array<i32>} : memref<1x64x48xbf16, #tpu.memory_space<vmem>>, vector<1x64x48xbf16>,
    return
  }
  func.func @transform_0(%arg0: i32) -> (i32, i32, i32, i32, i32) {
    %c0_i32 = arith.constant 0 : i32
    %c0_i32_0 = arith.constant 0 : i32
    %c0_i32_1 = arith.constant 0 : i32
    %c0_i32_2 = arith.constant 0 : i32
    %c0_i32_3 = arith.constant 0 : i32
    return %arg0, %c0_i32, %c0_i32_0, %c0_i32_1, %c0_i32_2 : i32, i32, i32, i32, i32
  }
  func.func @transform_1(%arg0: i32) -> (i32, i32) {
    %c0_i32 = arith.constant 0 : i32
    %c0_i32_0 = arith.constant 0 : i32
    %c0_i32_1 = arith.constant 0 : i32
    return %c0_i32, %c0_i32_0 : i32, i32
  }
  func.func @transform_2(%arg0: i32) -> (i32, i32, i32) {
    %c0_i32 = arith.constant 0 : i32
    %c0_i32_0 = arith.constant 0 : i32
    %c0_i32_1 = arith.constant 0 : i32
    return %arg0, %c0_i32, %c0_i32_0 : i32, i32, i32
  }
}

module attributes {stable_mosaic.version = 11 : i64} {
  func.func @_conv3x3_phase_im2col_kernel(%arg0: i32, %arg1: memref<1x4x5x5x48xbf16, #tpu.memory_space<vmem>>, %arg2: memref<432x48xbf16, #tpu.memory_space<vmem>>, %arg3: memref<1x16x48xbf16, #tpu.memory_space<vmem>>, %arg4: memref<16x432xbf16, #tpu.memory_space<vmem>>) attributes {dimension_semantics = [#tpu.dimension_semantics<parallel>], iteration_bounds = array<i64: 2>, scalar_prefetch = 0 : i64, scratch_operands = 1 : i64, tpu.core_type = #tpu.core_type<tc>, window_params = [{transform_indices = @transform_0, window_bounds = array<i64: 1, 4, 5, 5, 48>}, {pipeline_mode = #tpu.pipeline_mode<synchronous>, transform_indices = @transform_1, window_bounds = array<i64: 432, 48>}, {transform_indices = @transform_2, window_bounds = array<i64: 1, 16, 48>}]} {
    %c0 = arith.constant 0 : index
    %c0_0 = arith.constant 0 : index
    %c0_1 = arith.constant 0 : index
    %c0_2 = arith.constant 0 : index
    %c0_3 = arith.constant 0 : index
    %0 = vector.load %arg1[%c0, %c0_0, %c0_1, %c0_2, %c0_3] : memref<1x4x5x5x48xbf16, #tpu.memory_space<vmem>>, vector<1x1x4x4x48xbf16>
    %1 = vector.shape_cast %0 : vector<1x1x4x4x48xbf16> to vector<4x4x48xbf16>
    %2 = vector.extract_strided_slice %1 {offsets = [0, 0, 0], sizes = [1, 4, 48], strides = [1, 1, 1]} : vector<4x4x48xbf16> to vector<1x4x48xbf16>
    %3 = vector.shape_cast %2 : vector<1x4x48xbf16> to vector<4x48xbf16>
    %c0_4 = arith.constant 0 : index
    %c0_5 = arith.constant 0 : index
    %4 = vector.load %arg4[%c0_4, %c0_5] : memref<16x432xbf16, #tpu.memory_space<vmem>>, vector<4x48xbf16>
    tpu.vector_store %arg4[%c0_4, %c0_5], %3 {strides = array<i32>} : memref<16x432xbf16, #tpu.memory_space<vmem>>, vector<4x48xbf16>,
    %5 = vector.extract_strided_slice %1 {offsets = [1, 0, 0], sizes = [1, 4, 48], strides = [1, 1, 1]} : vector<4x4x48xbf16> to vector<1x4x48xbf16>
    %6 = vector.shape_cast %5 : vector<1x4x48xbf16> to vector<4x48xbf16>
    %c4 = arith.constant 4 : index
    %c0_6 = arith.constant 0 : index
    %7 = vector.load %arg4[%c4, %c0_6] : memref<16x432xbf16, #tpu.memory_space<vmem>>, vector<4x48xbf16>
    tpu.vector_store %arg4[%c4, %c0_6], %6 {strides = array<i32>} : memref<16x432xbf16, #tpu.memory_space<vmem>>, vector<4x48xbf16>,
    %8 = vector.extract_strided_slice %1 {offsets = [2, 0, 0], sizes = [1, 4, 48], strides = [1, 1, 1]} : vector<4x4x48xbf16> to vector<1x4x48xbf16>
    %9 = vector.shape_cast %8 : vector<1x4x48xbf16> to vector<4x48xbf16>
    %c8 = arith.constant 8 : index
    %c0_7 = arith.constant 0 : index
    %10 = vector.load %arg4[%c8, %c0_7] : memref<16x432xbf16, #tpu.memory_space<vmem>>, vector<4x48xbf16>
    tpu.vector_store %arg4[%c8, %c0_7], %9 {strides = array<i32>} : memref<16x432xbf16, #tpu.memory_space<vmem>>, vector<4x48xbf16>,
    %11 = vector.extract_strided_slice %1 {offsets = [3, 0, 0], sizes = [1, 4, 48], strides = [1, 1, 1]} : vector<4x4x48xbf16> to vector<1x4x48xbf16>
    %12 = vector.shape_cast %11 : vector<1x4x48xbf16> to vector<4x48xbf16>
    %c12 = arith.constant 12 : index
    %c0_8 = arith.constant 0 : index
    %13 = vector.load %arg4[%c12, %c0_8] : memref<16x432xbf16, #tpu.memory_space<vmem>>, vector<4x48xbf16>
    tpu.vector_store %arg4[%c12, %c0_8], %12 {strides = array<i32>} : memref<16x432xbf16, #tpu.memory_space<vmem>>, vector<4x48xbf16>,
    %c0_9 = arith.constant 0 : index
    %c1 = arith.constant 1 : index
    %c0_10 = arith.constant 0 : index
    %c0_11 = arith.constant 0 : index
    %c0_12 = arith.constant 0 : index
    %14 = vector.load %arg1[%c0_9, %c1, %c0_10, %c0_11, %c0_12] : memref<1x4x5x5x48xbf16, #tpu.memory_space<vmem>>, vector<1x1x4x4x48xbf16>
    %15 = vector.shape_cast %14 : vector<1x1x4x4x48xbf16> to vector<4x4x48xbf16>
    %16 = vector.extract_strided_slice %15 {offsets = [0, 0, 0], sizes = [1, 4, 48], strides = [1, 1, 1]} : vector<4x4x48xbf16> to vector<1x4x48xbf16>
    %17 = vector.shape_cast %16 : vector<1x4x48xbf16> to vector<4x48xbf16>
    %c0_13 = arith.constant 0 : index
    %c48 = arith.constant 48 : index
    %18 = vector.load %arg4[%c0_13, %c48] : memref<16x432xbf16, #tpu.memory_space<vmem>>, vector<4x48xbf16>
    tpu.vector_store %arg4[%c0_13, %c48], %17 {strides = array<i32>} : memref<16x432xbf16, #tpu.memory_space<vmem>>, vector<4x48xbf16>,
    %19 = vector.extract_strided_slice %15 {offsets = [1, 0, 0], sizes = [1, 4, 48], strides = [1, 1, 1]} : vector<4x4x48xbf16> to vector<1x4x48xbf16>
    %20 = vector.shape_cast %19 : vector<1x4x48xbf16> to vector<4x48xbf16>
    %c4_14 = arith.constant 4 : index
    %c48_15 = arith.constant 48 : index
    %21 = vector.load %arg4[%c4_14, %c48_15] : memref<16x432xbf16, #tpu.memory_space<vmem>>, vector<4x48xbf16>
    tpu.vector_store %arg4[%c4_14, %c48_15], %20 {strides = array<i32>} : memref<16x432xbf16, #tpu.memory_space<vmem>>, vector<4x48xbf16>,
    %22 = vector.extract_strided_slice %15 {offsets = [2, 0, 0], sizes = [1, 4, 48], strides = [1, 1, 1]} : vector<4x4x48xbf16> to vector<1x4x48xbf16>
    %23 = vector.shape_cast %22 : vector<1x4x48xbf16> to vector<4x48xbf16>
    %c8_16 = arith.constant 8 : index
    %c48_17 = arith.constant 48 : index
    %24 = vector.load %arg4[%c8_16, %c48_17] : memref<16x432xbf16, #tpu.memory_space<vmem>>, vector<4x48xbf16>
    tpu.vector_store %arg4[%c8_16, %c48_17], %23 {strides = array<i32>} : memref<16x432xbf16, #tpu.memory_space<vmem>>, vector<4x48xbf16>,
    %25 = vector.extract_strided_slice %15 {offsets = [3, 0, 0], sizes = [1, 4, 48], strides = [1, 1, 1]} : vector<4x4x48xbf16> to vector<1x4x48xbf16>
    %26 = vector.shape_cast %25 : vector<1x4x48xbf16> to vector<4x48xbf16>
    %c12_18 = arith.constant 12 : index
    %c48_19 = arith.constant 48 : index
    %27 = vector.load %arg4[%c12_18, %c48_19] : memref<16x432xbf16, #tpu.memory_space<vmem>>, vector<4x48xbf16>
    tpu.vector_store %arg4[%c12_18, %c48_19], %26 {strides = array<i32>} : memref<16x432xbf16, #tpu.memory_space<vmem>>, vector<4x48xbf16>,
    %c0_20 = arith.constant 0 : index
    %c0_21 = arith.constant 0 : index
    %c0_22 = arith.constant 0 : index
    %c1_23 = arith.constant 1 : index
    %c0_24 = arith.constant 0 : index
    %28 = vector.load %arg1[%c0_20, %c0_21, %c0_22, %c1_23, %c0_24] : memref<1x4x5x5x48xbf16, #tpu.memory_space<vmem>>, vector<1x1x4x4x48xbf16>
    %29 = vector.shape_cast %28 : vector<1x1x4x4x48xbf16> to vector<4x4x48xbf16>
    %30 = vector.extract_strided_slice %29 {offsets = [0, 0, 0], sizes = [1, 4, 48], strides = [1, 1, 1]} : vector<4x4x48xbf16> to vector<1x4x48xbf16>
    %31 = vector.shape_cast %30 : vector<1x4x48xbf16> to vector<4x48xbf16>
    %c0_25 = arith.constant 0 : index
    %c96 = arith.constant 96 : index
    %32 = vector.load %arg4[%c0_25, %c96] : memref<16x432xbf16, #tpu.memory_space<vmem>>, vector<4x48xbf16>
    tpu.vector_store %arg4[%c0_25, %c96], %31 {strides = array<i32>} : memref<16x432xbf16, #tpu.memory_space<vmem>>, vector<4x48xbf16>,
    %33 = vector.extract_strided_slice %29 {offsets = [1, 0, 0], sizes = [1, 4, 48], strides = [1, 1, 1]} : vector<4x4x48xbf16> to vector<1x4x48xbf16>
    %34 = vector.shape_cast %33 : vector<1x4x48xbf16> to vector<4x48xbf16>
    %c4_26 = arith.constant 4 : index
    %c96_27 = arith.constant 96 : index
    %35 = vector.load %arg4[%c4_26, %c96_27] : memref<16x432xbf16, #tpu.memory_space<vmem>>, vector<4x48xbf16>
    tpu.vector_store %arg4[%c4_26, %c96_27], %34 {strides = array<i32>} : memref<16x432xbf16, #tpu.memory_space<vmem>>, vector<4x48xbf16>,
    %36 = vector.extract_strided_slice %29 {offsets = [2, 0, 0], sizes = [1, 4, 48], strides = [1, 1, 1]} : vector<4x4x48xbf16> to vector<1x4x48xbf16>
    %37 = vector.shape_cast %36 : vector<1x4x48xbf16> to vector<4x48xbf16>
    %c8_28 = arith.constant 8 : index
    %c96_29 = arith.constant 96 : index
    %38 = vector.load %arg4[%c8_28, %c96_29] : memref<16x432xbf16, #tpu.memory_space<vmem>>, vector<4x48xbf16>
    tpu.vector_store %arg4[%c8_28, %c96_29], %37 {strides = array<i32>} : memref<16x432xbf16, #tpu.memory_space<vmem>>, vector<4x48xbf16>,
    %39 = vector.extract_strided_slice %29 {offsets = [3, 0, 0], sizes = [1, 4, 48], strides = [1, 1, 1]} : vector<4x4x48xbf16> to vector<1x4x48xbf16>
    %40 = vector.shape_cast %39 : vector<1x4x48xbf16> to vector<4x48xbf16>
    %c12_30 = arith.constant 12 : index
    %c96_31 = arith.constant 96 : index
    %41 = vector.load %arg4[%c12_30, %c96_31] : memref<16x432xbf16, #tpu.memory_space<vmem>>, vector<4x48xbf16>
    tpu.vector_store %arg4[%c12_30, %c96_31], %40 {strides = array<i32>} : memref<16x432xbf16, #tpu.memory_space<vmem>>, vector<4x48xbf16>,
    %c0_32 = arith.constant 0 : index
    %c2 = arith.constant 2 : index
    %c0_33 = arith.constant 0 : index
    %c0_34 = arith.constant 0 : index
    %c0_35 = arith.constant 0 : index
    %42 = vector.load %arg1[%c0_32, %c2, %c0_33, %c0_34, %c0_35] : memref<1x4x5x5x48xbf16, #tpu.memory_space<vmem>>, vector<1x1x4x4x48xbf16>
    %43 = vector.shape_cast %42 : vector<1x1x4x4x48xbf16> to vector<4x4x48xbf16>
    %44 = vector.extract_strided_slice %43 {offsets = [0, 0, 0], sizes = [1, 4, 48], strides = [1, 1, 1]} : vector<4x4x48xbf16> to vector<1x4x48xbf16>
    %45 = vector.shape_cast %44 : vector<1x4x48xbf16> to vector<4x48xbf16>
    %c0_36 = arith.constant 0 : index
    %c144 = arith.constant 144 : index
    %46 = vector.load %arg4[%c0_36, %c144] : memref<16x432xbf16, #tpu.memory_space<vmem>>, vector<4x48xbf16>
    tpu.vector_store %arg4[%c0_36, %c144], %45 {strides = array<i32>} : memref<16x432xbf16, #tpu.memory_space<vmem>>, vector<4x48xbf16>,
    %47 = vector.extract_strided_slice %43 {offsets = [1, 0, 0], sizes = [1, 4, 48], strides = [1, 1, 1]} : vector<4x4x48xbf16> to vector<1x4x48xbf16>
    %48 = vector.shape_cast %47 : vector<1x4x48xbf16> to vector<4x48xbf16>
    %c4_37 = arith.constant 4 : index
    %c144_38 = arith.constant 144 : index
    %49 = vector.load %arg4[%c4_37, %c144_38] : memref<16x432xbf16, #tpu.memory_space<vmem>>, vector<4x48xbf16>
    tpu.vector_store %arg4[%c4_37, %c144_38], %48 {strides = array<i32>} : memref<16x432xbf16, #tpu.memory_space<vmem>>, vector<4x48xbf16>,
    %50 = vector.extract_strided_slice %43 {offsets = [2, 0, 0], sizes = [1, 4, 48], strides = [1, 1, 1]} : vector<4x4x48xbf16> to vector<1x4x48xbf16>
    %51 = vector.shape_cast %50 : vector<1x4x48xbf16> to vector<4x48xbf16>
    %c8_39 = arith.constant 8 : index
    %c144_40 = arith.constant 144 : index
    %52 = vector.load %arg4[%c8_39, %c144_40] : memref<16x432xbf16, #tpu.memory_space<vmem>>, vector<4x48xbf16>
    tpu.vector_store %arg4[%c8_39, %c144_40], %51 {strides = array<i32>} : memref<16x432xbf16, #tpu.memory_space<vmem>>, vector<4x48xbf16>,
    %53 = vector.extract_strided_slice %43 {offsets = [3, 0, 0], sizes = [1, 4, 48], strides = [1, 1, 1]} : vector<4x4x48xbf16> to vector<1x4x48xbf16>
    %54 = vector.shape_cast %53 : vector<1x4x48xbf16> to vector<4x48xbf16>
    %c12_41 = arith.constant 12 : index
    %c144_42 = arith.constant 144 : index
    %55 = vector.load %arg4[%c12_41, %c144_42] : memref<16x432xbf16, #tpu.memory_space<vmem>>, vector<4x48xbf16>
    tpu.vector_store %arg4[%c12_41, %c144_42], %54 {strides = array<i32>} : memref<16x432xbf16, #tpu.memory_space<vmem>>, vector<4x48xbf16>,
    %c0_43 = arith.constant 0 : index
    %c3 = arith.constant 3 : index
    %c0_44 = arith.constant 0 : index
    %c0_45 = arith.constant 0 : index
    %c0_46 = arith.constant 0 : index
    %56 = vector.load %arg1[%c0_43, %c3, %c0_44, %c0_45, %c0_46] : memref<1x4x5x5x48xbf16, #tpu.memory_space<vmem>>, vector<1x1x4x4x48xbf16>
    %57 = vector.shape_cast %56 : vector<1x1x4x4x48xbf16> to vector<4x4x48xbf16>
    %58 = vector.extract_strided_slice %57 {offsets = [0, 0, 0], sizes = [1, 4, 48], strides = [1, 1, 1]} : vector<4x4x48xbf16> to vector<1x4x48xbf16>
    %59 = vector.shape_cast %58 : vector<1x4x48xbf16> to vector<4x48xbf16>
    %c0_47 = arith.constant 0 : index
    %c192 = arith.constant 192 : index
    %60 = vector.load %arg4[%c0_47, %c192] : memref<16x432xbf16, #tpu.memory_space<vmem>>, vector<4x48xbf16>
    tpu.vector_store %arg4[%c0_47, %c192], %59 {strides = array<i32>} : memref<16x432xbf16, #tpu.memory_space<vmem>>, vector<4x48xbf16>,
    %61 = vector.extract_strided_slice %57 {offsets = [1, 0, 0], sizes = [1, 4, 48], strides = [1, 1, 1]} : vector<4x4x48xbf16> to vector<1x4x48xbf16>
    %62 = vector.shape_cast %61 : vector<1x4x48xbf16> to vector<4x48xbf16>
    %c4_48 = arith.constant 4 : index
    %c192_49 = arith.constant 192 : index
    %63 = vector.load %arg4[%c4_48, %c192_49] : memref<16x432xbf16, #tpu.memory_space<vmem>>, vector<4x48xbf16>
    tpu.vector_store %arg4[%c4_48, %c192_49], %62 {strides = array<i32>} : memref<16x432xbf16, #tpu.memory_space<vmem>>, vector<4x48xbf16>,
    %64 = vector.extract_strided_slice %57 {offsets = [2, 0, 0], sizes = [1, 4, 48], strides = [1, 1, 1]} : vector<4x4x48xbf16> to vector<1x4x48xbf16>
    %65 = vector.shape_cast %64 : vector<1x4x48xbf16> to vector<4x48xbf16>
    %c8_50 = arith.constant 8 : index
    %c192_51 = arith.constant 192 : index
    %66 = vector.load %arg4[%c8_50, %c192_51] : memref<16x432xbf16, #tpu.memory_space<vmem>>, vector<4x48xbf16>
    tpu.vector_store %arg4[%c8_50, %c192_51], %65 {strides = array<i32>} : memref<16x432xbf16, #tpu.memory_space<vmem>>, vector<4x48xbf16>,
    %67 = vector.extract_strided_slice %57 {offsets = [3, 0, 0], sizes = [1, 4, 48], strides = [1, 1, 1]} : vector<4x4x48xbf16> to vector<1x4x48xbf16>
    %68 = vector.shape_cast %67 : vector<1x4x48xbf16> to vector<4x48xbf16>
    %c12_52 = arith.constant 12 : index
    %c192_53 = arith.constant 192 : index
    %69 = vector.load %arg4[%c12_52, %c192_53] : memref<16x432xbf16, #tpu.memory_space<vmem>>, vector<4x48xbf16>
    tpu.vector_store %arg4[%c12_52, %c192_53], %68 {strides = array<i32>} : memref<16x432xbf16, #tpu.memory_space<vmem>>, vector<4x48xbf16>,
    %c0_54 = arith.constant 0 : index
    %c2_55 = arith.constant 2 : index
    %c0_56 = arith.constant 0 : index
    %c1_57 = arith.constant 1 : index
    %c0_58 = arith.constant 0 : index
    %70 = vector.load %arg1[%c0_54, %c2_55, %c0_56, %c1_57, %c0_58] : memref<1x4x5x5x48xbf16, #tpu.memory_space<vmem>>, vector<1x1x4x4x48xbf16>
    %71 = vector.shape_cast %70 : vector<1x1x4x4x48xbf16> to vector<4x4x48xbf16>
    %72 = vector.extract_strided_slice %71 {offsets = [0, 0, 0], sizes = [1, 4, 48], strides = [1, 1, 1]} : vector<4x4x48xbf16> to vector<1x4x48xbf16>
    %73 = vector.shape_cast %72 : vector<1x4x48xbf16> to vector<4x48xbf16>
    %c0_59 = arith.constant 0 : index
    %c240 = arith.constant 240 : index
    %74 = vector.load %arg4[%c0_59, %c240] : memref<16x432xbf16, #tpu.memory_space<vmem>>, vector<4x48xbf16>
    tpu.vector_store %arg4[%c0_59, %c240], %73 {strides = array<i32>} : memref<16x432xbf16, #tpu.memory_space<vmem>>, vector<4x48xbf16>,
    %75 = vector.extract_strided_slice %71 {offsets = [1, 0, 0], sizes = [1, 4, 48], strides = [1, 1, 1]} : vector<4x4x48xbf16> to vector<1x4x48xbf16>
    %76 = vector.shape_cast %75 : vector<1x4x48xbf16> to vector<4x48xbf16>
    %c4_60 = arith.constant 4 : index
    %c240_61 = arith.constant 240 : index
    %77 = vector.load %arg4[%c4_60, %c240_61] : memref<16x432xbf16, #tpu.memory_space<vmem>>, vector<4x48xbf16>
    tpu.vector_store %arg4[%c4_60, %c240_61], %76 {strides = array<i32>} : memref<16x432xbf16, #tpu.memory_space<vmem>>, vector<4x48xbf16>,
    %78 = vector.extract_strided_slice %71 {offsets = [2, 0, 0], sizes = [1, 4, 48], strides = [1, 1, 1]} : vector<4x4x48xbf16> to vector<1x4x48xbf16>
    %79 = vector.shape_cast %78 : vector<1x4x48xbf16> to vector<4x48xbf16>
    %c8_62 = arith.constant 8 : index
    %c240_63 = arith.constant 240 : index
    %80 = vector.load %arg4[%c8_62, %c240_63] : memref<16x432xbf16, #tpu.memory_space<vmem>>, vector<4x48xbf16>
    tpu.vector_store %arg4[%c8_62, %c240_63], %79 {strides = array<i32>} : memref<16x432xbf16, #tpu.memory_space<vmem>>, vector<4x48xbf16>,
    %81 = vector.extract_strided_slice %71 {offsets = [3, 0, 0], sizes = [1, 4, 48], strides = [1, 1, 1]} : vector<4x4x48xbf16> to vector<1x4x48xbf16>
    %82 = vector.shape_cast %81 : vector<1x4x48xbf16> to vector<4x48xbf16>
    %c12_64 = arith.constant 12 : index
    %c240_65 = arith.constant 240 : index
    %83 = vector.load %arg4[%c12_64, %c240_65] : memref<16x432xbf16, #tpu.memory_space<vmem>>, vector<4x48xbf16>
    tpu.vector_store %arg4[%c12_64, %c240_65], %82 {strides = array<i32>} : memref<16x432xbf16, #tpu.memory_space<vmem>>, vector<4x48xbf16>,
    %c0_66 = arith.constant 0 : index
    %c0_67 = arith.constant 0 : index
    %c1_68 = arith.constant 1 : index
    %c0_69 = arith.constant 0 : index
    %c0_70 = arith.constant 0 : index
    %84 = vector.load %arg1[%c0_66, %c0_67, %c1_68, %c0_69, %c0_70] : memref<1x4x5x5x48xbf16, #tpu.memory_space<vmem>>, vector<1x1x4x4x48xbf16>
    %85 = vector.shape_cast %84 : vector<1x1x4x4x48xbf16> to vector<4x4x48xbf16>
    %86 = vector.extract_strided_slice %85 {offsets = [0, 0, 0], sizes = [1, 4, 48], strides = [1, 1, 1]} : vector<4x4x48xbf16> to vector<1x4x48xbf16>
    %87 = vector.shape_cast %86 : vector<1x4x48xbf16> to vector<4x48xbf16>
    %c0_71 = arith.constant 0 : index
    %c288 = arith.constant 288 : index
    %88 = vector.load %arg4[%c0_71, %c288] : memref<16x432xbf16, #tpu.memory_space<vmem>>, vector<4x48xbf16>
    tpu.vector_store %arg4[%c0_71, %c288], %87 {strides = array<i32>} : memref<16x432xbf16, #tpu.memory_space<vmem>>, vector<4x48xbf16>,
    %89 = vector.extract_strided_slice %85 {offsets = [1, 0, 0], sizes = [1, 4, 48], strides = [1, 1, 1]} : vector<4x4x48xbf16> to vector<1x4x48xbf16>
    %90 = vector.shape_cast %89 : vector<1x4x48xbf16> to vector<4x48xbf16>
    %c4_72 = arith.constant 4 : index
    %c288_73 = arith.constant 288 : index
    %91 = vector.load %arg4[%c4_72, %c288_73] : memref<16x432xbf16, #tpu.memory_space<vmem>>, vector<4x48xbf16>
    tpu.vector_store %arg4[%c4_72, %c288_73], %90 {strides = array<i32>} : memref<16x432xbf16, #tpu.memory_space<vmem>>, vector<4x48xbf16>,
    %92 = vector.extract_strided_slice %85 {offsets = [2, 0, 0], sizes = [1, 4, 48], strides = [1, 1, 1]} : vector<4x4x48xbf16> to vector<1x4x48xbf16>
    %93 = vector.shape_cast %92 : vector<1x4x48xbf16> to vector<4x48xbf16>
    %c8_74 = arith.constant 8 : index
    %c288_75 = arith.constant 288 : index
    %94 = vector.load %arg4[%c8_74, %c288_75] : memref<16x432xbf16, #tpu.memory_space<vmem>>, vector<4x48xbf16>
    tpu.vector_store %arg4[%c8_74, %c288_75], %93 {strides = array<i32>} : memref<16x432xbf16, #tpu.memory_space<vmem>>, vector<4x48xbf16>,
    %95 = vector.extract_strided_slice %85 {offsets = [3, 0, 0], sizes = [1, 4, 48], strides = [1, 1, 1]} : vector<4x4x48xbf16> to vector<1x4x48xbf16>
    %96 = vector.shape_cast %95 : vector<1x4x48xbf16> to vector<4x48xbf16>
    %c12_76 = arith.constant 12 : index
    %c288_77 = arith.constant 288 : index
    %97 = vector.load %arg4[%c12_76, %c288_77] : memref<16x432xbf16, #tpu.memory_space<vmem>>, vector<4x48xbf16>
    tpu.vector_store %arg4[%c12_76, %c288_77], %96 {strides = array<i32>} : memref<16x432xbf16, #tpu.memory_space<vmem>>, vector<4x48xbf16>,
    %c0_78 = arith.constant 0 : index
    %c1_79 = arith.constant 1 : index
    %c1_80 = arith.constant 1 : index
    %c0_81 = arith.constant 0 : index
    %c0_82 = arith.constant 0 : index
    %98 = vector.load %arg1[%c0_78, %c1_79, %c1_80, %c0_81, %c0_82] : memref<1x4x5x5x48xbf16, #tpu.memory_space<vmem>>, vector<1x1x4x4x48xbf16>
    %99 = vector.shape_cast %98 : vector<1x1x4x4x48xbf16> to vector<4x4x48xbf16>
    %100 = vector.extract_strided_slice %99 {offsets = [0, 0, 0], sizes = [1, 4, 48], strides = [1, 1, 1]} : vector<4x4x48xbf16> to vector<1x4x48xbf16>
    %101 = vector.shape_cast %100 : vector<1x4x48xbf16> to vector<4x48xbf16>
    %c0_83 = arith.constant 0 : index
    %c336 = arith.constant 336 : index
    %102 = vector.load %arg4[%c0_83, %c336] : memref<16x432xbf16, #tpu.memory_space<vmem>>, vector<4x48xbf16>
    tpu.vector_store %arg4[%c0_83, %c336], %101 {strides = array<i32>} : memref<16x432xbf16, #tpu.memory_space<vmem>>, vector<4x48xbf16>,
    %103 = vector.extract_strided_slice %99 {offsets = [1, 0, 0], sizes = [1, 4, 48], strides = [1, 1, 1]} : vector<4x4x48xbf16> to vector<1x4x48xbf16>
    %104 = vector.shape_cast %103 : vector<1x4x48xbf16> to vector<4x48xbf16>
    %c4_84 = arith.constant 4 : index
    %c336_85 = arith.constant 336 : index
    %105 = vector.load %arg4[%c4_84, %c336_85] : memref<16x432xbf16, #tpu.memory_space<vmem>>, vector<4x48xbf16>
    tpu.vector_store %arg4[%c4_84, %c336_85], %104 {strides = array<i32>} : memref<16x432xbf16, #tpu.memory_space<vmem>>, vector<4x48xbf16>,
    %106 = vector.extract_strided_slice %99 {offsets = [2, 0, 0], sizes = [1, 4, 48], strides = [1, 1, 1]} : vector<4x4x48xbf16> to vector<1x4x48xbf16>
    %107 = vector.shape_cast %106 : vector<1x4x48xbf16> to vector<4x48xbf16>
    %c8_86 = arith.constant 8 : index
    %c336_87 = arith.constant 336 : index
    %108 = vector.load %arg4[%c8_86, %c336_87] : memref<16x432xbf16, #tpu.memory_space<vmem>>, vector<4x48xbf16>
    tpu.vector_store %arg4[%c8_86, %c336_87], %107 {strides = array<i32>} : memref<16x432xbf16, #tpu.memory_space<vmem>>, vector<4x48xbf16>,
    %109 = vector.extract_strided_slice %99 {offsets = [3, 0, 0], sizes = [1, 4, 48], strides = [1, 1, 1]} : vector<4x4x48xbf16> to vector<1x4x48xbf16>
    %110 = vector.shape_cast %109 : vector<1x4x48xbf16> to vector<4x48xbf16>
    %c12_88 = arith.constant 12 : index
    %c336_89 = arith.constant 336 : index
    %111 = vector.load %arg4[%c12_88, %c336_89] : memref<16x432xbf16, #tpu.memory_space<vmem>>, vector<4x48xbf16>
    tpu.vector_store %arg4[%c12_88, %c336_89], %110 {strides = array<i32>} : memref<16x432xbf16, #tpu.memory_space<vmem>>, vector<4x48xbf16>,
    %c0_90 = arith.constant 0 : index
    %c0_91 = arith.constant 0 : index
    %c1_92 = arith.constant 1 : index
    %c1_93 = arith.constant 1 : index
    %c0_94 = arith.constant 0 : index
    %112 = vector.load %arg1[%c0_90, %c0_91, %c1_92, %c1_93, %c0_94] : memref<1x4x5x5x48xbf16, #tpu.memory_space<vmem>>, vector<1x1x4x4x48xbf16>
    %113 = vector.shape_cast %112 : vector<1x1x4x4x48xbf16> to vector<4x4x48xbf16>
    %114 = vector.extract_strided_slice %113 {offsets = [0, 0, 0], sizes = [1, 4, 48], strides = [1, 1, 1]} : vector<4x4x48xbf16> to vector<1x4x48xbf16>
    %115 = vector.shape_cast %114 : vector<1x4x48xbf16> to vector<4x48xbf16>
    %c0_95 = arith.constant 0 : index
    %c384 = arith.constant 384 : index
    %116 = vector.load %arg4[%c0_95, %c384] : memref<16x432xbf16, #tpu.memory_space<vmem>>, vector<4x48xbf16>
    tpu.vector_store %arg4[%c0_95, %c384], %115 {strides = array<i32>} : memref<16x432xbf16, #tpu.memory_space<vmem>>, vector<4x48xbf16>,
    %117 = vector.extract_strided_slice %113 {offsets = [1, 0, 0], sizes = [1, 4, 48], strides = [1, 1, 1]} : vector<4x4x48xbf16> to vector<1x4x48xbf16>
    %118 = vector.shape_cast %117 : vector<1x4x48xbf16> to vector<4x48xbf16>
    %c4_96 = arith.constant 4 : index
    %c384_97 = arith.constant 384 : index
    %119 = vector.load %arg4[%c4_96, %c384_97] : memref<16x432xbf16, #tpu.memory_space<vmem>>, vector<4x48xbf16>
    tpu.vector_store %arg4[%c4_96, %c384_97], %118 {strides = array<i32>} : memref<16x432xbf16, #tpu.memory_space<vmem>>, vector<4x48xbf16>,
    %120 = vector.extract_strided_slice %113 {offsets = [2, 0, 0], sizes = [1, 4, 48], strides = [1, 1, 1]} : vector<4x4x48xbf16> to vector<1x4x48xbf16>
    %121 = vector.shape_cast %120 : vector<1x4x48xbf16> to vector<4x48xbf16>
    %c8_98 = arith.constant 8 : index
    %c384_99 = arith.constant 384 : index
    %122 = vector.load %arg4[%c8_98, %c384_99] : memref<16x432xbf16, #tpu.memory_space<vmem>>, vector<4x48xbf16>
    tpu.vector_store %arg4[%c8_98, %c384_99], %121 {strides = array<i32>} : memref<16x432xbf16, #tpu.memory_space<vmem>>, vector<4x48xbf16>,
    %123 = vector.extract_strided_slice %113 {offsets = [3, 0, 0], sizes = [1, 4, 48], strides = [1, 1, 1]} : vector<4x4x48xbf16> to vector<1x4x48xbf16>
    %124 = vector.shape_cast %123 : vector<1x4x48xbf16> to vector<4x48xbf16>
    %c12_100 = arith.constant 12 : index
    %c384_101 = arith.constant 384 : index
    %125 = vector.load %arg4[%c12_100, %c384_101] : memref<16x432xbf16, #tpu.memory_space<vmem>>, vector<4x48xbf16>
    tpu.vector_store %arg4[%c12_100, %c384_101], %124 {strides = array<i32>} : memref<16x432xbf16, #tpu.memory_space<vmem>>, vector<4x48xbf16>,
    %c0_102 = arith.constant 0 : index
    %c0_103 = arith.constant 0 : index
    %126 = vector.load %arg4[%c0_102, %c0_103] : memref<16x432xbf16, #tpu.memory_space<vmem>>, vector<16x432xbf16>
    %c0_104 = arith.constant 0 : index
    %c0_105 = arith.constant 0 : index
    %127 = vector.load %arg2[%c0_104, %c0_105] : memref<432x48xbf16, #tpu.memory_space<vmem>>, vector<432x48xbf16>
    %cst = arith.constant dense<0.000000e+00> : vector<16x48xf32>
    %128 = tpu.matmul %126, %127, %cst {dimension_numbers = #tpu.dot_dimension_numbers<[1], [0], [0], [1], [0, 0, 1, 1], [], []>} : vector<16x432xbf16>, vector<432x48xbf16>, vector<16x48xf32> -> vector<16x48xf32>
    %129 = arith.truncf %128 : vector<16x48xf32> to vector<16x48xbf16>
    %c0_106 = arith.constant 0 : index
    %c0_107 = arith.constant 0 : index
    %c0_108 = arith.constant 0 : index
    %130 = vector.load %arg3[%c0_106, %c0_107, %c0_108] : memref<1x16x48xbf16, #tpu.memory_space<vmem>>, vector<1x16x48xbf16>
    %131 = vector.shape_cast %130 : vector<1x16x48xbf16> to vector<16x48xbf16>
    %132 = vector.shape_cast %129 : vector<16x48xbf16> to vector<1x16x48xbf16>
    tpu.vector_store %arg3[%c0_106, %c0_107, %c0_108], %132 {strides = array<i32>} : memref<1x16x48xbf16, #tpu.memory_space<vmem>>, vector<1x16x48xbf16>,
    return
  }
  func.func @transform_0(%arg0: i32) -> (i32, i32, i32, i32, i32) {
    %c0_i32 = arith.constant 0 : i32
    %c0_i32_0 = arith.constant 0 : i32
    %c0_i32_1 = arith.constant 0 : i32
    %c0_i32_2 = arith.constant 0 : i32
    %c0_i32_3 = arith.constant 0 : i32
    return %arg0, %c0_i32, %c0_i32_0, %c0_i32_1, %c0_i32_2 : i32, i32, i32, i32, i32
  }
  func.func @transform_1(%arg0: i32) -> (i32, i32) {
    %c0_i32 = arith.constant 0 : i32
    %c0_i32_0 = arith.constant 0 : i32
    %c0_i32_1 = arith.constant 0 : i32
    return %c0_i32, %c0_i32_0 : i32, i32
  }
  func.func @transform_2(%arg0: i32) -> (i32, i32, i32) {
    %c0_i32 = arith.constant 0 : i32
    %c0_i32_0 = arith.constant 0 : i32
    %c0_i32_1 = arith.constant 0 : i32
    return %arg0, %c0_i32, %c0_i32_0 : i32, i32, i32
  }
}

</mosaic_0001>

<llo_original>
// kernel: a_call__.4
$region0: #{a_call__.4}
  #allocation0 [shape = 'u32[]', space=smem, size = 0x4, offset = 0x4, fixed_abs, tag = 'smem constant byte address 0x4 - core index']
  #allocation1 [shape = 'u32[144,128]{1,0:T(1,128)}', space=vmem, size = 0x12000, scoped, tag = 'internal scratch']
  #allocation2 [shape = 'bf16[64,432]{1,0:T(16,128)(2,1)}', space=vmem, size = 0x10000, scoped, tag = 'scratch operand']
  %s0 = inlined_call_operand.vmem [shape: bf16[2,4,9,9,48], index: 0, kind: input, shape index: {}]
  %s1 = inlined_call_operand.vmem [shape: bf16[432,48], index: 1, kind: input, shape index: {}]
  %s2 = inlined_call_operand.vmem [shape: bf16[2,64,48], index: 2, kind: output, shape index: {}]
  %s3 = sld [smem:[#allocation0]]
  $region41: #{a_call__.4} parent=0
    _
  %s5 = ssub.s32 1, %s3
  %s6 = scalar_select 0, %s5, %s3
  loop: start=0, step=1, limit=4
  $region2: #{a_call__.4} parent=0 // loop_pre_header
    _
  $region3: #{a_call__.4} parent=0 // loop_header
    %s8 = sphi 0, %s12
    %p9 = scmp.ge.s32.totalorder %s8, 4
    %s18 = sphi 0, %s20
    %s21 = sphi 0, %s18
    %s22 = sphi 0, %s21
    %s38 = sphi 0, %s22
    %s42 = sphi 0, %s42
    %s44 = sphi 0, %s42
    %s45 = sphi 0, %s44
    %s59 = sphi 0, %s45
    %s65 = sphi 0, %s67
    %s68 = sphi 0, %s65
    %s69 = sphi 0, %s68
    %s85 = sphi 0, %s69
  $region4: #{a_call__.4} parent=0 // loop_header_branch
    %11 = sbr.rel (%p9) target = $region8
  $region5: #{a_call__.4} parent=0 // loop_body
    %s13 = ssub.s32 %s8, 1
    %s14 = ssub.s32 %s8, 2
    %s15 = sadd.s32 %s8, 1
    %s16 = ssub.s32 %s8, %s15
    %p17 = scmp.eq.s32.totalorder %s16, 0
    %s19 = sadd.s32 %s18, 1
    %s20 = scalar_select %p17, %s18, %s19
    %p23 = pneg %p17
    %p24 = scmp.eq.s32.totalorder %s8, 1
    %p25 = por %p23, %p24
    %p26 = scmp.ne.s32.totalorder %s18, %s21
    %p27 = scmp.eq.s32.totalorder %s8, 0
    %p28 = por %p26, %p27
    %p29 = scmp.ne.s32.totalorder %s18, %s21
    %p30 = scmp.eq.s32.totalorder %s13, 1
    %p31 = por %p29, %p30
    %p32 = scmp.ne.s32.totalorder %s21, %s22
    %p33 = scmp.eq.s32.totalorder %s13, 0
    %p34 = por %p32, %p33
    %p35 = scmp.ne.s32.totalorder %s21, %s22
    %p36 = scmp.eq.s32.totalorder %s14, 1
    %p37 = por %p35, %p36
    %p39 = scmp.ne.s32.totalorder %s22, %s38
    %p40 = scmp.eq.s32.totalorder %s14, 0
    %p41 = por %p39, %p40
    %s43 = sadd.s32 %s42, 1
    %p46 = scmp.eq.s32.totalorder %s8, 1
    %p47 = scmp.ne.s32.totalorder %s42, %s44
    %p48 = scmp.eq.s32.totalorder %s8, 0
    %p49 = por %p47, %p48
    %p50 = scmp.ne.s32.totalorder %s42, %s44
    %p51 = scmp.eq.s32.totalorder %s13, 1
    %p52 = por %p50, %p51
    %p53 = scmp.ne.s32.totalorder %s44, %s45
    %p54 = scmp.eq.s32.totalorder %s13, 0
    %p55 = por %p53, %p54
    %p56 = scmp.ne.s32.totalorder %s44, %s45
    %p57 = scmp.eq.s32.totalorder %s14, 1
    %p58 = por %p56, %p57
    %p60 = scmp.ne.s32.totalorder %s45, %s59
    %p61 = scmp.eq.s32.totalorder %s14, 0
    %p62 = por %p60, %p61
    %s63 = ssub.s32 %s8, %s15
    %p64 = scmp.eq.s32.totalorder %s63, 0
    %s66 = sadd.s32 %s65, 1
    %s67 = scalar_select %p64, %s65, %s66
    %p70 = pneg %p64
    %p71 = scmp.eq.s32.totalorder %s8, 1
    %p72 = por %p70, %p71
    %p73 = scmp.ne.s32.totalorder %s65, %s68
    %p74 = scmp.eq.s32.totalorder %s8, 0
    %p75 = por %p73, %p74
    %p76 = scmp.ne.s32.totalorder %s65, %s68
    %p77 = scmp.eq.s32.totalorder %s13, 1
    %p78 = por %p76, %p77
    %p79 = scmp.ne.s32.totalorder %s68, %s69
    %p80 = scmp.eq.s32.totalorder %s13, 0
    %p81 = por %p79, %p80
    %p82 = scmp.ne.s32.totalorder %s68, %s69
    %p83 = scmp.eq.s32.totalorder %s14, 1
    %p84 = por %p82, %p83
    %p86 = scmp.ne.s32.totalorder %s69, %s85
    %p87 = scmp.eq.s32.totalorder %s14, 0
    %p88 = por %p86, %p87
    %p89 = scmp.le.s32.totalorder 1, %s8
    %p90 = scmp.lt.s32.totalorder %s8, 3
    %p91 = pnand %p89, %p90
    %p92 = pneg %p91
    // Predicated region
    $region9: #{a_call__.4} parent=5 // pred_check
      _
    $region10: #{a_call__.4} parent=5 // pred_check_branch
      %94 = sbr.rel (%p91) target = $region12
    $region11: #{a_call__.4} parent=5 // pred_region
      %s95 = ssub.s32 %s8, 1
      // Predicated region
      $region13: #{a_call__.4} parent=11 // pred_check
        %p96 = pneg %p55
      $region14: #{a_call__.4} parent=11 // pred_check_branch
        %98 = sbr.rel (%p96) target = $region16
      $region15: #{a_call__.4} parent=11 // pred_region
        _
      $region16: #{a_call__.4} parent=11 // pred_fallthru
        _
    $region12: #{a_call__.4} parent=5 // pred_fallthru
      _
    %p99 = scmp.lt.s32.totalorder %s8, 2
    // Predicated region
    $region17: #{a_call__.4} parent=5 // pred_check
      %p100 = pneg %p99
    $region18: #{a_call__.4} parent=5 // pred_check_branch
      %102 = sbr.rel (%p100) target = $region20
    $region19: #{a_call__.4} parent=5 // pred_region
      // Predicated region
      $region21: #{a_call__.4} parent=19 // pred_check
        %p103 = pneg %p28
      $region22: #{a_call__.4} parent=19 // pred_check_branch
        %105 = sbr.rel (%p103) target = $region24
      $region23: #{a_call__.4} parent=19 // pred_region
        %p106 = scmp.lt.s32.totalorder %s8, 1
        %s107 = scalar_select %p106, %s8, 1
        %s108 = smul.addr %s107, 72
        %s109 = smul.addr %s108, 4
        %s110 = scalar_lea.vmem %s0, %s109
      $region24: #{a_call__.4} parent=19 // pred_fallthru
        _
    $region20: #{a_call__.4} parent=5 // pred_fallthru
      _
    %p111 = scmp.le.s32.totalorder 1, %s8
    %p112 = scmp.lt.s32.totalorder %s8, 3
    %p113 = pnand %p111, %p112
    %p114 = pneg %p113
    // Predicated region
    $region25: #{a_call__.4} parent=5 // pred_check
      _
    $region26: #{a_call__.4} parent=5 // pred_check_branch
      %116 = sbr.rel (%p113) target = $region28
    $region27: #{a_call__.4} parent=5 // pred_region
      %s117 = ssub.s32 %s8, 1
      %p118 = scmp.lt.s32.totalorder %s13, 1
      %s119 = scalar_select %p118, %s13, 1
      %s120 = smul.addr %s119, 72
      %s121 = smul.addr %s120, 4
      %s122 = scalar_lea.vmem %s0, %s121
      %p123 = pneg %p34
      %p124 = pneg %p31
      %p125 = pneg %p55
      %p126 = pneg %p52
      %p127 = pneg %p81
      %p128 = pneg %p78
      %p129 = scmp.lt.s32.totalorder %s13, 1
      %s130 = scalar_select %p129, %s13, 1
      %s131 = smul.addr %s130, 8
      %s132 = smul.addr %s131, 4
      %s133 = scalar_lea.vmem %s2, %s132
      %p134 = scmp.lt.s32.totalorder %s13, 1
      %s135 = scalar_select %p134, %s13, 1
      %s136 = smul.addr %s135, 72
      %s137 = smul.addr %s136, 4
      %s138 = scalar_lea.vmem %s0, %s137
      %p139 = scmp.lt.s32.totalorder %s13, 1
      %s140 = scalar_select %p139, %s13, 1
      %s141 = smul.addr %s140, 8
      %s142 = smul.addr %s141, 4
      %s143 = scalar_lea.vmem %s2, %s142
      %v145 = vld [vmem:[%s138] sm:$0xf]
      %v146 = vld [vmem:[%s138 + $0x8] sm:$0xf]
      %v147 = vld [vmem:[%s138 + $0x10] sm:$0xf]
      %v148 = vld [vmem:[%s138 + $0x18] sm:$0xf]
      %v149 = vld [vmem:[%s138 + $0x20] sm:$0xf]
      %v150 = vld [vmem:[%s138 + $0x28] sm:$0xf]
      %v151 = vld [vmem:[%s138 + $0x30] sm:$0xf]
      %v152 = vld [vmem:[%s138 + $0x38] sm:$0xf]
      %v161 = vunpack.c.l.b16 %v145
      %v162 = vunpack.c.l.b16 %v146
      %v163 = vunpack.c.l.b16 %v147
      %v164 = vunpack.c.l.b16 %v148
      %v165 = vunpack.c.l.b16 %v149
      %v166 = vunpack.c.l.b16 %v150
      %v167 = vunpack.c.l.b16 %v151
      %v168 = vunpack.c.l.b16 %v152
      %v169 = vpack.c.b16 %v162, %v161
      %v170 = vpack.c.b16 %v164, %v163
      %v171 = vpack.c.b16 %v166, %v165
      %v172 = vpack.c.b16 %v168, %v167
      %vm177 = vcmask 392192
      %178 = vst.msk [vmem:[#allocation2] sm:$0xff] %vm177, %v169
      %179 = vst.msk [vmem:[#allocation2 + $0x20] sm:$0xff] %vm177, %v170
      %180 = vst.msk [vmem:[#allocation2 + $0x40] sm:$0xff] %vm177, %v171
      %181 = vst.msk [vmem:[#allocation2 + $0x60] sm:$0xff] %vm177, %v172
      %s182 = scalar_lea.vmem %s138, 72
      %v183 = vld [vmem:[%s182] sm:$0xf]
      %v184 = vld [vmem:[%s182 + $0x8] sm:$0xf]
      %v185 = vld [vmem:[%s182 + $0x10] sm:$0xf]
      %v186 = vld [vmem:[%s182 + $0x18] sm:$0xf]
      %v187 = vld [vmem:[%s182 + $0x20] sm:$0xf]
      %v188 = vld [vmem:[%s182 + $0x28] sm:$0xf]
      %v189 = vld [vmem:[%s182 + $0x30] sm:$0xf]
      %v190 = vld [vmem:[%s182 + $0x38] sm:$0xf]
      %v199 = vunpack.c.l.b16 %v183
      %v200 = vunpack.c.l.b16 %v184
      %v201 = vunpack.c.l.b16 %v185
      %v202 = vunpack.c.l.b16 %v186
      %v203 = vunpack.c.l.b16 %v187
      %v204 = vunpack.c.l.b16 %v188
      %v205 = vunpack.c.l.b16 %v189
      %v206 = vunpack.c.l.b16 %v190
      %v207 = vpack.c.b16 %v200, %v199
      %v208 = vpack.c.b16 %v202, %v201
      %v209 = vpack.c.b16 %v204, %v203
      %v210 = vpack.c.b16 %v206, %v205
      %211 = vrot.lane.b32.xlu0 %v207, 48
      %v212 = vpop.permute.xlu0 %211
      %213 = vrot.lane.b32.xlu0 %v208, 48
      %v214 = vpop.permute.xlu0 %213
      %215 = vrot.lane.b32.xlu0 %v209, 48
      %v216 = vpop.permute.xlu0 %215
      %217 = vrot.lane.b32.xlu0 %v210, 48
      %v218 = vpop.permute.xlu0 %217
      %vm223 = vcmask 785792
      %224 = vst.msk [vmem:[#allocation2] sm:$0xff] %vm223, %v212
      %225 = vst.msk [vmem:[#allocation2 + $0x20] sm:$0xff] %vm223, %v214
      %226 = vst.msk [vmem:[#allocation2 + $0x40] sm:$0xff] %vm223, %v216
      %227 = vst.msk [vmem:[#allocation2 + $0x60] sm:$0xff] %vm223, %v218
      %v228 = vld [vmem:[%s138] sm:$0xf]
      %v229 = vld [vmem:[%s138 + $0x4] sm:$0x1]
      %v230 = vld [vmem:[%s138 + $0x8] sm:$0xf]
      %v231 = vld [vmem:[%s138 + $0xc] sm:$0x1]
      %v232 = vld [vmem:[%s138 + $0x10] sm:$0xf]
      %v233 = vld [vmem:[%s138 + $0x14] sm:$0x1]
      %v234 = vld [vmem:[%s138 + $0x18] sm:$0xf]
      %v235 = vld [vmem:[%s138 + $0x1c] sm:$0x1]
      %v236 = vld [vmem:[%s138 + $0x20] sm:$0xf]
      %v237 = vld [vmem:[%s138 + $0x24] sm:$0x1]
      %v238 = vld [vmem:[%s138 + $0x28] sm:$0xf]
      %v239 = vld [vmem:[%s138 + $0x2c] sm:$0x1]
      %v240 = vld [vmem:[%s138 + $0x30] sm:$0xf]
      %v241 = vld [vmem:[%s138 + $0x34] sm:$0x1]
      %v242 = vld [vmem:[%s138 + $0x38] sm:$0xf]
      %v243 = vld [vmem:[%s138 + $0x3c] sm:$0x1]
      %vm244 = vsmask.f32 3328
      %vm245 = vsmask.f32 7440
      %vm246 = vmor %vm244, %vm245
      %v248 = vshrl.u32 %v228, 16
      %v250 = vrot.slane %v248, 4
      %v251 = vshll.u32 %v228, 16
      %v253 = vrot.slane %v251, 5
      %v254 = vor.u32 %v250, %v253
      %v255 = vrot.slane %v254, 4
      %v257 = vshll.u32 %v229, 16
      %v259 = vrot.slane %v257, 5
      %v260 = vsel %vm246, %v255, %v259
      %v262 = vshrl.u32 %v230, 16
      %v264 = vrot.slane %v262, 4
      %v265 = vshll.u32 %v230, 16
      %v267 = vrot.slane %v265, 5
      %v268 = vor.u32 %v264, %v267
      %v269 = vrot.slane %v268, 4
      %v271 = vshll.u32 %v231, 16
      %v273 = vrot.slane %v271, 5
      %v274 = vsel %vm246, %v269, %v273
      %v276 = vshrl.u32 %v232, 16
      %v278 = vrot.slane %v276, 4
      %v279 = vshll.u32 %v232, 16
      %v281 = vrot.slane %v279, 5
      %v282 = vor.u32 %v278, %v281
      %v283 = vrot.slane %v282, 4
      %v285 = vshll.u32 %v233, 16
      %v287 = vrot.slane %v285, 5
      %v288 = vsel %vm246, %v283, %v287
      %v290 = vshrl.u32 %v234, 16
      %v292 = vrot.slane %v290, 4
      %v293 = vshll.u32 %v234, 16
      %v295 = vrot.slane %v293, 5
      %v296 = vor.u32 %v292, %v295
      %v297 = vrot.slane %v296, 4
      %v299 = vshll.u32 %v235, 16
      %v301 = vrot.slane %v299, 5
      %v302 = vsel %vm246, %v297, %v301
      %v304 = vshrl.u32 %v236, 16
      %v306 = vrot.slane %v304, 4
      %v307 = vshll.u32 %v236, 16
      %v309 = vrot.slane %v307, 5
      %v310 = vor.u32 %v306, %v309
      %v311 = vrot.slane %v310, 4
      %v313 = vshll.u32 %v237, 16
      %v315 = vrot.slane %v313, 5
      %v316 = vsel %vm246, %v311, %v315
      %v318 = vshrl.u32 %v238, 16
      %v320 = vrot.slane %v318, 4
      %v321 = vshll.u32 %v238, 16
      %v323 = vrot.slane %v321, 5
      %v324 = vor.u32 %v320, %v323
      %v325 = vrot.slane %v324, 4
      %v327 = vshll.u32 %v239, 16
      %v329 = vrot.slane %v327, 5
      %v330 = vsel %vm246, %v325, %v329
      %v332 = vshrl.u32 %v240, 16
      %v334 = vrot.slane %v332, 4
      %v335 = vshll.u32 %v240, 16
      %v337 = vrot.slane %v335, 5
      %v338 = vor.u32 %v334, %v337
      %v339 = vrot.slane %v338, 4
      %v341 = vshll.u32 %v241, 16
      %v343 = vrot.slane %v341, 5
      %v344 = vsel %vm246, %v339, %v343
      %v346 = vshrl.u32 %v242, 16
      %v348 = vrot.slane %v346, 4
      %v349 = vshll.u32 %v242, 16
      %v351 = vrot.slane %v349, 5
      %v352 = vor.u32 %v348, %v351
      %v353 = vrot.slane %v352, 4
      %v355 = vshll.u32 %v243, 16
      %v357 = vrot.slane %v355, 5
      %v358 = vsel %vm246, %v353, %v357
      %v359 = vunpack.c.l.b16 %v260
      %v360 = vunpack.c.l.b16 %v274
      %v361 = vunpack.c.l.b16 %v288
      %v362 = vunpack.c.l.b16 %v302
      %v363 = vunpack.c.l.b16 %v316
      %v364 = vunpack.c.l.b16 %v330
      %v365 = vunpack.c.l.b16 %v344
      %v366 = vunpack.c.l.b16 %v358
      %v367 = vpack.c.b16 %v360, %v359
      %v368 = vpack.c.b16 %v362, %v361
      %v369 = vpack.c.b16 %v364, %v363
      %v370 = vpack.c.b16 %v366, %v365
      %371 = vrot.lane.b32.xlu0 %v367, 96
      %v372 = vpop.permute.xlu0 %371
      %373 = vrot.lane.b32.xlu0 %v368, 96
      %v374 = vpop.permute.xlu0 %373
      %375 = vrot.lane.b32.xlu0 %v369, 96
      %v376 = vpop.permute.xlu0 %375
      %377 = vrot.lane.b32.xlu0 %v370, 96
      %v378 = vpop.permute.xlu0 %377
      %vm383 = vcmask 1048320
      %384 = vst.msk [vmem:[#allocation2] sm:$0xff] %vm383, %v372
      %vm385 = vcmask 130048
      %386 = vst.msk [vmem:[#allocation2 + $0x8] sm:$0xff] %vm385, %v372
      %387 = vst.msk [vmem:[#allocation2 + $0x20] sm:$0xff] %vm383, %v374
      %388 = vst.msk [vmem:[#allocation2 + $0x28] sm:$0xff] %vm385, %v374
      %389 = vst.msk [vmem:[#allocation2 + $0x40] sm:$0xff] %vm383, %v376
      %390 = vst.msk [vmem:[#allocation2 + $0x48] sm:$0xff] %vm385, %v376
      %391 = vst.msk [vmem:[#allocation2 + $0x60] sm:$0xff] %vm383, %v378
      %392 = vst.msk [vmem:[#allocation2 + $0x68] sm:$0xff] %vm385, %v378
      %s393 = scalar_lea.vmem %s138, 144
      %v394 = vld [vmem:[%s393] sm:$0xf]
      %v395 = vld [vmem:[%s393 + $0x8] sm:$0xf]
      %v396 = vld [vmem:[%s393 + $0x10] sm:$0xf]
      %v397 = vld [vmem:[%s393 + $0x18] sm:$0xf]
      %v398 = vld [vmem:[%s393 + $0x20] sm:$0xf]
      %v399 = vld [vmem:[%s393 + $0x28] sm:$0xf]
      %v400 = vld [vmem:[%s393 + $0x30] sm:$0xf]
      %v401 = vld [vmem:[%s393 + $0x38] sm:$0xf]
      %v410 = vunpack.c.l.b16 %v394
      %v411 = vunpack.c.l.b16 %v395
      %v412 = vunpack.c.l.b16 %v396
      %v413 = vunpack.c.l.b16 %v397
      %v414 = vunpack.c.l.b16 %v398
      %v415 = vunpack.c.l.b16 %v399
      %v416 = vunpack.c.l.b16 %v400
      %v417 = vunpack.c.l.b16 %v401
      %v418 = vpack.c.b16 %v411, %v410
      %v419 = vpack.c.b16 %v413, %v412
      %v420 = vpack.c.b16 %v415, %v414
      %v421 = vpack.c.b16 %v417, %v416
      %422 = vrot.lane.b32.xlu0 %v418, 16
      %v423 = vpop.permute.xlu0 %422
      %424 = vrot.lane.b32.xlu0 %v419, 16
      %v425 = vpop.permute.xlu0 %424
      %426 = vrot.lane.b32.xlu0 %v420, 16
      %v427 = vpop.permute.xlu0 %426
      %428 = vrot.lane.b32.xlu0 %v421, 16
      %v429 = vpop.permute.xlu0 %428
      %vm434 = vcmask 523392
      %435 = vst.msk [vmem:[#allocation2 + $0x8] sm:$0xff] %vm434, %v423
      %436 = vst.msk [vmem:[#allocation2 + $0x28] sm:$0xff] %vm434, %v425
      %437 = vst.msk [vmem:[#allocation2 + $0x48] sm:$0xff] %vm434, %v427
      %438 = vst.msk [vmem:[#allocation2 + $0x68] sm:$0xff] %vm434, %v429
      %s439 = scalar_lea.vmem %s138, 216
      %v440 = vld [vmem:[%s439] sm:$0xf]
      %v441 = vld [vmem:[%s439 + $0x8] sm:$0xf]
      %v442 = vld [vmem:[%s439 + $0x10] sm:$0xf]
      %v443 = vld [vmem:[%s439 + $0x18] sm:$0xf]
      %v444 = vld [vmem:[%s439 + $0x20] sm:$0xf]
      %v445 = vld [vmem:[%s439 + $0x28] sm:$0xf]
      %v446 = vld [vmem:[%s439 + $0x30] sm:$0xf]
      %v447 = vld [vmem:[%s439 + $0x38] sm:$0xf]
      %v456 = vunpack.c.l.b16 %v440
      %v457 = vunpack.c.l.b16 %v441
      %v458 = vunpack.c.l.b16 %v442
      %v459 = vunpack.c.l.b16 %v443
      %v460 = vunpack.c.l.b16 %v444
      %v461 = vunpack.c.l.b16 %v445
      %v462 = vunpack.c.l.b16 %v446
      %v463 = vunpack.c.l.b16 %v447
      %v464 = vpack.c.b16 %v457, %v456
      %v465 = vpack.c.b16 %v459, %v458
      %v466 = vpack.c.b16 %v461, %v460
      %v467 = vpack.c.b16 %v463, %v462
      %468 = vrot.lane.b32.xlu0 %v464, 64
      %v469 = vpop.permute.xlu0 %468
      %470 = vrot.lane.b32.xlu0 %v465, 64
      %v471 = vpop.permute.xlu0 %470
      %472 = vrot.lane.b32.xlu0 %v466, 64
      %v473 = vpop.permute.xlu0 %472
      %474 = vrot.lane.b32.xlu0 %v467, 64
      %v475 = vpop.permute.xlu0 %474
      %vm480 = vcmask 916992
      %481 = vst.msk [vmem:[#allocation2 + $0x8] sm:$0xff] %vm480, %v469
      %482 = vst.msk [vmem:[#allocation2 + $0x28] sm:$0xff] %vm480, %v471
      %483 = vst.msk [vmem:[#allocation2 + $0x48] sm:$0xff] %vm480, %v473
      %484 = vst.msk [vmem:[#allocation2 + $0x68] sm:$0xff] %vm480, %v475
      %v485 = vld [vmem:[%s393] sm:$0xf]
      %v486 = vld [vmem:[%s393 + $0x4] sm:$0x1]
      %v487 = vld [vmem:[%s393 + $0x8] sm:$0xf]
      %v488 = vld [vmem:[%s393 + $0xc] sm:$0x1]
      %v489 = vld [vmem:[%s393 + $0x10] sm:$0xf]
      %v490 = vld [vmem:[%s393 + $0x14] sm:$0x1]
      %v491 = vld [vmem:[%s393 + $0x18] sm:$0xf]
      %v492 = vld [vmem:[%s393 + $0x1c] sm:$0x1]
      %v493 = vld [vmem:[%s393 + $0x20] sm:$0xf]
      %v494 = vld [vmem:[%s393 + $0x24] sm:$0x1]
      %v495 = vld [vmem:[%s393 + $0x28] sm:$0xf]
      %v496 = vld [vmem:[%s393 + $0x2c] sm:$0x1]
      %v497 = vld [vmem:[%s393 + $0x30] sm:$0xf]
      %v498 = vld [vmem:[%s393 + $0x34] sm:$0x1]
      %v499 = vld [vmem:[%s393 + $0x38] sm:$0xf]
      %v500 = vld [vmem:[%s393 + $0x3c] sm:$0x1]
      %v502 = vshrl.u32 %v485, 16
      %v504 = vrot.slane %v502, 4
      %v505 = vshll.u32 %v485, 16
      %v507 = vrot.slane %v505, 5
      %v508 = vor.u32 %v504, %v507
      %v509 = vrot.slane %v508, 4
      %v511 = vshll.u32 %v486, 16
      %v513 = vrot.slane %v511, 5
      %v514 = vsel %vm246, %v509, %v513
      %v516 = vshrl.u32 %v487, 16
      %v518 = vrot.slane %v516, 4
      %v519 = vshll.u32 %v487, 16
      %v521 = vrot.slane %v519, 5
      %v522 = vor.u32 %v518, %v521
      %v523 = vrot.slane %v522, 4
      %v525 = vshll.u32 %v488, 16
      %v527 = vrot.slane %v525, 5
      %v528 = vsel %vm246, %v523, %v527
      %v530 = vshrl.u32 %v489, 16
      %v532 = vrot.slane %v530, 4
      %v533 = vshll.u32 %v489, 16
      %v535 = vrot.slane %v533, 5
      %v536 = vor.u32 %v532, %v535
      %v537 = vrot.slane %v536, 4
      %v539 = vshll.u32 %v490, 16
      %v541 = vrot.slane %v539, 5
      %v542 = vsel %vm246, %v537, %v541
      %v544 = vshrl.u32 %v491, 16
      %v546 = vrot.slane %v544, 4
      %v547 = vshll.u32 %v491, 16
      %v549 = vrot.slane %v547, 5
      %v550 = vor.u32 %v546, %v549
      %v551 = vrot.slane %v550, 4
      %v553 = vshll.u32 %v492, 16
      %v555 = vrot.slane %v553, 5
      %v556 = vsel %vm246, %v551, %v555
      %v558 = vshrl.u32 %v493, 16
      %v560 = vrot.slane %v558, 4
      %v561 = vshll.u32 %v493, 16
      %v563 = vrot.slane %v561, 5
      %v564 = vor.u32 %v560, %v563
      %v565 = vrot.slane %v564, 4
      %v567 = vshll.u32 %v494, 16
      %v569 = vrot.slane %v567, 5
      %v570 = vsel %vm246, %v565, %v569
      %v572 = vshrl.u32 %v495, 16
      %v574 = vrot.slane %v572, 4
      %v575 = vshll.u32 %v495, 16
      %v577 = vrot.slane %v575, 5
      %v578 = vor.u32 %v574, %v577
      %v579 = vrot.slane %v578, 4
      %v581 = vshll.u32 %v496, 16
      %v583 = vrot.slane %v581, 5
      %v584 = vsel %vm246, %v579, %v583
      %v586 = vshrl.u32 %v497, 16
      %v588 = vrot.slane %v586, 4
      %v589 = vshll.u32 %v497, 16
      %v591 = vrot.slane %v589, 5
      %v592 = vor.u32 %v588, %v591
      %v593 = vrot.slane %v592, 4
      %v595 = vshll.u32 %v498, 16
      %v597 = vrot.slane %v595, 5
      %v598 = vsel %vm246, %v593, %v597
      %v600 = vshrl.u32 %v499, 16
      %v602 = vrot.slane %v600, 4
      %v603 = vshll.u32 %v499, 16
      %v605 = vrot.slane %v603, 5
      %v606 = vor.u32 %v602, %v605
      %v607 = vrot.slane %v606, 4
      %v609 = vshll.u32 %v500, 16
      %v611 = vrot.slane %v609, 5
      %v612 = vsel %vm246, %v607, %v611
      %v613 = vunpack.c.l.b16 %v514
      %v614 = vunpack.c.l.b16 %v528
      %v615 = vunpack.c.l.b16 %v542
      %v616 = vunpack.c.l.b16 %v556
      %v617 = vunpack.c.l.b16 %v570
      %v618 = vunpack.c.l.b16 %v584
      %v619 = vunpack.c.l.b16 %v598
      %v620 = vunpack.c.l.b16 %v612
      %v621 = vpack.c.b16 %v614, %v613
      %v622 = vpack.c.b16 %v616, %v615
      %v623 = vpack.c.b16 %v618, %v617
      %v624 = vpack.c.b16 %v620, %v619
      %625 = vrot.lane.b32.xlu0 %v621, 112
      %v626 = vpop.permute.xlu0 %625
      %627 = vrot.lane.b32.xlu0 %v622, 112
      %v628 = vpop.permute.xlu0 %627
      %629 = vrot.lane.b32.xlu0 %v623, 112
      %v630 = vpop.permute.xlu0 %629
      %631 = vrot.lane.b32.xlu0 %v624, 112
      %v632 = vpop.permute.xlu0 %631
      %vm637 = vcmask 1048448
      %638 = vst.msk [vmem:[#allocation2 + $0x8] sm:$0xff] %vm637, %v626
      %vm639 = vcmask 261120
      %640 = vst.msk [vmem:[#allocation2 + $0x10] sm:$0xff] %vm639, %v626
      %641 = vst.msk [vmem:[#allocation2 + $0x28] sm:$0xff] %vm637, %v628
      %642 = vst.msk [vmem:[#allocation2 + $0x30] sm:$0xff] %vm639, %v628
      %643 = vst.msk [vmem:[#allocation2 + $0x48] sm:$0xff] %vm637, %v630
      %644 = vst.msk [vmem:[#allocation2 + $0x50] sm:$0xff] %vm639, %v630
      %645 = vst.msk [vmem:[#allocation2 + $0x68] sm:$0xff] %vm637, %v632
      %646 = vst.msk [vmem:[#allocation2 + $0x70] sm:$0xff] %vm639, %v632
      %s647 = scalar_lea.vmem %s138, 8
      %v648 = vld [vmem:[%s647] sm:$0xf]
      %v649 = vld [vmem:[%s647 + $0x8] sm:$0xf]
      %v650 = vld [vmem:[%s647 + $0x10] sm:$0xf]
      %v651 = vld [vmem:[%s647 + $0x18] sm:$0xf]
      %v652 = vld [vmem:[%s647 + $0x20] sm:$0xf]
      %v653 = vld [vmem:[%s647 + $0x28] sm:$0xf]
      %v654 = vld [vmem:[%s647 + $0x30] sm:$0xf]
      %v655 = vld [vmem:[%s647 + $0x38] sm:$0xf]
      %v664 = vunpack.c.l.b16 %v648
      %v665 = vunpack.c.l.b16 %v649
      %v666 = vunpack.c.l.b16 %v650
      %v667 = vunpack.c.l.b16 %v651
      %v668 = vunpack.c.l.b16 %v652
      %v669 = vunpack.c.l.b16 %v653
      %v670 = vunpack.c.l.b16 %v654
      %v671 = vunpack.c.l.b16 %v655
      %v672 = vpack.c.b16 %v665, %v664
      %v673 = vpack.c.b16 %v667, %v666
      %v674 = vpack.c.b16 %v669, %v668
      %v675 = vpack.c.b16 %v671, %v670
      %676 = vrot.lane.b32.xlu0 %v672, 32
      %v677 = vpop.permute.xlu0 %676
      %678 = vrot.lane.b32.xlu0 %v673, 32
      %v679 = vpop.permute.xlu0 %678
      %680 = vrot.lane.b32.xlu0 %v674, 32
      %v681 = vpop.permute.xlu0 %680
      %682 = vrot.lane.b32.xlu0 %v675, 32
      %v683 = vpop.permute.xlu0 %682
      %vm688 = vcmask 654592
      %689 = vst.msk [vmem:[#allocation2 + $0x10] sm:$0xff] %vm688, %v677
      %690 = vst.msk [vmem:[#allocation2 + $0x30] sm:$0xff] %vm688, %v679
      %691 = vst.msk [vmem:[#allocation2 + $0x50] sm:$0xff] %vm688, %v681
      %692 = vst.msk [vmem:[#allocation2 + $0x70] sm:$0xff] %vm688, %v683
      %s693 = scalar_lea.vmem %s138, 80
      %v694 = vld [vmem:[%s693] sm:$0xf]
      %v695 = vld [vmem:[%s693 + $0x8] sm:$0xf]
      %v696 = vld [vmem:[%s693 + $0x10] sm:$0xf]
      %v697 = vld [vmem:[%s693 + $0x18] sm:$0xf]
      %v698 = vld [vmem:[%s693 + $0x20] sm:$0xf]
      %v699 = vld [vmem:[%s693 + $0x28] sm:$0xf]
      %v700 = vld [vmem:[%s693 + $0x30] sm:$0xf]
      %v701 = vld [vmem:[%s693 + $0x38] sm:$0xf]
      %v710 = vunpack.c.l.b16 %v694
      %v711 = vunpack.c.l.b16 %v695
      %v712 = vunpack.c.l.b16 %v696
      %v713 = vunpack.c.l.b16 %v697
      %v714 = vunpack.c.l.b16 %v698
      %v715 = vunpack.c.l.b16 %v699
      %v716 = vunpack.c.l.b16 %v700
      %v717 = vunpack.c.l.b16 %v701
      %v718 = vpack.c.b16 %v711, %v710
      %v719 = vpack.c.b16 %v713, %v712
      %v720 = vpack.c.b16 %v715, %v714
      %v721 = vpack.c.b16 %v717, %v716
      %722 = vrot.lane.b32.xlu0 %v718, 80
      %v723 = vpop.permute.xlu0 %722
      %724 = vrot.lane.b32.xlu0 %v719, 80
      %v725 = vpop.permute.xlu0 %724
      %726 = vrot.lane.b32.xlu0 %v720, 80
      %v727 = vpop.permute.xlu0 %726
      %728 = vrot.lane.b32.xlu0 %v721, 80
      %v729 = vpop.permute.xlu0 %728
      %vm734 = vcmask 1048192
      %735 = vst.msk [vmem:[#allocation2 + $0x10] sm:$0xff] %vm734, %v723
      %736 = vst.msk [vmem:[#allocation2 + $0x30] sm:$0xff] %vm734, %v725
      %737 = vst.msk [vmem:[#allocation2 + $0x50] sm:$0xff] %vm734, %v727
      %738 = vst.msk [vmem:[#allocation2 + $0x70] sm:$0xff] %vm734, %v729
      %v739 = vld [vmem:[%s647] sm:$0xf]
      %v740 = vld [vmem:[%s647 + $0x4] sm:$0x1]
      %v741 = vld [vmem:[%s647 + $0x8] sm:$0xf]
      %v742 = vld [vmem:[%s647 + $0xc] sm:$0x1]
      %v743 = vld [vmem:[%s647 + $0x10] sm:$0xf]
      %v744 = vld [vmem:[%s647 + $0x14] sm:$0x1]
      %v745 = vld [vmem:[%s647 + $0x18] sm:$0xf]
      %v746 = vld [vmem:[%s647 + $0x1c] sm:$0x1]
      %v747 = vld [vmem:[%s647 + $0x20] sm:$0xf]
      %v748 = vld [vmem:[%s647 + $0x24] sm:$0x1]
      %v749 = vld [vmem:[%s647 + $0x28] sm:$0xf]
      %v750 = vld [vmem:[%s647 + $0x2c] sm:$0x1]
      %v751 = vld [vmem:[%s647 + $0x30] sm:$0xf]
      %v752 = vld [vmem:[%s647 + $0x34] sm:$0x1]
      %v753 = vld [vmem:[%s647 + $0x38] sm:$0xf]
      %v754 = vld [vmem:[%s647 + $0x3c] sm:$0x1]
      %v756 = vshrl.u32 %v739, 16
      %v758 = vrot.slane %v756, 4
      %v759 = vshll.u32 %v739, 16
      %v761 = vrot.slane %v759, 5
      %v762 = vor.u32 %v758, %v761
      %v763 = vrot.slane %v762, 4
      %v765 = vshll.u32 %v740, 16
      %v767 = vrot.slane %v765, 5
      %v768 = vsel %vm246, %v763, %v767
      %v770 = vshrl.u32 %v741, 16
      %v772 = vrot.slane %v770, 4
      %v773 = vshll.u32 %v741, 16
      %v775 = vrot.slane %v773, 5
      %v776 = vor.u32 %v772, %v775
      %v777 = vrot.slane %v776, 4
      %v779 = vshll.u32 %v742, 16
      %v781 = vrot.slane %v779, 5
      %v782 = vsel %vm246, %v777, %v781
      %v784 = vshrl.u32 %v743, 16
      %v786 = vrot.slane %v784, 4
      %v787 = vshll.u32 %v743, 16
      %v789 = vrot.slane %v787, 5
      %v790 = vor.u32 %v786, %v789
      %v791 = vrot.slane %v790, 4
      %v793 = vshll.u32 %v744, 16
      %v795 = vrot.slane %v793, 5
      %v796 = vsel %vm246, %v791, %v795
      %v798 = vshrl.u32 %v745, 16
      %v800 = vrot.slane %v798, 4
      %v801 = vshll.u32 %v745, 16
      %v803 = vrot.slane %v801, 5
      %v804 = vor.u32 %v800, %v803
      %v805 = vrot.slane %v804, 4
      %v807 = vshll.u32 %v746, 16
      %v809 = vrot.slane %v807, 5
      %v810 = vsel %vm246, %v805, %v809
      %v812 = vshrl.u32 %v747, 16
      %v814 = vrot.slane %v812, 4
      %v815 = vshll.u32 %v747, 16
      %v817 = vrot.slane %v815, 5
      %v818 = vor.u32 %v814, %v817
      %v819 = vrot.slane %v818, 4
      %v821 = vshll.u32 %v748, 16
      %v823 = vrot.slane %v821, 5
      %v824 = vsel %vm246, %v819, %v823
      %v826 = vshrl.u32 %v749, 16
      %v828 = vrot.slane %v826, 4
      %v829 = vshll.u32 %v749, 16
      %v831 = vrot.slane %v829, 5
      %v832 = vor.u32 %v828, %v831
      %v833 = vrot.slane %v832, 4
      %v835 = vshll.u32 %v750, 16
      %v837 = vrot.slane %v835, 5
      %v838 = vsel %vm246, %v833, %v837
      %v840 = vshrl.u32 %v751, 16
      %v842 = vrot.slane %v840, 4
      %v843 = vshll.u32 %v751, 16
      %v845 = vrot.slane %v843, 5
      %v846 = vor.u32 %v842, %v845
      %v847 = vrot.slane %v846, 4
      %v849 = vshll.u32 %v752, 16
      %v851 = vrot.slane %v849, 5
      %v852 = vsel %vm246, %v847, %v851
      %v854 = vshrl.u32 %v753, 16
      %v856 = vrot.slane %v854, 4
      %v857 = vshll.u32 %v753, 16
      %v859 = vrot.slane %v857, 5
      %v860 = vor.u32 %v856, %v859
      %v861 = vrot.slane %v860, 4
      %v863 = vshll.u32 %v754, 16
      %v865 = vrot.slane %v863, 5
      %v866 = vsel %vm246, %v861, %v865
      %v867 = vunpack.c.l.b16 %v768
      %v868 = vunpack.c.l.b16 %v782
      %v869 = vunpack.c.l.b16 %v796
      %v870 = vunpack.c.l.b16 %v810
      %v871 = vunpack.c.l.b16 %v824
      %v872 = vunpack.c.l.b16 %v838
      %v873 = vunpack.c.l.b16 %v852
      %v874 = vunpack.c.l.b16 %v866
      %v875 = vpack.c.b16 %v868, %v867
      %v876 = vpack.c.b16 %v870, %v869
      %v877 = vpack.c.b16 %v872, %v871
      %v878 = vpack.c.b16 %v874, %v873
      %883 = vst.msk [vmem:[#allocation2 + $0x18] sm:$0xff] %vm177, %v875
      %884 = vst.msk [vmem:[#allocation2 + $0x38] sm:$0xff] %vm177, %v876
      %885 = vst.msk [vmem:[#allocation2 + $0x58] sm:$0xff] %vm177, %v877
      %886 = vst.msk [vmem:[#allocation2 + $0x78] sm:$0xff] %vm177, %v878
      %v887 = vld [vmem:[#allocation2] sm:$0xff]
      %v888 = vld [vmem:[#allocation2 + $0x8] sm:$0xff]
      %v889 = vld [vmem:[#allocation2 + $0x10] sm:$0xff]
      %v890 = vld [vmem:[#allocation2 + $0x18] sm:$0xff]
      %v891 = vld [vmem:[#allocation2 + $0x20] sm:$0xff]
      %v892 = vld [vmem:[#allocation2 + $0x28] sm:$0xff]
      %v893 = vld [vmem:[#allocation2 + $0x30] sm:$0xff]
      %v894 = vld [vmem:[#allocation2 + $0x38] sm:$0xff]
      %v895 = vld [vmem:[#allocation2 + $0x40] sm:$0xff]
      %v896 = vld [vmem:[#allocation2 + $0x48] sm:$0xff]
      %v897 = vld [vmem:[#allocation2 + $0x50] sm:$0xff]
      %v898 = vld [vmem:[#allocation2 + $0x58] sm:$0xff]
      %v899 = vld [vmem:[#allocation2 + $0x60] sm:$0xff]
      %v900 = vld [vmem:[#allocation2 + $0x68] sm:$0xff]
      %v901 = vld [vmem:[#allocation2 + $0x70] sm:$0xff]
      %v902 = vld [vmem:[#allocation2 + $0x78] sm:$0xff]
      %v903 = vld [vmem:[%s1] sm:$0xf]
      %v904 = vld [vmem:[%s1 + $0x4] sm:$0xf]
      %v905 = vld [vmem:[%s1 + $0x8] sm:$0xf]
      %v906 = vld [vmem:[%s1 + $0xc] sm:$0xf]
      %v907 = vld [vmem:[%s1 + $0x10] sm:$0xf]
      %v908 = vld [vmem:[%s1 + $0x14] sm:$0xf]
      %v909 = vld [vmem:[%s1 + $0x18] sm:$0xf]
      %v910 = vld [vmem:[%s1 + $0x1c] sm:$0xf]
      %v911 = vld [vmem:[%s1 + $0x20] sm:$0xf]
      %v912 = vld [vmem:[%s1 + $0x24] sm:$0xf]
      %v913 = vld [vmem:[%s1 + $0x28] sm:$0xf]
      %v914 = vld [vmem:[%s1 + $0x2c] sm:$0xf]
      %v915 = vld [vmem:[%s1 + $0x30] sm:$0xf]
      %v916 = vld [vmem:[%s1 + $0x34] sm:$0xf]
      %v917 = vld [vmem:[%s1 + $0x38] sm:$0xf]
      %v918 = vld [vmem:[%s1 + $0x3c] sm:$0xf]
      %v919 = vld [vmem:[%s1 + $0x40] sm:$0xf]
      %v920 = vld [vmem:[%s1 + $0x44] sm:$0xf]
      %v921 = vld [vmem:[%s1 + $0x48] sm:$0xf]
      %v922 = vld [vmem:[%s1 + $0x4c] sm:$0xf]
      %v923 = vld [vmem:[%s1 + $0x50] sm:$0xf]
      %v924 = vld [vmem:[%s1 + $0x54] sm:$0xf]
      %v925 = vld [vmem:[%s1 + $0x58] sm:$0xf]
      %v926 = vld [vmem:[%s1 + $0x5c] sm:$0xf]
      %v927 = vld [vmem:[%s1 + $0x60] sm:$0xf]
      %v928 = vld [vmem:[%s1 + $0x64] sm:$0xf]
      %v929 = vld [vmem:[%s1 + $0x68] sm:$0xf]
      %v930 = vld [vmem:[%s1 + $0x6c] sm:$0xf]
      %v931 = vld [vmem:[%s1 + $0x70] sm:$0xf]
      %v932 = vld [vmem:[%s1 + $0x74] sm:$0xf]
      %v933 = vld [vmem:[%s1 + $0x78] sm:$0xf]
      %v934 = vld [vmem:[%s1 + $0x7c] sm:$0xf]
      %v935 = vld [vmem:[%s1 + $0x80] sm:$0xf]
      %v936 = vld [vmem:[%s1 + $0x84] sm:$0xf]
      %v937 = vld [vmem:[%s1 + $0x88] sm:$0xf]
      %v938 = vld [vmem:[%s1 + $0x8c] sm:$0xf]
      %v939 = vld [vmem:[%s1 + $0x90] sm:$0xf]
      %v940 = vld [vmem:[%s1 + $0x94] sm:$0xf]
      %v941 = vld [vmem:[%s1 + $0x98] sm:$0xf]
      %v942 = vld [vmem:[%s1 + $0x9c] sm:$0xf]
      %v943 = vld [vmem:[%s1 + $0xa0] sm:$0xf]
      %v944 = vld [vmem:[%s1 + $0xa4] sm:$0xf]
      %v945 = vld [vmem:[%s1 + $0xa8] sm:$0xf]
      %v946 = vld [vmem:[%s1 + $0xac] sm:$0xf]
      %v947 = vld [vmem:[%s1 + $0xb0] sm:$0xf]
      %v948 = vld [vmem:[%s1 + $0xb4] sm:$0xf]
      %v949 = vld [vmem:[%s1 + $0xb8] sm:$0xf]
      %v950 = vld [vmem:[%s1 + $0xbc] sm:$0xf]
      %v951 = vld [vmem:[%s1 + $0xc0] sm:$0xf]
      %v952 = vld [vmem:[%s1 + $0xc4] sm:$0xf]
      %v953 = vld [vmem:[%s1 + $0xc8] sm:$0xf]
      %v954 = vld [vmem:[%s1 + $0xcc] sm:$0xf]
      %v955 = vld [vmem:[%s1 + $0xd0] sm:$0xf]
      %v956 = vld [vmem:[%s1 + $0xd4] sm:$0xf]
      %v1011 = vunpack.c.l.b16 %v903
      %v1012 = vunpack.c.l.b16 %v904
      %v1013 = vunpack.c.l.b16 %v905
      %v1014 = vunpack.c.l.b16 %v906
      %v1015 = vunpack.c.l.b16 %v907
      %v1016 = vunpack.c.l.b16 %v908
      %v1017 = vunpack.c.l.b16 %v909
      %v1018 = vunpack.c.l.b16 %v910
      %v1019 = vunpack.c.l.b16 %v911
      %v1020 = vunpack.c.l.b16 %v912
      %v1021 = vunpack.c.l.b16 %v913
      %v1022 = vunpack.c.l.b16 %v914
      %v1023 = vunpack.c.l.b16 %v915
      %v1024 = vunpack.c.l.b16 %v916
      %v1025 = vunpack.c.l.b16 %v917
      %v1026 = vunpack.c.l.b16 %v918
      %v1027 = vunpack.c.l.b16 %v919
      %v1028 = vunpack.c.l.b16 %v920
      %v1029 = vunpack.c.l.b16 %v921
      %v1030 = vunpack.c.l.b16 %v922
      %v1031 = vunpack.c.l.b16 %v923
      %v1032 = vunpack.c.l.b16 %v924
      %v1033 = vunpack.c.l.b16 %v925
      %v1034 = vunpack.c.l.b16 %v926
      %v1035 = vunpack.c.l.b16 %v927
      %v1036 = vunpack.c.l.b16 %v928
      %v1037 = vunpack.c.l.b16 %v929
      %v1038 = vunpack.c.l.b16 %v930
      %v1039 = vunpack.c.l.b16 %v931
      %v1040 = vunpack.c.l.b16 %v932
      %v1041 = vunpack.c.l.b16 %v933
      %v1042 = vunpack.c.l.b16 %v934
      %v1043 = vunpack.c.l.b16 %v935
      %v1044 = vunpack.c.l.b16 %v936
      %v1045 = vunpack.c.l.b16 %v937
      %v1046 = vunpack.c.l.b16 %v938
      %v1047 = vunpack.c.l.b16 %v939
      %v1048 = vunpack.c.l.b16 %v940
      %v1049 = vunpack.c.l.b16 %v941
      %v1050 = vunpack.c.l.b16 %v942
      %v1051 = vunpack.c.l.b16 %v943
      %v1052 = vunpack.c.l.b16 %v944
      %v1053 = vunpack.c.l.b16 %v945
      %v1054 = vunpack.c.l.b16 %v946
      %v1055 = vunpack.c.l.b16 %v947
      %v1056 = vunpack.c.l.b16 %v948
      %v1057 = vunpack.c.l.b16 %v949
      %v1058 = vunpack.c.l.b16 %v950
      %v1059 = vunpack.c.l.b16 %v951
      %v1060 = vunpack.c.l.b16 %v952
      %v1061 = vunpack.c.l.b16 %v953
      %v1062 = vunpack.c.l.b16 %v954
      %v1063 = vunpack.c.l.b16 %v955
      %v1064 = vunpack.c.l.b16 %v956
      %v1065 = vpack.c.b16 %v1012, %v1011
      %v1066 = vpack.c.b16 %v1014, %v1013
      %v1067 = vpack.c.b16 %v1016, %v1015
      %v1068 = vpack.c.b16 %v1018, %v1017
      %v1069 = vpack.c.b16 %v1020, %v1019
      %v1070 = vpack.c.b16 %v1022, %v1021
      %v1071 = vpack.c.b16 %v1024, %v1023
      %v1072 = vpack.c.b16 %v1026, %v1025
      %v1073 = vpack.c.b16 %v1028, %v1027
      %v1074 = vpack.c.b16 %v1030, %v1029
      %v1075 = vpack.c.b16 %v1032, %v1031
      %v1076 = vpack.c.b16 %v1034, %v1033
      %v1077 = vpack.c.b16 %v1036, %v1035
      %v1078 = vpack.c.b16 %v1038, %v1037
      %v1079 = vpack.c.b16 %v1040, %v1039
      %v1080 = vpack.c.b16 %v1042, %v1041
      %v1081 = vpack.c.b16 %v1044, %v1043
      %v1082 = vpack.c.b16 %v1046, %v1045
      %v1083 = vpack.c.b16 %v1048, %v1047
      %v1084 = vpack.c.b16 %v1050, %v1049
      %v1085 = vpack.c.b16 %v1052, %v1051
      %v1086 = vpack.c.b16 %v1054, %v1053
      %v1087 = vpack.c.b16 %v1056, %v1055
      %v1088 = vpack.c.b16 %v1058, %v1057
      %v1089 = vpack.c.b16 %v1060, %v1059
      %v1090 = vpack.c.b16 %v1062, %v1061
      %v1091 = vpack.c.b16 %v1064, %v1063
      %v1120 = vsel %vm177, %v890, 0
      %v1123 = vsel %vm177, %v894, 0
      %v1126 = vsel %vm177, %v898, 0
      %v1129 = vsel %vm177, %v902, 0
      %1131 = vmatprep.subr.bf16.mxu0 0
      %1132 = vmatpush1.bf16.msra.mxu0 %v1065
      %1133 = vmatprep.subr.bf16.mxu0 0
      %1134 = vmatpush1.bf16.msra.mxu0 %v1066
      %1135 = vmatprep.subr.bf16.mxu0 0
      %1136 = vmatpush1.bf16.msra.mxu0 %v1067
      %1137 = vmatprep.subr.bf16.mxu0 0
      %1138 = vmatpush1.bf16.msra.mxu0 %v1068
      %1139 = vmatprep.subr.bf16.mxu0 0
      %1140 = vmatpush1.bf16.msra.mxu0 %v1069
      %1141 = vmatprep.subr.bf16.mxu0 0
      %1142 = vmatpush1.bf16.msra.mxu0 %v1070
      %1143 = vmatprep.subr.bf16.mxu0 0
      %1144 = vmatpush1.bf16.msra.mxu0 %v1071
      %1145 = vmatprep.subr.bf16.mxu0 0
      %1146 = vmatpush1.bf16.msra.mxu0 %v1072
      %1147 = vmatprep.subr.bf16.mxu0 0
      %1148 = vmatpush1.bf16.msra.mxu0 %v1073
      %1149 = vmatprep.subr.bf16.mxu0 0
      %1150 = vmatpush1.bf16.msra.mxu0 %v1074
      %1151 = vmatprep.subr.bf16.mxu0 0
      %1152 = vmatpush1.bf16.msra.mxu0 %v1075
      %1153 = vmatprep.subr.bf16.mxu0 0
      %1154 = vmatpush1.bf16.msra.mxu0 %v1076
      %1155 = vmatprep.subr.bf16.mxu0 0
      %1156 = vmatpush1.bf16.msra.mxu0 %v1077
      %1157 = vmatprep.subr.bf16.mxu0 0
      %1158 = vmatpush1.bf16.msra.mxu0 %v1078
      %1159 = vmatprep.subr.bf16.mxu0 0
      %1160 = vmatpush1.bf16.msra.mxu0 %v1079
      %1161 = vmatprep.subr.bf16.mxu0 0
      %1162 = vmatpush1.bf16.msra.mxu0 %v1080
      %1163 = vmatprep.mubr.bf16.mxu0 %v888
      %1164 = vmatmul.mubr.bf16.gmra.mrb[0].mxu0 %v887
      %v1165 = vpop.f32.mrb[0].mxu0
      %v1166 = vadd.f32 0.0, %v1165
      %v1167 = vpop.f32.mrb[0].mxu0
      %v1168 = vpop.f32.mrb[0].mxu0
      %v1169 = vadd.f32 0.0, %v1168
      %v1170 = vpop.f32.mrb[0].mxu0
      %1171 = vmatprep.mubr.bf16.mxu0 %v892
      %1172 = vmatmul.mubr.bf16.gmra.mrb[0].mxu0 %v891
      %v1173 = vpop.f32.mrb[0].mxu0
      %v1174 = vadd.f32 0.0, %v1173
      %v1175 = vpop.f32.mrb[0].mxu0
      %v1176 = vpop.f32.mrb[0].mxu0
      %v1177 = vadd.f32 0.0, %v1176
      %v1178 = vpop.f32.mrb[0].mxu0
      %1179 = vmatprep.mubr.bf16.mxu0 %v896
      %1180 = vmatmul.mubr.bf16.gmra.mrb[0].mxu0 %v895
      %v1181 = vpop.f32.mrb[0].mxu0
      %v1182 = vadd.f32 0.0, %v1181
      %v1183 = vpop.f32.mrb[0].mxu0
      %v1184 = vpop.f32.mrb[0].mxu0
      %v1185 = vadd.f32 0.0, %v1184
      %v1186 = vpop.f32.mrb[0].mxu0
      %1187 = vmatprep.mubr.bf16.mxu0 %v900
      %1188 = vmatmul.mubr.bf16.gmra.mrb[0].mxu0 %v899
      %v1189 = vpop.f32.mrb[0].mxu0
      %v1190 = vadd.f32 0.0, %v1189
      %v1191 = vpop.f32.mrb[0].mxu0
      %v1192 = vpop.f32.mrb[0].mxu0
      %v1193 = vadd.f32 0.0, %v1192
      %v1194 = vpop.f32.mrb[0].mxu0
      %1195 = vdwg.mxu0
      %1196 = vmatprep.subr.bf16.mxu0 0
      %1197 = vmatpush1.bf16.msra.mxu0 %v1081
      %1198 = vmatprep.subr.bf16.mxu0 0
      %1199 = vmatpush1.bf16.msra.mxu0 %v1082
      %1200 = vmatprep.subr.bf16.mxu0 0
      %1201 = vmatpush1.bf16.msra.mxu0 %v1083
      %1202 = vmatprep.subr.bf16.mxu0 0
      %1203 = vmatpush1.bf16.msra.mxu0 %v1084
      %1204 = vmatprep.subr.bf16.mxu0 0
      %1205 = vmatpush1.bf16.msra.mxu0 %v1085
      %1206 = vmatprep.subr.bf16.mxu0 0
      %1207 = vmatpush1.bf16.msra.mxu0 %v1086
      %1208 = vmatprep.subr.bf16.mxu0 0
      %1209 = vmatpush1.bf16.msra.mxu0 %v1087
      %1210 = vmatprep.subr.bf16.mxu0 0
      %1211 = vmatpush1.bf16.msra.mxu0 %v1088
      %1212 = vmatprep.subr.bf16.mxu0 0
      %1213 = vmatpush1.bf16.msra.mxu0 %v1089
      %1214 = vmatprep.subr.bf16.mxu0 0
      %1215 = vmatpush1.bf16.msra.mxu0 %v1090
      %1216 = vmatprep.subr.bf16.mxu0 0
      %1217 = vmatpush1.bf16.msra.mxu0 %v1091
      %1218 = vmatprep.subr.bf16.mxu0 0
      %1219 = vmatpush1.bf16.msra.mxu0 0
      %1220 = vmatprep.subr.bf16.mxu0 0
      %1221 = vmatpush1.bf16.msra.mxu0 0
      %1222 = vmatprep.subr.bf16.mxu0 0
      %1223 = vmatpush1.bf16.msra.mxu0 0
      %1224 = vmatprep.subr.bf16.mxu0 0
      %1225 = vmatpush1.bf16.msra.mxu0 0
      %1226 = vmatprep.subr.bf16.mxu0 0
      %1227 = vmatpush1.bf16.msra.mxu0 0
      %1228 = vmatprep.mubr.bf16.mxu0 %v1120
      %1229 = vmatmul.mubr.bf16.gmra.mrb[0].mxu0 %v889
      %v1230 = vpop.f32.mrb[0].mxu0
      %v1231 = vadd.f32 %v1166, %v1230
      %v1232 = vpop.f32.mrb[0].mxu0
      %v1233 = vpop.f32.mrb[0].mxu0
      %v1234 = vadd.f32 %v1169, %v1233
      %v1235 = vpop.f32.mrb[0].mxu0
      %1236 = vmatprep.mubr.bf16.mxu0 %v1123
      %1237 = vmatmul.mubr.bf16.gmra.mrb[0].mxu0 %v893
      %v1238 = vpop.f32.mrb[0].mxu0
      %v1239 = vadd.f32 %v1174, %v1238
      %v1240 = vpop.f32.mrb[0].mxu0
      %v1241 = vpop.f32.mrb[0].mxu0
      %v1242 = vadd.f32 %v1177, %v1241
      %v1243 = vpop.f32.mrb[0].mxu0
      %1244 = vmatprep.mubr.bf16.mxu0 %v1126
      %1245 = vmatmul.mubr.bf16.gmra.mrb[0].mxu0 %v897
      %v1246 = vpop.f32.mrb[0].mxu0
      %v1247 = vadd.f32 %v1182, %v1246
      %v1248 = vpop.f32.mrb[0].mxu0
      %v1249 = vpop.f32.mrb[0].mxu0
      %v1250 = vadd.f32 %v1185, %v1249
      %v1251 = vpop.f32.mrb[0].mxu0
      %1252 = vmatprep.mubr.bf16.mxu0 %v1129
      %1253 = vmatmul.mubr.bf16.gmra.mrb[0].mxu0 %v901
      %v1254 = vpop.f32.mrb[0].mxu0
      %v1255 = vadd.f32 %v1190, %v1254
      %v1256 = vpop.f32.mrb[0].mxu0
      %v1257 = vpop.f32.mrb[0].mxu0
      %v1258 = vadd.f32 %v1193, %v1257
      %v1259 = vpop.f32.mrb[0].mxu0
      %1260 = vdwg.mxu0
      %v1261 = vpack.c.bf16 %v1234, %v1231
      %v1262 = vpack.c.bf16 %v1242, %v1239
      %v1263 = vpack.c.bf16 %v1250, %v1247
      %v1264 = vpack.c.bf16 %v1258, %v1255
      %v1269 = vunpack.c.l.b16 %v1261
      %v1270 = vunpack.c.h.b16 %v1261
      %v1271 = vunpack.c.l.b16 %v1262
      %v1272 = vunpack.c.h.b16 %v1262
      %v1273 = vunpack.c.l.b16 %v1263
      %v1274 = vunpack.c.h.b16 %v1263
      %v1275 = vunpack.c.l.b16 %v1264
      %v1276 = vunpack.c.h.b16 %v1264
      %v1277 = vpack.c.b16 %v1269, %v1269
      %v1278 = vpack.c.b16 %v1270, %v1270
      %v1279 = vpack.c.b16 %v1271, %v1271
      %v1280 = vpack.c.b16 %v1272, %v1272
      %v1281 = vpack.c.b16 %v1273, %v1273
      %v1282 = vpack.c.b16 %v1274, %v1274
      %v1283 = vpack.c.b16 %v1275, %v1275
      %v1284 = vpack.c.b16 %v1276, %v1276
      %vm1293 = vcmask 388096
      %1294 = vst.msk [vmem:[%s143] sm:$0xf] %vm1293, %v1277
      %1295 = vst.msk [vmem:[%s143 + $0x4] sm:$0xf] %vm1293, %v1278
      %1296 = vst.msk [vmem:[%s143 + $0x8] sm:$0xf] %vm1293, %v1279
      %1297 = vst.msk [vmem:[%s143 + $0xc] sm:$0xf] %vm1293, %v1280
      %1298 = vst.msk [vmem:[%s143 + $0x10] sm:$0xf] %vm1293, %v1281
      %1299 = vst.msk [vmem:[%s143 + $0x14] sm:$0xf] %vm1293, %v1282
      %1300 = vst.msk [vmem:[%s143 + $0x18] sm:$0xf] %vm1293, %v1283
      %1301 = vst.msk [vmem:[%s143 + $0x1c] sm:$0xf] %vm1293, %v1284
      %p1302 = scmp.lt.s32.totalorder %s13, 1
      %s1303 = scalar_select %p1302, %s13, 1
      %s1304 = smul.addr %s1303, 8
      %s1305 = smul.addr %s1304, 4
      %s1306 = scalar_lea.vmem %s2, %s1305
      // Predicated region
      $region29: #{a_call__.4} parent=27 // pred_check
        %p1307 = pneg %p78
      $region30: #{a_call__.4} parent=27 // pred_check_branch
        %1309 = sbr.rel (%p1307) target = $region32
      $region31: #{a_call__.4} parent=27 // pred_region
        _
      $region32: #{a_call__.4} parent=27 // pred_fallthru
        _
    $region28: #{a_call__.4} parent=5 // pred_fallthru
      _
    %p1310 = scmp.le.s32.totalorder 2, %s8
    // Predicated region
    $region33: #{a_call__.4} parent=5 // pred_check
      %p1311 = pneg %p1310
    $region34: #{a_call__.4} parent=5 // pred_check_branch
      %1313 = sbr.rel (%p1311) target = $region36
    $region35: #{a_call__.4} parent=5 // pred_region
      %s1314 = ssub.s32 %s8, 2
      // Predicated region
      $region37: #{a_call__.4} parent=35 // pred_check
        %p1315 = pneg %p84
      $region38: #{a_call__.4} parent=35 // pred_check_branch
        %1317 = sbr.rel (%p1315) target = $region40
      $region39: #{a_call__.4} parent=35 // pred_region
        %p1318 = scmp.lt.s32.totalorder %s14, 1
        %s1319 = scalar_select %p1318, %s14, 1
        %s1320 = smul.addr %s1319, 8
        %s1321 = smul.addr %s1320, 4
        %s1322 = scalar_lea.vmem %s2, %s1321
      $region40: #{a_call__.4} parent=35 // pred_fallthru
        _
    $region36: #{a_call__.4} parent=5 // pred_fallthru
      _
  $region6: #{a_call__.4} parent=0 // loop_footer
    %s12 = sadd.s32 1, %s8
  $region7: #{a_call__.4} parent=0 // loop_footer_branch
    %7 = sbr.rel target = $region3
  $region8: #{a_call__.4} parent=0 // loop_exit
    _

// kernel: a_call__.5
$region0: #{a_call__.5}
  #allocation0 [shape = 'u32[]', space=smem, size = 0x4, offset = 0x4, fixed_abs, tag = 'smem constant byte address 0x4 - core index']
  #allocation1 [shape = 'u32[144,128]{1,0:T(1,128)}', space=vmem, size = 0x12000, scoped, tag = 'internal scratch']
  #allocation2 [shape = 'bf16[16,432]{1,0:T(16,128)(2,1)}', space=vmem, size = 0x4000, scoped, tag = 'scratch operand']
  %s0 = inlined_call_operand.vmem [shape: bf16[2,4,5,5,48], index: 0, kind: input, shape index: {}]
  %s1 = inlined_call_operand.vmem [shape: bf16[432,48], index: 1, kind: input, shape index: {}]
  %s2 = inlined_call_operand.vmem [shape: bf16[2,16,48], index: 2, kind: output, shape index: {}]
  %s3 = sld [smem:[#allocation0]]
  $region41: #{a_call__.5} parent=0
    _
  %s5 = ssub.s32 1, %s3
  %s6 = scalar_select 0, %s5, %s3
  loop: start=0, step=1, limit=4
  $region2: #{a_call__.5} parent=0 // loop_pre_header
    _
  $region3: #{a_call__.5} parent=0 // loop_header
    %s8 = sphi 0, %s12
    %p9 = scmp.ge.s32.totalorder %s8, 4
    %s18 = sphi 0, %s20
    %s21 = sphi 0, %s18
    %s22 = sphi 0, %s21
    %s38 = sphi 0, %s22
    %s42 = sphi 0, %s42
    %s44 = sphi 0, %s42
    %s45 = sphi 0, %s44
    %s59 = sphi 0, %s45
    %s65 = sphi 0, %s67
    %s68 = sphi 0, %s65
    %s69 = sphi 0, %s68
    %s85 = sphi 0, %s69
  $region4: #{a_call__.5} parent=0 // loop_header_branch
    %11 = sbr.rel (%p9) target = $region8
  $region5: #{a_call__.5} parent=0 // loop_body
    %s13 = ssub.s32 %s8, 1
    %s14 = ssub.s32 %s8, 2
    %s15 = sadd.s32 %s8, 1
    %s16 = ssub.s32 %s8, %s15
    %p17 = scmp.eq.s32.totalorder %s16, 0
    %s19 = sadd.s32 %s18, 1
    %s20 = scalar_select %p17, %s18, %s19
    %p23 = pneg %p17
    %p24 = scmp.eq.s32.totalorder %s8, 1
    %p25 = por %p23, %p24
    %p26 = scmp.ne.s32.totalorder %s18, %s21
    %p27 = scmp.eq.s32.totalorder %s8, 0
    %p28 = por %p26, %p27
    %p29 = scmp.ne.s32.totalorder %s18, %s21
    %p30 = scmp.eq.s32.totalorder %s13, 1
    %p31 = por %p29, %p30
    %p32 = scmp.ne.s32.totalorder %s21, %s22
    %p33 = scmp.eq.s32.totalorder %s13, 0
    %p34 = por %p32, %p33
    %p35 = scmp.ne.s32.totalorder %s21, %s22
    %p36 = scmp.eq.s32.totalorder %s14, 1
    %p37 = por %p35, %p36
    %p39 = scmp.ne.s32.totalorder %s22, %s38
    %p40 = scmp.eq.s32.totalorder %s14, 0
    %p41 = por %p39, %p40
    %s43 = sadd.s32 %s42, 1
    %p46 = scmp.eq.s32.totalorder %s8, 1
    %p47 = scmp.ne.s32.totalorder %s42, %s44
    %p48 = scmp.eq.s32.totalorder %s8, 0
    %p49 = por %p47, %p48
    %p50 = scmp.ne.s32.totalorder %s42, %s44
    %p51 = scmp.eq.s32.totalorder %s13, 1
    %p52 = por %p50, %p51
    %p53 = scmp.ne.s32.totalorder %s44, %s45
    %p54 = scmp.eq.s32.totalorder %s13, 0
    %p55 = por %p53, %p54
    %p56 = scmp.ne.s32.totalorder %s44, %s45
    %p57 = scmp.eq.s32.totalorder %s14, 1
    %p58 = por %p56, %p57
    %p60 = scmp.ne.s32.totalorder %s45, %s59
    %p61 = scmp.eq.s32.totalorder %s14, 0
    %p62 = por %p60, %p61
    %s63 = ssub.s32 %s8, %s15
    %p64 = scmp.eq.s32.totalorder %s63, 0
    %s66 = sadd.s32 %s65, 1
    %s67 = scalar_select %p64, %s65, %s66
    %p70 = pneg %p64
    %p71 = scmp.eq.s32.totalorder %s8, 1
    %p72 = por %p70, %p71
    %p73 = scmp.ne.s32.totalorder %s65, %s68
    %p74 = scmp.eq.s32.totalorder %s8, 0
    %p75 = por %p73, %p74
    %p76 = scmp.ne.s32.totalorder %s65, %s68
    %p77 = scmp.eq.s32.totalorder %s13, 1
    %p78 = por %p76, %p77
    %p79 = scmp.ne.s32.totalorder %s68, %s69
    %p80 = scmp.eq.s32.totalorder %s13, 0
    %p81 = por %p79, %p80
    %p82 = scmp.ne.s32.totalorder %s68, %s69
    %p83 = scmp.eq.s32.totalorder %s14, 1
    %p84 = por %p82, %p83
    %p86 = scmp.ne.s32.totalorder %s69, %s85
    %p87 = scmp.eq.s32.totalorder %s14, 0
    %p88 = por %p86, %p87
    %p89 = scmp.le.s32.totalorder 1, %s8
    %p90 = scmp.lt.s32.totalorder %s8, 3
    %p91 = pnand %p89, %p90
    %p92 = pneg %p91
    // Predicated region
    $region9: #{a_call__.5} parent=5 // pred_check
      _
    $region10: #{a_call__.5} parent=5 // pred_check_branch
      %94 = sbr.rel (%p91) target = $region12
    $region11: #{a_call__.5} parent=5 // pred_region
      %s95 = ssub.s32 %s8, 1
      // Predicated region
      $region13: #{a_call__.5} parent=11 // pred_check
        %p96 = pneg %p55
      $region14: #{a_call__.5} parent=11 // pred_check_branch
        %98 = sbr.rel (%p96) target = $region16
      $region15: #{a_call__.5} parent=11 // pred_region
        _
      $region16: #{a_call__.5} parent=11 // pred_fallthru
        _
    $region12: #{a_call__.5} parent=5 // pred_fallthru
      _
    %p99 = scmp.lt.s32.totalorder %s8, 2
    // Predicated region
    $region17: #{a_call__.5} parent=5 // pred_check
      %p100 = pneg %p99
    $region18: #{a_call__.5} parent=5 // pred_check_branch
      %102 = sbr.rel (%p100) target = $region20
    $region19: #{a_call__.5} parent=5 // pred_region
      // Predicated region
      $region21: #{a_call__.5} parent=19 // pred_check
        %p103 = pneg %p28
      $region22: #{a_call__.5} parent=19 // pred_check_branch
        %105 = sbr.rel (%p103) target = $region24
      $region23: #{a_call__.5} parent=19 // pred_region
        %p106 = scmp.lt.s32.totalorder %s8, 1
        %s107 = scalar_select %p106, %s8, 1
        %s108 = smul.addr %s107, 20
        %s109 = smul.addr %s108, 4
        %s110 = scalar_lea.vmem %s0, %s109
      $region24: #{a_call__.5} parent=19 // pred_fallthru
        _
    $region20: #{a_call__.5} parent=5 // pred_fallthru
      _
    %p111 = scmp.le.s32.totalorder 1, %s8
    %p112 = scmp.lt.s32.totalorder %s8, 3
    %p113 = pnand %p111, %p112
    %p114 = pneg %p113
    // Predicated region
    $region25: #{a_call__.5} parent=5 // pred_check
      _
    $region26: #{a_call__.5} parent=5 // pred_check_branch
      %116 = sbr.rel (%p113) target = $region28
    $region27: #{a_call__.5} parent=5 // pred_region
      %s117 = ssub.s32 %s8, 1
      %p118 = scmp.lt.s32.totalorder %s13, 1
      %s119 = scalar_select %p118, %s13, 1
      %s120 = smul.addr %s119, 20
      %s121 = smul.addr %s120, 4
      %s122 = scalar_lea.vmem %s0, %s121
      %p123 = pneg %p34
      %p124 = pneg %p31
      %p125 = pneg %p55
      %p126 = pneg %p52
      %p127 = pneg %p81
      %p128 = pneg %p78
      %p129 = scmp.lt.s32.totalorder %s13, 1
      %s130 = scalar_select %p129, %s13, 1
      %s131 = smul.addr %s130, 2
      %s132 = smul.addr %s131, 4
      %s133 = scalar_lea.vmem %s2, %s132
      %p134 = scmp.lt.s32.totalorder %s13, 1
      %s135 = scalar_select %p134, %s13, 1
      %s136 = smul.addr %s135, 20
      %s137 = smul.addr %s136, 4
      %s138 = scalar_lea.vmem %s0, %s137
      %p139 = scmp.lt.s32.totalorder %s13, 1
      %s140 = scalar_select %p139, %s13, 1
      %s141 = smul.addr %s140, 2
      %s142 = smul.addr %s141, 4
      %s143 = scalar_lea.vmem %s2, %s142
      %v145 = vld [vmem:[%s138] sm:$0x3]
      %v146 = vld [vmem:[%s138 + $0x4] sm:$0x3]
      %v147 = vld [vmem:[%s138 + $0x8] sm:$0x3]
      %v148 = vld [vmem:[%s138 + $0xc] sm:$0x3]
      %vm149 = vcmask 386048
      %150 = vst.msk [vmem:[#allocation2] sm:$0x3] %vm149, %v145
      %v152 = vunpack.c.l.b16 %v146
      %v153 = vpack.c.b16 %v152, %v152
      %v154 = vrot.slane %v153, 6
      %vm156 = vcmask 388098
      %157 = vst.msk [vmem:[#allocation2] sm:$0xc] %vm156, %v154
      %v159 = vunpack.c.l.b16 %v147
      %v160 = vpack.c.b16 %v159, %v159
      %vm162 = vcmask 390148
      %163 = vst.msk [vmem:[#allocation2] sm:$0x30] %vm162, %v160
      %v165 = vunpack.c.l.b16 %v148
      %v166 = vpack.c.b16 %v165, %v165
      %v167 = vrot.slane %v166, 2
      %vm169 = vcmask 392198
      %170 = vst.msk [vmem:[#allocation2] sm:$0xc0] %vm169, %v167
      %s171 = scalar_lea.vmem %s138, 20
      %v172 = vld [vmem:[%s171] sm:$0x3]
      %v173 = vld [vmem:[%s171 + $0x4] sm:$0x3]
      %v174 = vld [vmem:[%s171 + $0x8] sm:$0x3]
      %v175 = vld [vmem:[%s171 + $0xc] sm:$0x3]
      %v177 = vunpack.c.l.b16 %v172
      %v178 = vpack.c.b16 %v177, %v177
      %179 = vrot.lane.b32.xlu0 %v178, 48
      %v180 = vpop.permute.xlu0 %179
      %vm182 = vcmask 779648
      %183 = vst.msk [vmem:[#allocation2] sm:$0x3] %vm182, %v180
      %v185 = vunpack.c.l.b16 %v173
      %v186 = vpack.c.b16 %v185, %v185
      %v187 = vrot.slane %v186, 6
      %188 = vrot.lane.b32.xlu0 %v187, 48
      %v189 = vpop.permute.xlu0 %188
      %vm191 = vcmask 781698
      %192 = vst.msk [vmem:[#allocation2] sm:$0xc] %vm191, %v189
      %v194 = vunpack.c.l.b16 %v174
      %v195 = vpack.c.b16 %v194, %v194
      %196 = vrot.lane.b32.xlu0 %v195, 48
      %v197 = vpop.permute.xlu0 %196
      %vm199 = vcmask 783748
      %200 = vst.msk [vmem:[#allocation2] sm:$0x30] %vm199, %v197
      %v202 = vunpack.c.l.b16 %v175
      %v203 = vpack.c.b16 %v202, %v202
      %v204 = vrot.slane %v203, 2
      %205 = vrot.lane.b32.xlu0 %v204, 48
      %v206 = vpop.permute.xlu0 %205
      %vm208 = vcmask 785798
      %209 = vst.msk [vmem:[#allocation2] sm:$0xc0] %vm208, %v206
      %v210 = vld [vmem:[%s138] sm:$0x7]
      %v211 = vld [vmem:[%s138 + $0x4] sm:$0x7]
      %v212 = vld [vmem:[%s138 + $0x8] sm:$0x7]
      %v213 = vld [vmem:[%s138 + $0xc] sm:$0x7]
      %v215 = vunpack.c.l.b16 %v210
      %v216 = vpack.c.b16 %v215, %v215
      %v218 = vshrl.u32 %v216, 16
      %v220 = vshll.u32 %v216, 16
      %v222 = vrot.slane %v220, 1
      %v223 = vor.u32 %v218, %v222
      %224 = vrot.lane.b32.xlu0 %v223, 96
      %v225 = vpop.permute.xlu0 %224
      %vm227 = vcmask 1042176
      %228 = vst.msk [vmem:[#allocation2] sm:$0x3] %vm227, %v225
      %vm229 = vcmask 123904
      %230 = vst.msk [vmem:[#allocation2 + $0x8] sm:$0x3] %vm229, %v225
      %v232 = vunpack.c.l.b16 %v211
      %v233 = vpack.c.b16 %v232, %v232
      %v235 = vshrl.u32 %v233, 16
      %v237 = vrot.slane %v235, 6
      %v238 = vshll.u32 %v233, 16
      %v240 = vrot.slane %v238, 7
      %v241 = vor.u32 %v237, %v240
      %242 = vrot.lane.b32.xlu0 %v241, 96
      %v243 = vpop.permute.xlu0 %242
      %vm245 = vcmask 1044226
      %246 = vst.msk [vmem:[#allocation2] sm:$0xc] %vm245, %v243
      %vm247 = vcmask 125954
      %248 = vst.msk [vmem:[#allocation2 + $0x8] sm:$0xc] %vm247, %v243
      %v250 = vunpack.c.l.b16 %v212
      %v251 = vpack.c.b16 %v250, %v250
      %v253 = vshrl.u32 %v251, 16
      %v255 = vrot.slane %v253, 4
      %v256 = vshll.u32 %v251, 16
      %v258 = vrot.slane %v256, 5
      %v259 = vor.u32 %v255, %v258
      %260 = vrot.lane.b32.xlu0 %v259, 96
      %v261 = vpop.permute.xlu0 %260
      %vm263 = vcmask 1046276
      %264 = vst.msk [vmem:[#allocation2] sm:$0x30] %vm263, %v261
      %vm265 = vcmask 128004
      %266 = vst.msk [vmem:[#allocation2 + $0x8] sm:$0x30] %vm265, %v261
      %v268 = vunpack.c.l.b16 %v213
      %v269 = vpack.c.b16 %v268, %v268
      %v271 = vshrl.u32 %v269, 16
      %v273 = vrot.slane %v271, 2
      %v274 = vshll.u32 %v269, 16
      %v276 = vrot.slane %v274, 3
      %v277 = vor.u32 %v273, %v276
      %278 = vrot.lane.b32.xlu0 %v277, 96
      %v279 = vpop.permute.xlu0 %278
      %vm281 = vcmask 1048326
      %282 = vst.msk [vmem:[#allocation2] sm:$0xc0] %vm281, %v279
      %vm283 = vcmask 130054
      %284 = vst.msk [vmem:[#allocation2 + $0x8] sm:$0xc0] %vm283, %v279
      %s285 = scalar_lea.vmem %s138, 40
      %v286 = vld [vmem:[%s285] sm:$0x3]
      %v287 = vld [vmem:[%s285 + $0x4] sm:$0x3]
      %v288 = vld [vmem:[%s285 + $0x8] sm:$0x3]
      %v289 = vld [vmem:[%s285 + $0xc] sm:$0x3]
      %v291 = vunpack.c.l.b16 %v286
      %v292 = vpack.c.b16 %v291, %v291
      %293 = vrot.lane.b32.xlu0 %v292, 16
      %v294 = vpop.permute.xlu0 %293
      %vm296 = vcmask 517248
      %297 = vst.msk [vmem:[#allocation2 + $0x8] sm:$0x3] %vm296, %v294
      %v299 = vunpack.c.l.b16 %v287
      %v300 = vpack.c.b16 %v299, %v299
      %v301 = vrot.slane %v300, 6
      %302 = vrot.lane.b32.xlu0 %v301, 16
      %v303 = vpop.permute.xlu0 %302
      %vm305 = vcmask 519298
      %306 = vst.msk [vmem:[#allocation2 + $0x8] sm:$0xc] %vm305, %v303
      %v308 = vunpack.c.l.b16 %v288
      %v309 = vpack.c.b16 %v308, %v308
      %310 = vrot.lane.b32.xlu0 %v309, 16
      %v311 = vpop.permute.xlu0 %310
      %vm313 = vcmask 521348
      %314 = vst.msk [vmem:[#allocation2 + $0x8] sm:$0x30] %vm313, %v311
      %v316 = vunpack.c.l.b16 %v289
      %v317 = vpack.c.b16 %v316, %v316
      %v318 = vrot.slane %v317, 2
      %319 = vrot.lane.b32.xlu0 %v318, 16
      %v320 = vpop.permute.xlu0 %319
      %vm322 = vcmask 523398
      %323 = vst.msk [vmem:[#allocation2 + $0x8] sm:$0xc0] %vm322, %v320
      %s324 = scalar_lea.vmem %s138, 60
      %v325 = vld [vmem:[%s324] sm:$0x3]
      %v326 = vld [vmem:[%s324 + $0x4] sm:$0x3]
      %v327 = vld [vmem:[%s324 + $0x8] sm:$0x3]
      %v328 = vld [vmem:[%s324 + $0xc] sm:$0x3]
      %v330 = vunpack.c.l.b16 %v325
      %v331 = vpack.c.b16 %v330, %v330
      %332 = vrot.lane.b32.xlu0 %v331, 64
      %v333 = vpop.permute.xlu0 %332
      %vm335 = vcmask 910848
      %336 = vst.msk [vmem:[#allocation2 + $0x8] sm:$0x3] %vm335, %v333
      %v338 = vunpack.c.l.b16 %v326
      %v339 = vpack.c.b16 %v338, %v338
      %v340 = vrot.slane %v339, 6
      %341 = vrot.lane.b32.xlu0 %v340, 64
      %v342 = vpop.permute.xlu0 %341
      %vm344 = vcmask 912898
      %345 = vst.msk [vmem:[#allocation2 + $0x8] sm:$0xc] %vm344, %v342
      %v347 = vunpack.c.l.b16 %v327
      %v348 = vpack.c.b16 %v347, %v347
      %349 = vrot.lane.b32.xlu0 %v348, 64
      %v350 = vpop.permute.xlu0 %349
      %vm352 = vcmask 914948
      %353 = vst.msk [vmem:[#allocation2 + $0x8] sm:$0x30] %vm352, %v350
      %v355 = vunpack.c.l.b16 %v328
      %v356 = vpack.c.b16 %v355, %v355
      %v357 = vrot.slane %v356, 2
      %358 = vrot.lane.b32.xlu0 %v357, 64
      %v359 = vpop.permute.xlu0 %358
      %vm361 = vcmask 916998
      %362 = vst.msk [vmem:[#allocation2 + $0x8] sm:$0xc0] %vm361, %v359
      %v363 = vld [vmem:[%s285] sm:$0x7]
      %v364 = vld [vmem:[%s285 + $0x4] sm:$0x7]
      %v365 = vld [vmem:[%s285 + $0x8] sm:$0x7]
      %v366 = vld [vmem:[%s285 + $0xc] sm:$0x7]
      %v368 = vunpack.c.l.b16 %v363
      %v369 = vpack.c.b16 %v368, %v368
      %v371 = vshrl.u32 %v369, 16
      %v373 = vshll.u32 %v369, 16
      %v375 = vrot.slane %v373, 1
      %v376 = vor.u32 %v371, %v375
      %377 = vrot.lane.b32.xlu0 %v376, 112
      %v378 = vpop.permute.xlu0 %377
      %vm380 = vcmask 1042304
      %381 = vst.msk [vmem:[#allocation2 + $0x8] sm:$0x3] %vm380, %v378
      %vm382 = vcmask 254976
      %383 = vst.msk [vmem:[#allocation2 + $0x10] sm:$0x3] %vm382, %v378
      %v385 = vunpack.c.l.b16 %v364
      %v386 = vpack.c.b16 %v385, %v385
      %v388 = vshrl.u32 %v386, 16
      %v390 = vrot.slane %v388, 6
      %v391 = vshll.u32 %v386, 16
      %v393 = vrot.slane %v391, 7
      %v394 = vor.u32 %v390, %v393
      %395 = vrot.lane.b32.xlu0 %v394, 112
      %v396 = vpop.permute.xlu0 %395
      %vm398 = vcmask 1044354
      %399 = vst.msk [vmem:[#allocation2 + $0x8] sm:$0xc] %vm398, %v396
      %vm400 = vcmask 257026
      %401 = vst.msk [vmem:[#allocation2 + $0x10] sm:$0xc] %vm400, %v396
      %v403 = vunpack.c.l.b16 %v365
      %v404 = vpack.c.b16 %v403, %v403
      %v406 = vshrl.u32 %v404, 16
      %v408 = vrot.slane %v406, 4
      %v409 = vshll.u32 %v404, 16
      %v411 = vrot.slane %v409, 5
      %v412 = vor.u32 %v408, %v411
      %413 = vrot.lane.b32.xlu0 %v412, 112
      %v414 = vpop.permute.xlu0 %413
      %vm416 = vcmask 1046404
      %417 = vst.msk [vmem:[#allocation2 + $0x8] sm:$0x30] %vm416, %v414
      %vm418 = vcmask 259076
      %419 = vst.msk [vmem:[#allocation2 + $0x10] sm:$0x30] %vm418, %v414
      %v421 = vunpack.c.l.b16 %v366
      %v422 = vpack.c.b16 %v421, %v421
      %v424 = vshrl.u32 %v422, 16
      %v426 = vrot.slane %v424, 2
      %v427 = vshll.u32 %v422, 16
      %v429 = vrot.slane %v427, 3
      %v430 = vor.u32 %v426, %v429
      %431 = vrot.lane.b32.xlu0 %v430, 112
      %v432 = vpop.permute.xlu0 %431
      %vm434 = vcmask 1048454
      %435 = vst.msk [vmem:[#allocation2 + $0x8] sm:$0xc0] %vm434, %v432
      %vm436 = vcmask 261126
      %437 = vst.msk [vmem:[#allocation2 + $0x10] sm:$0xc0] %vm436, %v432
      %s438 = scalar_lea.vmem %s138, 4
      %v439 = vld [vmem:[%s438] sm:$0x3]
      %v440 = vld [vmem:[%s438 + $0x4] sm:$0x3]
      %v441 = vld [vmem:[%s438 + $0x8] sm:$0x3]
      %v442 = vld [vmem:[%s438 + $0xc] sm:$0x3]
      %v444 = vunpack.c.l.b16 %v439
      %v445 = vpack.c.b16 %v444, %v444
      %446 = vrot.lane.b32.xlu0 %v445, 32
      %v447 = vpop.permute.xlu0 %446
      %vm449 = vcmask 648448
      %450 = vst.msk [vmem:[#allocation2 + $0x10] sm:$0x3] %vm449, %v447
      %v452 = vunpack.c.l.b16 %v440
      %v453 = vpack.c.b16 %v452, %v452
      %v454 = vrot.slane %v453, 6
      %455 = vrot.lane.b32.xlu0 %v454, 32
      %v456 = vpop.permute.xlu0 %455
      %vm458 = vcmask 650498
      %459 = vst.msk [vmem:[#allocation2 + $0x10] sm:$0xc] %vm458, %v456
      %v461 = vunpack.c.l.b16 %v441
      %v462 = vpack.c.b16 %v461, %v461
      %463 = vrot.lane.b32.xlu0 %v462, 32
      %v464 = vpop.permute.xlu0 %463
      %vm466 = vcmask 652548
      %467 = vst.msk [vmem:[#allocation2 + $0x10] sm:$0x30] %vm466, %v464
      %v469 = vunpack.c.l.b16 %v442
      %v470 = vpack.c.b16 %v469, %v469
      %v471 = vrot.slane %v470, 2
      %472 = vrot.lane.b32.xlu0 %v471, 32
      %v473 = vpop.permute.xlu0 %472
      %vm475 = vcmask 654598
      %476 = vst.msk [vmem:[#allocation2 + $0x10] sm:$0xc0] %vm475, %v473
      %s477 = scalar_lea.vmem %s138, 24
      %v478 = vld [vmem:[%s477] sm:$0x3]
      %v479 = vld [vmem:[%s477 + $0x4] sm:$0x3]
      %v480 = vld [vmem:[%s477 + $0x8] sm:$0x3]
      %v481 = vld [vmem:[%s477 + $0xc] sm:$0x3]
      %v483 = vunpack.c.l.b16 %v478
      %v484 = vpack.c.b16 %v483, %v483
      %485 = vrot.lane.b32.xlu0 %v484, 80
      %v486 = vpop.permute.xlu0 %485
      %vm488 = vcmask 1042048
      %489 = vst.msk [vmem:[#allocation2 + $0x10] sm:$0x3] %vm488, %v486
      %v491 = vunpack.c.l.b16 %v479
      %v492 = vpack.c.b16 %v491, %v491
      %v493 = vrot.slane %v492, 6
      %494 = vrot.lane.b32.xlu0 %v493, 80
      %v495 = vpop.permute.xlu0 %494
      %vm497 = vcmask 1044098
      %498 = vst.msk [vmem:[#allocation2 + $0x10] sm:$0xc] %vm497, %v495
      %v500 = vunpack.c.l.b16 %v480
      %v501 = vpack.c.b16 %v500, %v500
      %502 = vrot.lane.b32.xlu0 %v501, 80
      %v503 = vpop.permute.xlu0 %502
      %vm505 = vcmask 1046148
      %506 = vst.msk [vmem:[#allocation2 + $0x10] sm:$0x30] %vm505, %v503
      %v508 = vunpack.c.l.b16 %v481
      %v509 = vpack.c.b16 %v508, %v508
      %v510 = vrot.slane %v509, 2
      %511 = vrot.lane.b32.xlu0 %v510, 80
      %v512 = vpop.permute.xlu0 %511
      %vm514 = vcmask 1048198
      %515 = vst.msk [vmem:[#allocation2 + $0x10] sm:$0xc0] %vm514, %v512
      %v516 = vld [vmem:[%s438] sm:$0x7]
      %v517 = vld [vmem:[%s438 + $0x4] sm:$0x7]
      %v518 = vld [vmem:[%s438 + $0x8] sm:$0x7]
      %v519 = vld [vmem:[%s438 + $0xc] sm:$0x7]
      %v521 = vunpack.c.l.b16 %v516
      %v522 = vpack.c.b16 %v521, %v521
      %v524 = vshrl.u32 %v522, 16
      %v526 = vshll.u32 %v522, 16
      %v528 = vrot.slane %v526, 1
      %v529 = vor.u32 %v524, %v528
      %531 = vst.msk [vmem:[#allocation2 + $0x18] sm:$0x3] %vm149, %v529
      %v533 = vunpack.c.l.b16 %v517
      %v534 = vpack.c.b16 %v533, %v533
      %v536 = vshrl.u32 %v534, 16
      %v538 = vrot.slane %v536, 6
      %v539 = vshll.u32 %v534, 16
      %v541 = vrot.slane %v539, 7
      %v542 = vor.u32 %v538, %v541
      %544 = vst.msk [vmem:[#allocation2 + $0x18] sm:$0xc] %vm156, %v542
      %v546 = vunpack.c.l.b16 %v518
      %v547 = vpack.c.b16 %v546, %v546
      %v549 = vshrl.u32 %v547, 16
      %v551 = vrot.slane %v549, 4
      %v552 = vshll.u32 %v547, 16
      %v554 = vrot.slane %v552, 5
      %v555 = vor.u32 %v551, %v554
      %557 = vst.msk [vmem:[#allocation2 + $0x18] sm:$0x30] %vm162, %v555
      %v559 = vunpack.c.l.b16 %v519
      %v560 = vpack.c.b16 %v559, %v559
      %v562 = vshrl.u32 %v560, 16
      %v564 = vrot.slane %v562, 2
      %v565 = vshll.u32 %v560, 16
      %v567 = vrot.slane %v565, 3
      %v568 = vor.u32 %v564, %v567
      %570 = vst.msk [vmem:[#allocation2 + $0x18] sm:$0xc0] %vm169, %v568
      %v571 = vld [vmem:[#allocation2] sm:$0xff]
      %v572 = vld [vmem:[#allocation2 + $0x8] sm:$0xff]
      %v573 = vld [vmem:[#allocation2 + $0x10] sm:$0xff]
      %v574 = vld [vmem:[#allocation2 + $0x18] sm:$0xff]
      %v575 = vld [vmem:[%s1] sm:$0xf]
      %v576 = vld [vmem:[%s1 + $0x4] sm:$0xf]
      %v577 = vld [vmem:[%s1 + $0x8] sm:$0xf]
      %v578 = vld [vmem:[%s1 + $0xc] sm:$0xf]
      %v579 = vld [vmem:[%s1 + $0x10] sm:$0xf]
      %v580 = vld [vmem:[%s1 + $0x14] sm:$0xf]
      %v581 = vld [vmem:[%s1 + $0x18] sm:$0xf]
      %v582 = vld [vmem:[%s1 + $0x1c] sm:$0xf]
      %v583 = vld [vmem:[%s1 + $0x20] sm:$0xf]
      %v584 = vld [vmem:[%s1 + $0x24] sm:$0xf]
      %v585 = vld [vmem:[%s1 + $0x28] sm:$0xf]
      %v586 = vld [vmem:[%s1 + $0x2c] sm:$0xf]
      %v587 = vld [vmem:[%s1 + $0x30] sm:$0xf]
      %v588 = vld [vmem:[%s1 + $0x34] sm:$0xf]
      %v589 = vld [vmem:[%s1 + $0x38] sm:$0xf]
      %v590 = vld [vmem:[%s1 + $0x3c] sm:$0xf]
      %v591 = vld [vmem:[%s1 + $0x40] sm:$0xf]
      %v592 = vld [vmem:[%s1 + $0x44] sm:$0xf]
      %v593 = vld [vmem:[%s1 + $0x48] sm:$0xf]
      %v594 = vld [vmem:[%s1 + $0x4c] sm:$0xf]
      %v595 = vld [vmem:[%s1 + $0x50] sm:$0xf]
      %v596 = vld [vmem:[%s1 + $0x54] sm:$0xf]
      %v597 = vld [vmem:[%s1 + $0x58] sm:$0xf]
      %v598 = vld [vmem:[%s1 + $0x5c] sm:$0xf]
      %v599 = vld [vmem:[%s1 + $0x60] sm:$0xf]
      %v600 = vld [vmem:[%s1 + $0x64] sm:$0xf]
      %v601 = vld [vmem:[%s1 + $0x68] sm:$0xf]
      %v602 = vld [vmem:[%s1 + $0x6c] sm:$0xf]
      %v603 = vld [vmem:[%s1 + $0x70] sm:$0xf]
      %v604 = vld [vmem:[%s1 + $0x74] sm:$0xf]
      %v605 = vld [vmem:[%s1 + $0x78] sm:$0xf]
      %v606 = vld [vmem:[%s1 + $0x7c] sm:$0xf]
      %v607 = vld [vmem:[%s1 + $0x80] sm:$0xf]
      %v608 = vld [vmem:[%s1 + $0x84] sm:$0xf]
      %v609 = vld [vmem:[%s1 + $0x88] sm:$0xf]
      %v610 = vld [vmem:[%s1 + $0x8c] sm:$0xf]
      %v611 = vld [vmem:[%s1 + $0x90] sm:$0xf]
      %v612 = vld [vmem:[%s1 + $0x94] sm:$0xf]
      %v613 = vld [vmem:[%s1 + $0x98] sm:$0xf]
      %v614 = vld [vmem:[%s1 + $0x9c] sm:$0xf]
      %v615 = vld [vmem:[%s1 + $0xa0] sm:$0xf]
      %v616 = vld [vmem:[%s1 + $0xa4] sm:$0xf]
      %v617 = vld [vmem:[%s1 + $0xa8] sm:$0xf]
      %v618 = vld [vmem:[%s1 + $0xac] sm:$0xf]
      %v619 = vld [vmem:[%s1 + $0xb0] sm:$0xf]
      %v620 = vld [vmem:[%s1 + $0xb4] sm:$0xf]
      %v621 = vld [vmem:[%s1 + $0xb8] sm:$0xf]
      %v622 = vld [vmem:[%s1 + $0xbc] sm:$0xf]
      %v623 = vld [vmem:[%s1 + $0xc0] sm:$0xf]
      %v624 = vld [vmem:[%s1 + $0xc4] sm:$0xf]
      %v625 = vld [vmem:[%s1 + $0xc8] sm:$0xf]
      %v626 = vld [vmem:[%s1 + $0xcc] sm:$0xf]
      %v627 = vld [vmem:[%s1 + $0xd0] sm:$0xf]
      %v628 = vld [vmem:[%s1 + $0xd4] sm:$0xf]
      %v683 = vunpack.c.l.b16 %v575
      %v684 = vunpack.c.l.b16 %v576
      %v685 = vunpack.c.l.b16 %v577
      %v686 = vunpack.c.l.b16 %v578
      %v687 = vunpack.c.l.b16 %v579
      %v688 = vunpack.c.l.b16 %v580
      %v689 = vunpack.c.l.b16 %v581
      %v690 = vunpack.c.l.b16 %v582
      %v691 = vunpack.c.l.b16 %v583
      %v692 = vunpack.c.l.b16 %v584
      %v693 = vunpack.c.l.b16 %v585
      %v694 = vunpack.c.l.b16 %v586
      %v695 = vunpack.c.l.b16 %v587
      %v696 = vunpack.c.l.b16 %v588
      %v697 = vunpack.c.l.b16 %v589
      %v698 = vunpack.c.l.b16 %v590
      %v699 = vunpack.c.l.b16 %v591
      %v700 = vunpack.c.l.b16 %v592
      %v701 = vunpack.c.l.b16 %v593
      %v702 = vunpack.c.l.b16 %v594
      %v703 = vunpack.c.l.b16 %v595
      %v704 = vunpack.c.l.b16 %v596
      %v705 = vunpack.c.l.b16 %v597
      %v706 = vunpack.c.l.b16 %v598
      %v707 = vunpack.c.l.b16 %v599
      %v708 = vunpack.c.l.b16 %v600
      %v709 = vunpack.c.l.b16 %v601
      %v710 = vunpack.c.l.b16 %v602
      %v711 = vunpack.c.l.b16 %v603
      %v712 = vunpack.c.l.b16 %v604
      %v713 = vunpack.c.l.b16 %v605
      %v714 = vunpack.c.l.b16 %v606
      %v715 = vunpack.c.l.b16 %v607
      %v716 = vunpack.c.l.b16 %v608
      %v717 = vunpack.c.l.b16 %v609
      %v718 = vunpack.c.l.b16 %v610
      %v719 = vunpack.c.l.b16 %v611
      %v720 = vunpack.c.l.b16 %v612
      %v721 = vunpack.c.l.b16 %v613
      %v722 = vunpack.c.l.b16 %v614
      %v723 = vunpack.c.l.b16 %v615
      %v724 = vunpack.c.l.b16 %v616
      %v725 = vunpack.c.l.b16 %v617
      %v726 = vunpack.c.l.b16 %v618
      %v727 = vunpack.c.l.b16 %v619
      %v728 = vunpack.c.l.b16 %v620
      %v729 = vunpack.c.l.b16 %v621
      %v730 = vunpack.c.l.b16 %v622
      %v731 = vunpack.c.l.b16 %v623
      %v732 = vunpack.c.l.b16 %v624
      %v733 = vunpack.c.l.b16 %v625
      %v734 = vunpack.c.l.b16 %v626
      %v735 = vunpack.c.l.b16 %v627
      %v736 = vunpack.c.l.b16 %v628
      %v737 = vpack.c.b16 %v684, %v683
      %v738 = vpack.c.b16 %v686, %v685
      %v739 = vpack.c.b16 %v688, %v687
      %v740 = vpack.c.b16 %v690, %v689
      %v741 = vpack.c.b16 %v692, %v691
      %v742 = vpack.c.b16 %v694, %v693
      %v743 = vpack.c.b16 %v696, %v695
      %v744 = vpack.c.b16 %v698, %v697
      %v745 = vpack.c.b16 %v700, %v699
      %v746 = vpack.c.b16 %v702, %v701
      %v747 = vpack.c.b16 %v704, %v703
      %v748 = vpack.c.b16 %v706, %v705
      %v749 = vpack.c.b16 %v708, %v707
      %v750 = vpack.c.b16 %v710, %v709
      %v751 = vpack.c.b16 %v712, %v711
      %v752 = vpack.c.b16 %v714, %v713
      %v753 = vpack.c.b16 %v716, %v715
      %v754 = vpack.c.b16 %v718, %v717
      %v755 = vpack.c.b16 %v720, %v719
      %v756 = vpack.c.b16 %v722, %v721
      %v757 = vpack.c.b16 %v724, %v723
      %v758 = vpack.c.b16 %v726, %v725
      %v759 = vpack.c.b16 %v728, %v727
      %v760 = vpack.c.b16 %v730, %v729
      %v761 = vpack.c.b16 %v732, %v731
      %v762 = vpack.c.b16 %v734, %v733
      %v763 = vpack.c.b16 %v736, %v735
      %vm791 = vcmask 392192
      %v793 = vsel %vm791, %v574, 0
      %795 = vmatprep.subr.bf16.mxu0 0
      %796 = vmatpush1.bf16.msra.mxu0 %v737
      %797 = vmatprep.subr.bf16.mxu0 0
      %798 = vmatpush1.bf16.msra.mxu0 %v738
      %799 = vmatprep.subr.bf16.mxu0 0
      %800 = vmatpush1.bf16.msra.mxu0 %v739
      %801 = vmatprep.subr.bf16.mxu0 0
      %802 = vmatpush1.bf16.msra.mxu0 %v740
      %803 = vmatprep.subr.bf16.mxu0 0
      %804 = vmatpush1.bf16.msra.mxu0 %v741
      %805 = vmatprep.subr.bf16.mxu0 0
      %806 = vmatpush1.bf16.msra.mxu0 %v742
      %807 = vmatprep.subr.bf16.mxu0 0
      %808 = vmatpush1.bf16.msra.mxu0 %v743
      %809 = vmatprep.subr.bf16.mxu0 0
      %810 = vmatpush1.bf16.msra.mxu0 %v744
      %811 = vmatprep.subr.bf16.mxu0 0
      %812 = vmatpush1.bf16.msra.mxu0 %v745
      %813 = vmatprep.subr.bf16.mxu0 0
      %814 = vmatpush1.bf16.msra.mxu0 %v746
      %815 = vmatprep.subr.bf16.mxu0 0
      %816 = vmatpush1.bf16.msra.mxu0 %v747
      %817 = vmatprep.subr.bf16.mxu0 0
      %818 = vmatpush1.bf16.msra.mxu0 %v748
      %819 = vmatprep.subr.bf16.mxu0 0
      %820 = vmatpush1.bf16.msra.mxu0 %v749
      %821 = vmatprep.subr.bf16.mxu0 0
      %822 = vmatpush1.bf16.msra.mxu0 %v750
      %823 = vmatprep.subr.bf16.mxu0 0
      %824 = vmatpush1.bf16.msra.mxu0 %v751
      %825 = vmatprep.subr.bf16.mxu0 0
      %826 = vmatpush1.bf16.msra.mxu0 %v752
      %827 = vmatprep.mubr.bf16.mxu0 %v572
      %828 = vmatmul.mubr.bf16.gmra.mrb[0].mxu0 %v571
      %v829 = vpop.f32.mrb[0].mxu0
      %v830 = vadd.f32 0.0, %v829
      %v831 = vpop.f32.mrb[0].mxu0
      %v832 = vpop.f32.mrb[0].mxu0
      %v833 = vadd.f32 0.0, %v832
      %v834 = vpop.f32.mrb[0].mxu0
      %835 = vdwg.mxu0
      %836 = vmatprep.subr.bf16.mxu0 0
      %837 = vmatpush1.bf16.msra.mxu0 %v753
      %838 = vmatprep.subr.bf16.mxu0 0
      %839 = vmatpush1.bf16.msra.mxu0 %v754
      %840 = vmatprep.subr.bf16.mxu0 0
      %841 = vmatpush1.bf16.msra.mxu0 %v755
      %842 = vmatprep.subr.bf16.mxu0 0
      %843 = vmatpush1.bf16.msra.mxu0 %v756
      %844 = vmatprep.subr.bf16.mxu0 0
      %845 = vmatpush1.bf16.msra.mxu0 %v757
      %846 = vmatprep.subr.bf16.mxu0 0
      %847 = vmatpush1.bf16.msra.mxu0 %v758
      %848 = vmatprep.subr.bf16.mxu0 0
      %849 = vmatpush1.bf16.msra.mxu0 %v759
      %850 = vmatprep.subr.bf16.mxu0 0
      %851 = vmatpush1.bf16.msra.mxu0 %v760
      %852 = vmatprep.subr.bf16.mxu0 0
      %853 = vmatpush1.bf16.msra.mxu0 %v761
      %854 = vmatprep.subr.bf16.mxu0 0
      %855 = vmatpush1.bf16.msra.mxu0 %v762
      %856 = vmatprep.subr.bf16.mxu0 0
      %857 = vmatpush1.bf16.msra.mxu0 %v763
      %858 = vmatprep.subr.bf16.mxu0 0
      %859 = vmatpush1.bf16.msra.mxu0 0
      %860 = vmatprep.subr.bf16.mxu0 0
      %861 = vmatpush1.bf16.msra.mxu0 0
      %862 = vmatprep.subr.bf16.mxu0 0
      %863 = vmatpush1.bf16.msra.mxu0 0
      %864 = vmatprep.subr.bf16.mxu0 0
      %865 = vmatpush1.bf16.msra.mxu0 0
      %866 = vmatprep.subr.bf16.mxu0 0
      %867 = vmatpush1.bf16.msra.mxu0 0
      %868 = vmatprep.mubr.bf16.mxu0 %v793
      %869 = vmatmul.mubr.bf16.gmra.mrb[0].mxu0 %v573
      %v870 = vpop.f32.mrb[0].mxu0
      %v871 = vadd.f32 %v830, %v870
      %v872 = vpop.f32.mrb[0].mxu0
      %v873 = vpop.f32.mrb[0].mxu0
      %v874 = vadd.f32 %v833, %v873
      %v875 = vpop.f32.mrb[0].mxu0
      %876 = vdwg.mxu0
      %v877 = vpack.c.bf16 %v874, %v871
      %v879 = vunpack.c.l.b16 %v877
      %v880 = vunpack.c.h.b16 %v877
      %v881 = vpack.c.b16 %v879, %v879
      %v882 = vpack.c.b16 %v880, %v880
      %vm885 = vcmask 388096
      %886 = vst.msk [vmem:[%s143] sm:$0xf] %vm885, %v881
      %887 = vst.msk [vmem:[%s143 + $0x4] sm:$0xf] %vm885, %v882
      %p888 = scmp.lt.s32.totalorder %s13, 1
      %s889 = scalar_select %p888, %s13, 1
      %s890 = smul.addr %s889, 2
      %s891 = smul.addr %s890, 4
      %s892 = scalar_lea.vmem %s2, %s891
      // Predicated region
      $region29: #{a_call__.5} parent=27 // pred_check
        %p893 = pneg %p78
      $region30: #{a_call__.5} parent=27 // pred_check_branch
        %895 = sbr.rel (%p893) target = $region32
      $region31: #{a_call__.5} parent=27 // pred_region
        _
      $region32: #{a_call__.5} parent=27 // pred_fallthru
        _
    $region28: #{a_call__.5} parent=5 // pred_fallthru
      _
    %p896 = scmp.le.s32.totalorder 2, %s8
    // Predicated region
    $region33: #{a_call__.5} parent=5 // pred_check
      %p897 = pneg %p896
    $region34: #{a_call__.5} parent=5 // pred_check_branch
      %899 = sbr.rel (%p897) target = $region36
    $region35: #{a_call__.5} parent=5 // pred_region
      %s900 = ssub.s32 %s8, 2
      // Predicated region
      $region37: #{a_call__.5} parent=35 // pred_check
        %p901 = pneg %p84
      $region38: #{a_call__.5} parent=35 // pred_check_branch
        %903 = sbr.rel (%p901) target = $region40
      $region39: #{a_call__.5} parent=35 // pred_region
        %p904 = scmp.lt.s32.totalorder %s14, 1
        %s905 = scalar_select %p904, %s14, 1
        %s906 = smul.addr %s905, 2
        %s907 = smul.addr %s906, 4
        %s908 = scalar_lea.vmem %s2, %s907
      $region40: #{a_call__.5} parent=35 // pred_fallthru
        _
    $region36: #{a_call__.5} parent=5 // pred_fallthru
      _
  $region6: #{a_call__.5} parent=0 // loop_footer
    %s12 = sadd.s32 1, %s8
  $region7: #{a_call__.5} parent=0 // loop_footer_branch
    %7 = sbr.rel target = $region3
  $region8: #{a_call__.5} parent=0 // loop_exit
    _

// kernel: a_call__.3
$region0: #{a_call__.3}
  #allocation0 [shape = 'u32[]', space=smem, size = 0x4, offset = 0x4, fixed_abs, tag = 'smem constant byte address 0x4 - core index']
  #allocation1 [shape = 'u32[144,128]{1,0:T(1,128)}', space=vmem, size = 0x12000, scoped, tag = 'internal scratch']
  #allocation2 [shape = 'bf16[256,18]{1,0:T(16,128)(2,1)}', space=vmem, size = 0x10000, scoped, tag = 'scratch operand']
  %s0 = inlined_call_operand.vmem [shape: bf16[2,1,18,18,2], index: 0, kind: input, shape index: {}]
  %s1 = inlined_call_operand.vmem [shape: bf16[18,48], index: 1, kind: input, shape index: {}]
  %s2 = inlined_call_operand.vmem [shape: bf16[2,256,48], index: 2, kind: output, shape index: {}]
  %s3 = sld [smem:[#allocation0]]
  $region41: #{a_call__.3} parent=0
    _
  %s5 = ssub.s32 1, %s3
  %s6 = scalar_select 0, %s5, %s3
  loop: start=0, step=1, limit=4
  $region2: #{a_call__.3} parent=0 // loop_pre_header
    _
  $region3: #{a_call__.3} parent=0 // loop_header
    %s8 = sphi 0, %s12
    %p9 = scmp.ge.s32.totalorder %s8, 4
    %s18 = sphi 0, %s20
    %s21 = sphi 0, %s18
    %s22 = sphi 0, %s21
    %s38 = sphi 0, %s22
    %s42 = sphi 0, %s42
    %s44 = sphi 0, %s42
    %s45 = sphi 0, %s44
    %s59 = sphi 0, %s45
    %s65 = sphi 0, %s67
    %s68 = sphi 0, %s65
    %s69 = sphi 0, %s68
    %s85 = sphi 0, %s69
  $region4: #{a_call__.3} parent=0 // loop_header_branch
    %11 = sbr.rel (%p9) target = $region8
  $region5: #{a_call__.3} parent=0 // loop_body
    %s13 = ssub.s32 %s8, 1
    %s14 = ssub.s32 %s8, 2
    %s15 = sadd.s32 %s8, 1
    %s16 = ssub.s32 %s8, %s15
    %p17 = scmp.eq.s32.totalorder %s16, 0
    %s19 = sadd.s32 %s18, 1
    %s20 = scalar_select %p17, %s18, %s19
    %p23 = pneg %p17
    %p24 = scmp.eq.s32.totalorder %s8, 1
    %p25 = por %p23, %p24
    %p26 = scmp.ne.s32.totalorder %s18, %s21
    %p27 = scmp.eq.s32.totalorder %s8, 0
    %p28 = por %p26, %p27
    %p29 = scmp.ne.s32.totalorder %s18, %s21
    %p30 = scmp.eq.s32.totalorder %s13, 1
    %p31 = por %p29, %p30
    %p32 = scmp.ne.s32.totalorder %s21, %s22
    %p33 = scmp.eq.s32.totalorder %s13, 0
    %p34 = por %p32, %p33
    %p35 = scmp.ne.s32.totalorder %s21, %s22
    %p36 = scmp.eq.s32.totalorder %s14, 1
    %p37 = por %p35, %p36
    %p39 = scmp.ne.s32.totalorder %s22, %s38
    %p40 = scmp.eq.s32.totalorder %s14, 0
    %p41 = por %p39, %p40
    %s43 = sadd.s32 %s42, 1
    %p46 = scmp.eq.s32.totalorder %s8, 1
    %p47 = scmp.ne.s32.totalorder %s42, %s44
    %p48 = scmp.eq.s32.totalorder %s8, 0
    %p49 = por %p47, %p48
    %p50 = scmp.ne.s32.totalorder %s42, %s44
    %p51 = scmp.eq.s32.totalorder %s13, 1
    %p52 = por %p50, %p51
    %p53 = scmp.ne.s32.totalorder %s44, %s45
    %p54 = scmp.eq.s32.totalorder %s13, 0
    %p55 = por %p53, %p54
    %p56 = scmp.ne.s32.totalorder %s44, %s45
    %p57 = scmp.eq.s32.totalorder %s14, 1
    %p58 = por %p56, %p57
    %p60 = scmp.ne.s32.totalorder %s45, %s59
    %p61 = scmp.eq.s32.totalorder %s14, 0
    %p62 = por %p60, %p61
    %s63 = ssub.s32 %s8, %s15
    %p64 = scmp.eq.s32.totalorder %s63, 0
    %s66 = sadd.s32 %s65, 1
    %s67 = scalar_select %p64, %s65, %s66
    %p70 = pneg %p64
    %p71 = scmp.eq.s32.totalorder %s8, 1
    %p72 = por %p70, %p71
    %p73 = scmp.ne.s32.totalorder %s65, %s68
    %p74 = scmp.eq.s32.totalorder %s8, 0
    %p75 = por %p73, %p74
    %p76 = scmp.ne.s32.totalorder %s65, %s68
    %p77 = scmp.eq.s32.totalorder %s13, 1
    %p78 = por %p76, %p77
    %p79 = scmp.ne.s32.totalorder %s68, %s69
    %p80 = scmp.eq.s32.totalorder %s13, 0
    %p81 = por %p79, %p80
    %p82 = scmp.ne.s32.totalorder %s68, %s69
    %p83 = scmp.eq.s32.totalorder %s14, 1
    %p84 = por %p82, %p83
    %p86 = scmp.ne.s32.totalorder %s69, %s85
    %p87 = scmp.eq.s32.totalorder %s14, 0
    %p88 = por %p86, %p87
    %p89 = scmp.le.s32.totalorder 1, %s8
    %p90 = scmp.lt.s32.totalorder %s8, 3
    %p91 = pnand %p89, %p90
    %p92 = pneg %p91
    // Predicated region
    $region9: #{a_call__.3} parent=5 // pred_check
      _
    $region10: #{a_call__.3} parent=5 // pred_check_branch
      %94 = sbr.rel (%p91) target = $region12
    $region11: #{a_call__.3} parent=5 // pred_region
      %s95 = ssub.s32 %s8, 1
      // Predicated region
      $region13: #{a_call__.3} parent=11 // pred_check
        %p96 = pneg %p55
      $region14: #{a_call__.3} parent=11 // pred_check_branch
        %98 = sbr.rel (%p96) target = $region16
      $region15: #{a_call__.3} parent=11 // pred_region
        _
      $region16: #{a_call__.3} parent=11 // pred_fallthru
        _
    $region12: #{a_call__.3} parent=5 // pred_fallthru
      _
    %p99 = scmp.lt.s32.totalorder %s8, 2
    // Predicated region
    $region17: #{a_call__.3} parent=5 // pred_check
      %p100 = pneg %p99
    $region18: #{a_call__.3} parent=5 // pred_check_branch
      %102 = sbr.rel (%p100) target = $region20
    $region19: #{a_call__.3} parent=5 // pred_region
      // Predicated region
      $region21: #{a_call__.3} parent=19 // pred_check
        %p103 = pneg %p28
      $region22: #{a_call__.3} parent=19 // pred_check_branch
        %105 = sbr.rel (%p103) target = $region24
      $region23: #{a_call__.3} parent=19 // pred_region
        %p106 = scmp.lt.s32.totalorder %s8, 1
        %s107 = scalar_select %p106, %s8, 1
        %s108 = smul.addr %s107, 54
        %s109 = smul.addr %s108, 4
        %s110 = scalar_lea.vmem %s0, %s109
      $region24: #{a_call__.3} parent=19 // pred_fallthru
        _
    $region20: #{a_call__.3} parent=5 // pred_fallthru
      _
    %p111 = scmp.le.s32.totalorder 1, %s8
    %p112 = scmp.lt.s32.totalorder %s8, 3
    %p113 = pnand %p111, %p112
    %p114 = pneg %p113
    // Predicated region
    $region25: #{a_call__.3} parent=5 // pred_check
      _
    $region26: #{a_call__.3} parent=5 // pred_check_branch
      %116 = sbr.rel (%p113) target = $region28
    $region27: #{a_call__.3} parent=5 // pred_region
      %s117 = ssub.s32 %s8, 1
      %p118 = scmp.lt.s32.totalorder %s13, 1
      %s119 = scalar_select %p118, %s13, 1
      %s120 = smul.addr %s119, 54
      %s121 = smul.addr %s120, 4
      %s122 = scalar_lea.vmem %s0, %s121
      %p123 = pneg %p34
      %p124 = pneg %p31
      %p125 = pneg %p55
      %p126 = pneg %p52
      %p127 = pneg %p81
      %p128 = pneg %p78
      %p129 = scmp.lt.s32.totalorder %s13, 1
      %s130 = scalar_select %p129, %s13, 1
      %s131 = smul.addr %s130, 32
      %s132 = smul.addr %s131, 4
      %s133 = scalar_lea.vmem %s2, %s132
      %p134 = scmp.lt.s32.totalorder %s13, 1
      %s135 = scalar_select %p134, %s13, 1
      %s136 = smul.addr %s135, 54
      %s137 = smul.addr %s136, 4
      %s138 = scalar_lea.vmem %s0, %s137
      %p139 = scmp.lt.s32.totalorder %s13, 1
      %s140 = scalar_select %p139, %s13, 1
      %s141 = smul.addr %s140, 32
      %s142 = smul.addr %s141, 4
      %s143 = scalar_lea.vmem %s2, %s142
      %v145 = vld [vmem:[%s138] sm:$0xf]
      %v146 = vld [vmem:[%s138 + $0x4] sm:$0xf]
      %v147 = vld [vmem:[%s138 + $0xc] sm:$0xf]
      %v148 = vld [vmem:[%s138 + $0x10] sm:$0xf]
      %v149 = vld [vmem:[%s138 + $0x18] sm:$0xf]
      %v150 = vld [vmem:[%s138 + $0x1c] sm:$0xf]
      %v151 = vld [vmem:[%s138 + $0x24] sm:$0xf]
      %v152 = vld [vmem:[%s138 + $0x28] sm:$0xf]
      %v153 = vld [vmem:[%s138 + $0x30] sm:$0xf]
      %v154 = vld [vmem:[%s138 + $0x34] sm:$0xf]
      %v155 = vld [vmem:[%s138 + $0x3c] sm:$0xf]
      %v156 = vld [vmem:[%s138 + $0x40] sm:$0xf]
      %v157 = vld [vmem:[%s138 + $0x48] sm:$0xf]
      %v158 = vld [vmem:[%s138 + $0x4c] sm:$0xf]
      %v159 = vld [vmem:[%s138 + $0x54] sm:$0xf]
      %v160 = vld [vmem:[%s138 + $0x58] sm:$0xf]
      %v161 = vld [vmem:[%s138 + $0x60] sm:$0xf]
      %v162 = vld [vmem:[%s138 + $0x64] sm:$0xf]
      %v163 = vld [vmem:[%s138 + $0x6c] sm:$0xf]
      %v164 = vld [vmem:[%s138 + $0x70] sm:$0xf]
      %v165 = vld [vmem:[%s138 + $0x78] sm:$0xf]
      %v166 = vld [vmem:[%s138 + $0x7c] sm:$0xf]
      %v167 = vld [vmem:[%s138 + $0x84] sm:$0xf]
      %v168 = vld [vmem:[%s138 + $0x88] sm:$0xf]
      %v169 = vld [vmem:[%s138 + $0x90] sm:$0xf]
      %v170 = vld [vmem:[%s138 + $0x94] sm:$0xf]
      %v171 = vld [vmem:[%s138 + $0x9c] sm:$0xf]
      %v172 = vld [vmem:[%s138 + $0xa0] sm:$0xf]
      %v173 = vld [vmem:[%s138 + $0xa8] sm:$0xf]
      %v174 = vld [vmem:[%s138 + $0xac] sm:$0xf]
      %v175 = vld [vmem:[%s138 + $0xb4] sm:$0xf]
      %v176 = vld [vmem:[%s138 + $0xb8] sm:$0xf]
      %v209 = vunpack.c.l.b16 %v145
      %v210 = vunpack.c.l.b16 %v146
      %v211 = vunpack.c.l.b16 %v147
      %v212 = vunpack.c.l.b16 %v148
      %v213 = vunpack.c.l.b16 %v149
      %v214 = vunpack.c.l.b16 %v150
      %v215 = vunpack.c.l.b16 %v151
      %v216 = vunpack.c.l.b16 %v152
      %v217 = vunpack.c.l.b16 %v153
      %v218 = vunpack.c.l.b16 %v154
      %v219 = vunpack.c.l.b16 %v155
      %v220 = vunpack.c.l.b16 %v156
      %v221 = vunpack.c.l.b16 %v157
      %v222 = vunpack.c.l.b16 %v158
      %v223 = vunpack.c.l.b16 %v159
      %v224 = vunpack.c.l.b16 %v160
      %v225 = vunpack.c.l.b16 %v161
      %v226 = vunpack.c.l.b16 %v162
      %v227 = vunpack.c.l.b16 %v163
      %v228 = vunpack.c.l.b16 %v164
      %v229 = vunpack.c.l.b16 %v165
      %v230 = vunpack.c.l.b16 %v166
      %v231 = vunpack.c.l.b16 %v167
      %v232 = vunpack.c.l.b16 %v168
      %v233 = vunpack.c.l.b16 %v169
      %v234 = vunpack.c.l.b16 %v170
      %v235 = vunpack.c.l.b16 %v171
      %v236 = vunpack.c.l.b16 %v172
      %v237 = vunpack.c.l.b16 %v173
      %v238 = vunpack.c.l.b16 %v174
      %v239 = vunpack.c.l.b16 %v175
      %v240 = vunpack.c.l.b16 %v176
      %v241 = vpack.c.b16 %v210, %v209
      %v242 = vpack.c.b16 %v212, %v211
      %v243 = vpack.c.b16 %v214, %v213
      %v244 = vpack.c.b16 %v216, %v215
      %v245 = vpack.c.b16 %v218, %v217
      %v246 = vpack.c.b16 %v220, %v219
      %v247 = vpack.c.b16 %v222, %v221
      %v248 = vpack.c.b16 %v224, %v223
      %v249 = vpack.c.b16 %v226, %v225
      %v250 = vpack.c.b16 %v228, %v227
      %v251 = vpack.c.b16 %v230, %v229
      %v252 = vpack.c.b16 %v232, %v231
      %v253 = vpack.c.b16 %v234, %v233
      %v254 = vpack.c.b16 %v236, %v235
      %v255 = vpack.c.b16 %v238, %v237
      %v256 = vpack.c.b16 %v240, %v239
      %vm273 = vcmask 15360
      %274 = vst.msk [vmem:[#allocation2] sm:$0xff] %vm273, %v241
      %275 = vst.msk [vmem:[#allocation2 + $0x8] sm:$0xff] %vm273, %v242
      %276 = vst.msk [vmem:[#allocation2 + $0x10] sm:$0xff] %vm273, %v243
      %277 = vst.msk [vmem:[#allocation2 + $0x18] sm:$0xff] %vm273, %v244
      %278 = vst.msk [vmem:[#allocation2 + $0x20] sm:$0xff] %vm273, %v245
      %279 = vst.msk [vmem:[#allocation2 + $0x28] sm:$0xff] %vm273, %v246
      %280 = vst.msk [vmem:[#allocation2 + $0x30] sm:$0xff] %vm273, %v247
      %281 = vst.msk [vmem:[#allocation2 + $0x38] sm:$0xff] %vm273, %v248
      %282 = vst.msk [vmem:[#allocation2 + $0x40] sm:$0xff] %vm273, %v249
      %283 = vst.msk [vmem:[#allocation2 + $0x48] sm:$0xff] %vm273, %v250
      %284 = vst.msk [vmem:[#allocation2 + $0x50] sm:$0xff] %vm273, %v251
      %285 = vst.msk [vmem:[#allocation2 + $0x58] sm:$0xff] %vm273, %v252
      %286 = vst.msk [vmem:[#allocation2 + $0x60] sm:$0xff] %vm273, %v253
      %287 = vst.msk [vmem:[#allocation2 + $0x68] sm:$0xff] %vm273, %v254
      %288 = vst.msk [vmem:[#allocation2 + $0x70] sm:$0xff] %vm273, %v255
      %289 = vst.msk [vmem:[#allocation2 + $0x78] sm:$0xff] %vm273, %v256
      %v290 = vld [vmem:[%s138] sm:$0xf]
      %v291 = vld [vmem:[%s138 + $0x4] sm:$0xf]
      %v292 = vld [vmem:[%s138 + $0x8] sm:$0x1]
      %v293 = vld [vmem:[%s138 + $0xc] sm:$0xf]
      %v294 = vld [vmem:[%s138 + $0x10] sm:$0xf]
      %v295 = vld [vmem:[%s138 + $0x14] sm:$0x1]
      %v296 = vld [vmem:[%s138 + $0x18] sm:$0xf]
      %v297 = vld [vmem:[%s138 + $0x1c] sm:$0xf]
      %v298 = vld [vmem:[%s138 + $0x20] sm:$0x1]
      %v299 = vld [vmem:[%s138 + $0x24] sm:$0xf]
      %v300 = vld [vmem:[%s138 + $0x28] sm:$0xf]
      %v301 = vld [vmem:[%s138 + $0x2c] sm:$0x1]
      %v302 = vld [vmem:[%s138 + $0x30] sm:$0xf]
      %v303 = vld [vmem:[%s138 + $0x34] sm:$0xf]
      %v304 = vld [vmem:[%s138 + $0x38] sm:$0x1]
      %v305 = vld [vmem:[%s138 + $0x3c] sm:$0xf]
      %v306 = vld [vmem:[%s138 + $0x40] sm:$0xf]
      %v307 = vld [vmem:[%s138 + $0x44] sm:$0x1]
      %v308 = vld [vmem:[%s138 + $0x48] sm:$0xf]
      %v309 = vld [vmem:[%s138 + $0x4c] sm:$0xf]
      %v310 = vld [vmem:[%s138 + $0x50] sm:$0x1]
      %v311 = vld [vmem:[%s138 + $0x54] sm:$0xf]
      %v312 = vld [vmem:[%s138 + $0x58] sm:$0xf]
      %v313 = vld [vmem:[%s138 + $0x5c] sm:$0x1]
      %v314 = vld [vmem:[%s138 + $0x60] sm:$0xf]
      %v315 = vld [vmem:[%s138 + $0x64] sm:$0xf]
      %v316 = vld [vmem:[%s138 + $0x68] sm:$0x1]
      %v317 = vld [vmem:[%s138 + $0x6c] sm:$0xf]
      %v318 = vld [vmem:[%s138 + $0x70] sm:$0xf]
      %v319 = vld [vmem:[%s138 + $0x74] sm:$0x1]
      %v320 = vld [vmem:[%s138 + $0x78] sm:$0xf]
      %v321 = vld [vmem:[%s138 + $0x7c] sm:$0xf]
      %v322 = vld [vmem:[%s138 + $0x80] sm:$0x1]
      %v323 = vld [vmem:[%s138 + $0x84] sm:$0xf]
      %v324 = vld [vmem:[%s138 + $0x88] sm:$0xf]
      %v325 = vld [vmem:[%s138 + $0x8c] sm:$0x1]
      %v326 = vld [vmem:[%s138 + $0x90] sm:$0xf]
      %v327 = vld [vmem:[%s138 + $0x94] sm:$0xf]
      %v328 = vld [vmem:[%s138 + $0x98] sm:$0x1]
      %v329 = vld [vmem:[%s138 + $0x9c] sm:$0xf]
      %v330 = vld [vmem:[%s138 + $0xa0] sm:$0xf]
      %v331 = vld [vmem:[%s138 + $0xa4] sm:$0x1]
      %v332 = vld [vmem:[%s138 + $0xa8] sm:$0xf]
      %v333 = vld [vmem:[%s138 + $0xac] sm:$0xf]
      %v334 = vld [vmem:[%s138 + $0xb0] sm:$0x1]
      %v335 = vld [vmem:[%s138 + $0xb4] sm:$0xf]
      %v336 = vld [vmem:[%s138 + $0xb8] sm:$0xf]
      %v337 = vld [vmem:[%s138 + $0xbc] sm:$0x1]
      %vm338 = vsmask.f32 3328
      %vm339 = vsmask.f32 7440
      %vm340 = vmor %vm338, %vm339
      %v342 = vshrl.u32 %v290, 16
      %v344 = vrot.slane %v342, 4
      %v345 = vshll.u32 %v290, 16
      %v347 = vrot.slane %v345, 5
      %v348 = vor.u32 %v344, %v347
      %v349 = vrot.slane %v348, 4
      %v351 = vshll.u32 %v291, 16
      %v353 = vrot.slane %v351, 5
      %v354 = vsel %vm340, %v349, %v353
      %v355 = vshrl.u32 %v291, 16
      %v357 = vrot.slane %v355, 4
      %v358 = vor.u32 %v357, %v353
      %v359 = vrot.slane %v358, 4
      %v361 = vshll.u32 %v292, 16
      %v363 = vrot.slane %v361, 5
      %v364 = vsel %vm340, %v359, %v363
      %v366 = vshrl.u32 %v293, 16
      %v368 = vrot.slane %v366, 4
      %v369 = vshll.u32 %v293, 16
      %v371 = vrot.slane %v369, 5
      %v372 = vor.u32 %v368, %v371
      %v373 = vrot.slane %v372, 4
      %v375 = vshll.u32 %v294, 16
      %v377 = vrot.slane %v375, 5
      %v378 = vsel %vm340, %v373, %v377
      %v379 = vshrl.u32 %v294, 16
      %v381 = vrot.slane %v379, 4
      %v382 = vor.u32 %v381, %v377
      %v383 = vrot.slane %v382, 4
      %v385 = vshll.u32 %v295, 16
      %v387 = vrot.slane %v385, 5
      %v388 = vsel %vm340, %v383, %v387
      %v390 = vshrl.u32 %v296, 16
      %v392 = vrot.slane %v390, 4
      %v393 = vshll.u32 %v296, 16
      %v395 = vrot.slane %v393, 5
      %v396 = vor.u32 %v392, %v395
      %v397 = vrot.slane %v396, 4
      %v399 = vshll.u32 %v297, 16
      %v401 = vrot.slane %v399, 5
      %v402 = vsel %vm340, %v397, %v401
      %v403 = vshrl.u32 %v297, 16
      %v405 = vrot.slane %v403, 4
      %v406 = vor.u32 %v405, %v401
      %v407 = vrot.slane %v406, 4
      %v409 = vshll.u32 %v298, 16
      %v411 = vrot.slane %v409, 5
      %v412 = vsel %vm340, %v407, %v411
      %v414 = vshrl.u32 %v299, 16
      %v416 = vrot.slane %v414, 4
      %v417 = vshll.u32 %v299, 16
      %v419 = vrot.slane %v417, 5
      %v420 = vor.u32 %v416, %v419
      %v421 = vrot.slane %v420, 4
      %v423 = vshll.u32 %v300, 16
      %v425 = vrot.slane %v423, 5
      %v426 = vsel %vm340, %v421, %v425
      %v427 = vshrl.u32 %v300, 16
      %v429 = vrot.slane %v427, 4
      %v430 = vor.u32 %v429, %v425
      %v431 = vrot.slane %v430, 4
      %v433 = vshll.u32 %v301, 16
      %v435 = vrot.slane %v433, 5
      %v436 = vsel %vm340, %v431, %v435
      %v438 = vshrl.u32 %v302, 16
      %v440 = vrot.slane %v438, 4
      %v441 = vshll.u32 %v302, 16
      %v443 = vrot.slane %v441, 5
      %v444 = vor.u32 %v440, %v443
      %v445 = vrot.slane %v444, 4
      %v447 = vshll.u32 %v303, 16
      %v449 = vrot.slane %v447, 5
      %v450 = vsel %vm340, %v445, %v449
      %v451 = vshrl.u32 %v303, 16
      %v453 = vrot.slane %v451, 4
      %v454 = vor.u32 %v453, %v449
      %v455 = vrot.slane %v454, 4
      %v457 = vshll.u32 %v304, 16
      %v459 = vrot.slane %v457, 5
      %v460 = vsel %vm340, %v455, %v459
      %v462 = vshrl.u32 %v305, 16
      %v464 = vrot.slane %v462, 4
      %v465 = vshll.u32 %v305, 16
      %v467 = vrot.slane %v465, 5
      %v468 = vor.u32 %v464, %v467
      %v469 = vrot.slane %v468, 4
      %v471 = vshll.u32 %v306, 16
      %v473 = vrot.slane %v471, 5
      %v474 = vsel %vm340, %v469, %v473
      %v475 = vshrl.u32 %v306, 16
      %v477 = vrot.slane %v475, 4
      %v478 = vor.u32 %v477, %v473
      %v479 = vrot.slane %v478, 4
      %v481 = vshll.u32 %v307, 16
      %v483 = vrot.slane %v481, 5
      %v484 = vsel %vm340, %v479, %v483
      %v486 = vshrl.u32 %v308, 16
      %v488 = vrot.slane %v486, 4
      %v489 = vshll.u32 %v308, 16
      %v491 = vrot.slane %v489, 5
      %v492 = vor.u32 %v488, %v491
      %v493 = vrot.slane %v492, 4
      %v495 = vshll.u32 %v309, 16
      %v497 = vrot.slane %v495, 5
      %v498 = vsel %vm340, %v493, %v497
      %v499 = vshrl.u32 %v309, 16
      %v501 = vrot.slane %v499, 4
      %v502 = vor.u32 %v501, %v497
      %v503 = vrot.slane %v502, 4
      %v505 = vshll.u32 %v310, 16
      %v507 = vrot.slane %v505, 5
      %v508 = vsel %vm340, %v503, %v507
      %v510 = vshrl.u32 %v311, 16
      %v512 = vrot.slane %v510, 4
      %v513 = vshll.u32 %v311, 16
      %v515 = vrot.slane %v513, 5
      %v516 = vor.u32 %v512, %v515
      %v517 = vrot.slane %v516, 4
      %v519 = vshll.u32 %v312, 16
      %v521 = vrot.slane %v519, 5
      %v522 = vsel %vm340, %v517, %v521
      %v523 = vshrl.u32 %v312, 16
      %v525 = vrot.slane %v523, 4
      %v526 = vor.u32 %v525, %v521
      %v527 = vrot.slane %v526, 4
      %v529 = vshll.u32 %v313, 16
      %v531 = vrot.slane %v529, 5
      %v532 = vsel %vm340, %v527, %v531
      %v534 = vshrl.u32 %v314, 16
      %v536 = vrot.slane %v534, 4
      %v537 = vshll.u32 %v314, 16
      %v539 = vrot.slane %v537, 5
      %v540 = vor.u32 %v536, %v539
      %v541 = vrot.slane %v540, 4
      %v543 = vshll.u32 %v315, 16
      %v545 = vrot.slane %v543, 5
      %v546 = vsel %vm340, %v541, %v545
      %v547 = vshrl.u32 %v315, 16
      %v549 = vrot.slane %v547, 4
      %v550 = vor.u32 %v549, %v545
      %v551 = vrot.slane %v550, 4
      %v553 = vshll.u32 %v316, 16
      %v555 = vrot.slane %v553, 5
      %v556 = vsel %vm340, %v551, %v555
      %v558 = vshrl.u32 %v317, 16
      %v560 = vrot.slane %v558, 4
      %v561 = vshll.u32 %v317, 16
      %v563 = vrot.slane %v561, 5
      %v564 = vor.u32 %v560, %v563
      %v565 = vrot.slane %v564, 4
      %v567 = vshll.u32 %v318, 16
      %v569 = vrot.slane %v567, 5
      %v570 = vsel %vm340, %v565, %v569
      %v571 = vshrl.u32 %v318, 16
      %v573 = vrot.slane %v571, 4
      %v574 = vor.u32 %v573, %v569
      %v575 = vrot.slane %v574, 4
      %v577 = vshll.u32 %v319, 16
      %v579 = vrot.slane %v577, 5
      %v580 = vsel %vm340, %v575, %v579
      %v582 = vshrl.u32 %v320, 16
      %v584 = vrot.slane %v582, 4
      %v585 = vshll.u32 %v320, 16
      %v587 = vrot.slane %v585, 5
      %v588 = vor.u32 %v584, %v587
      %v589 = vrot.slane %v588, 4
      %v591 = vshll.u32 %v321, 16
      %v593 = vrot.slane %v591, 5
      %v594 = vsel %vm340, %v589, %v593
      %v595 = vshrl.u32 %v321, 16
      %v597 = vrot.slane %v595, 4
      %v598 = vor.u32 %v597, %v593
      %v599 = vrot.slane %v598, 4
      %v601 = vshll.u32 %v322, 16
      %v603 = vrot.slane %v601, 5
      %v604 = vsel %vm340, %v599, %v603
      %v606 = vshrl.u32 %v323, 16
      %v608 = vrot.slane %v606, 4
      %v609 = vshll.u32 %v323, 16
      %v611 = vrot.slane %v609, 5
      %v612 = vor.u32 %v608, %v611
      %v613 = vrot.slane %v612, 4
      %v615 = vshll.u32 %v324, 16
      %v617 = vrot.slane %v615, 5
      %v618 = vsel %vm340, %v613, %v617
      %v619 = vshrl.u32 %v324, 16
      %v621 = vrot.slane %v619, 4
      %v622 = vor.u32 %v621, %v617
      %v623 = vrot.slane %v622, 4
      %v625 = vshll.u32 %v325, 16
      %v627 = vrot.slane %v625, 5
      %v628 = vsel %vm340, %v623, %v627
      %v630 = vshrl.u32 %v326, 16
      %v632 = vrot.slane %v630, 4
      %v633 = vshll.u32 %v326, 16
      %v635 = vrot.slane %v633, 5
      %v636 = vor.u32 %v632, %v635
      %v637 = vrot.slane %v636, 4
      %v639 = vshll.u32 %v327, 16
      %v641 = vrot.slane %v639, 5
      %v642 = vsel %vm340, %v637, %v641
      %v643 = vshrl.u32 %v327, 16
      %v645 = vrot.slane %v643, 4
      %v646 = vor.u32 %v645, %v641
      %v647 = vrot.slane %v646, 4
      %v649 = vshll.u32 %v328, 16
      %v651 = vrot.slane %v649, 5
      %v652 = vsel %vm340, %v647, %v651
      %v654 = vshrl.u32 %v329, 16
      %v656 = vrot.slane %v654, 4
      %v657 = vshll.u32 %v329, 16
      %v659 = vrot.slane %v657, 5
      %v660 = vor.u32 %v656, %v659
      %v661 = vrot.slane %v660, 4
      %v663 = vshll.u32 %v330, 16
      %v665 = vrot.slane %v663, 5
      %v666 = vsel %vm340, %v661, %v665
      %v667 = vshrl.u32 %v330, 16
      %v669 = vrot.slane %v667, 4
      %v670 = vor.u32 %v669, %v665
      %v671 = vrot.slane %v670, 4
      %v673 = vshll.u32 %v331, 16
      %v675 = vrot.slane %v673, 5
      %v676 = vsel %vm340, %v671, %v675
      %v678 = vshrl.u32 %v332, 16
      %v680 = vrot.slane %v678, 4
      %v681 = vshll.u32 %v332, 16
      %v683 = vrot.slane %v681, 5
      %v684 = vor.u32 %v680, %v683
      %v685 = vrot.slane %v684, 4
      %v687 = vshll.u32 %v333, 16
      %v689 = vrot.slane %v687, 5
      %v690 = vsel %vm340, %v685, %v689
      %v691 = vshrl.u32 %v333, 16
      %v693 = vrot.slane %v691, 4
      %v694 = vor.u32 %v693, %v689
      %v695 = vrot.slane %v694, 4
      %v697 = vshll.u32 %v334, 16
      %v699 = vrot.slane %v697, 5
      %v700 = vsel %vm340, %v695, %v699
      %v702 = vshrl.u32 %v335, 16
      %v704 = vrot.slane %v702, 4
      %v705 = vshll.u32 %v335, 16
      %v707 = vrot.slane %v705, 5
      %v708 = vor.u32 %v704, %v707
      %v709 = vrot.slane %v708, 4
      %v711 = vshll.u32 %v336, 16
      %v713 = vrot.slane %v711, 5
      %v714 = vsel %vm340, %v709, %v713
      %v715 = vshrl.u32 %v336, 16
      %v717 = vrot.slane %v715, 4
      %v718 = vor.u32 %v717, %v713
      %v719 = vrot.slane %v718, 4
      %v721 = vshll.u32 %v337, 16
      %v723 = vrot.slane %v721, 5
      %v724 = vsel %vm340, %v719, %v723
      %v725 = vunpack.c.l.b16 %v354
      %v726 = vunpack.c.l.b16 %v364
      %v727 = vunpack.c.l.b16 %v378
      %v728 = vunpack.c.l.b16 %v388
      %v729 = vunpack.c.l.b16 %v402
      %v730 = vunpack.c.l.b16 %v412
      %v731 = vunpack.c.l.b16 %v426
      %v732 = vunpack.c.l.b16 %v436
      %v733 = vunpack.c.l.b16 %v450
      %v734 = vunpack.c.l.b16 %v460
      %v735 = vunpack.c.l.b16 %v474
      %v736 = vunpack.c.l.b16 %v484
      %v737 = vunpack.c.l.b16 %v498
      %v738 = vunpack.c.l.b16 %v508
      %v739 = vunpack.c.l.b16 %v522
      %v740 = vunpack.c.l.b16 %v532
      %v741 = vunpack.c.l.b16 %v546
      %v742 = vunpack.c.l.b16 %v556
      %v743 = vunpack.c.l.b16 %v570
      %v744 = vunpack.c.l.b16 %v580
      %v745 = vunpack.c.l.b16 %v594
      %v746 = vunpack.c.l.b16 %v604
      %v747 = vunpack.c.l.b16 %v618
      %v748 = vunpack.c.l.b16 %v628
      %v749 = vunpack.c.l.b16 %v642
      %v750 = vunpack.c.l.b16 %v652
      %v751 = vunpack.c.l.b16 %v666
      %v752 = vunpack.c.l.b16 %v676
      %v753 = vunpack.c.l.b16 %v690
      %v754 = vunpack.c.l.b16 %v700
      %v755 = vunpack.c.l.b16 %v714
      %v756 = vunpack.c.l.b16 %v724
      %v757 = vpack.c.b16 %v726, %v725
      %v758 = vpack.c.b16 %v728, %v727
      %v759 = vpack.c.b16 %v730, %v729
      %v760 = vpack.c.b16 %v732, %v731
      %v761 = vpack.c.b16 %v734, %v733
      %v762 = vpack.c.b16 %v736, %v735
      %v763 = vpack.c.b16 %v738, %v737
      %v764 = vpack.c.b16 %v740, %v739
      %v765 = vpack.c.b16 %v742, %v741
      %v766 = vpack.c.b16 %v744, %v743
      %v767 = vpack.c.b16 %v746, %v745
      %v768 = vpack.c.b16 %v748, %v747
      %v769 = vpack.c.b16 %v750, %v749
      %v770 = vpack.c.b16 %v752, %v751
      %v771 = vpack.c.b16 %v754, %v753
      %v772 = vpack.c.b16 %v756, %v755
      %773 = vrot.lane.b32.xlu0 %v757, 2
      %v774 = vpop.permute.xlu0 %773
      %775 = vrot.lane.b32.xlu0 %v758, 2
      %v776 = vpop.permute.xlu0 %775
      %777 = vrot.lane.b32.xlu0 %v759, 2
      %v778 = vpop.permute.xlu0 %777
      %779 = vrot.lane.b32.xlu0 %v760, 2
      %v780 = vpop.permute.xlu0 %779
      %781 = vrot.lane.b32.xlu0 %v761, 2
      %v782 = vpop.permute.xlu0 %781
      %783 = vrot.lane.b32.xlu0 %v762, 2
      %v784 = vpop.permute.xlu0 %783
      %785 = vrot.lane.b32.xlu0 %v763, 2
      %v786 = vpop.permute.xlu0 %785
      %787 = vrot.lane.b32.xlu0 %v764, 2
      %v788 = vpop.permute.xlu0 %787
      %789 = vrot.lane.b32.xlu0 %v765, 2
      %v790 = vpop.permute.xlu0 %789
      %791 = vrot.lane.b32.xlu0 %v766, 2
      %v792 = vpop.permute.xlu0 %791
      %793 = vrot.lane.b32.xlu0 %v767, 2
      %v794 = vpop.permute.xlu0 %793
      %795 = vrot.lane.b32.xlu0 %v768, 2
      %v796 = vpop.permute.xlu0 %795
      %797 = vrot.lane.b32.xlu0 %v769, 2
      %v798 = vpop.permute.xlu0 %797
      %799 = vrot.lane.b32.xlu0 %v770, 2
      %v800 = vpop.permute.xlu0 %799
      %801 = vrot.lane.b32.xlu0 %v771, 2
      %v802 = vpop.permute.xlu0 %801
      %803 = vrot.lane.b32.xlu0 %v772, 2
      %v804 = vpop.permute.xlu0 %803
      %vm821 = vcmask 31760
      %822 = vst.msk [vmem:[#allocation2] sm:$0xff] %vm821, %v774
      %823 = vst.msk [vmem:[#allocation2 + $0x8] sm:$0xff] %vm821, %v776
      %824 = vst.msk [vmem:[#allocation2 + $0x10] sm:$0xff] %vm821, %v778
      %825 = vst.msk [vmem:[#allocation2 + $0x18] sm:$0xff] %vm821, %v780
      %826 = vst.msk [vmem:[#allocation2 + $0x20] sm:$0xff] %vm821, %v782
      %827 = vst.msk [vmem:[#allocation2 + $0x28] sm:$0xff] %vm821, %v784
      %828 = vst.msk [vmem:[#allocation2 + $0x30] sm:$0xff] %vm821, %v786
      %829 = vst.msk [vmem:[#allocation2 + $0x38] sm:$0xff] %vm821, %v788
      %830 = vst.msk [vmem:[#allocation2 + $0x40] sm:$0xff] %vm821, %v790
      %831 = vst.msk [vmem:[#allocation2 + $0x48] sm:$0xff] %vm821, %v792
      %832 = vst.msk [vmem:[#allocation2 + $0x50] sm:$0xff] %vm821, %v794
      %833 = vst.msk [vmem:[#allocation2 + $0x58] sm:$0xff] %vm821, %v796
      %834 = vst.msk [vmem:[#allocation2 + $0x60] sm:$0xff] %vm821, %v798
      %835 = vst.msk [vmem:[#allocation2 + $0x68] sm:$0xff] %vm821, %v800
      %836 = vst.msk [vmem:[#allocation2 + $0x70] sm:$0xff] %vm821, %v802
      %837 = vst.msk [vmem:[#allocation2 + $0x78] sm:$0xff] %vm821, %v804
      %v838 = vld [vmem:[%s138] sm:$0xe]
      %v839 = vld [vmem:[%s138 + $0x4] sm:$0xf]
      %v840 = vld [vmem:[%s138 + $0x8] sm:$0x1]
      %v841 = vld [vmem:[%s138 + $0xc] sm:$0xe]
      %v842 = vld [vmem:[%s138 + $0x10] sm:$0xf]
      %v843 = vld [vmem:[%s138 + $0x14] sm:$0x1]
      %v844 = vld [vmem:[%s138 + $0x18] sm:$0xe]
      %v845 = vld [vmem:[%s138 + $0x1c] sm:$0xf]
      %v846 = vld [vmem:[%s138 + $0x20] sm:$0x1]
      %v847 = vld [vmem:[%s138 + $0x24] sm:$0xe]
      %v848 = vld [vmem:[%s138 + $0x28] sm:$0xf]
      %v849 = vld [vmem:[%s138 + $0x2c] sm:$0x1]
      %v850 = vld [vmem:[%s138 + $0x30] sm:$0xe]
      %v851 = vld [vmem:[%s138 + $0x34] sm:$0xf]
      %v852 = vld [vmem:[%s138 + $0x38] sm:$0x1]
      %v853 = vld [vmem:[%s138 + $0x3c] sm:$0xe]
      %v854 = vld [vmem:[%s138 + $0x40] sm:$0xf]
      %v855 = vld [vmem:[%s138 + $0x44] sm:$0x1]
      %v856 = vld [vmem:[%s138 + $0x48] sm:$0xe]
      %v857 = vld [vmem:[%s138 + $0x4c] sm:$0xf]
      %v858 = vld [vmem:[%s138 + $0x50] sm:$0x1]
      %v859 = vld [vmem:[%s138 + $0x54] sm:$0xe]
      %v860 = vld [vmem:[%s138 + $0x58] sm:$0xf]
      %v861 = vld [vmem:[%s138 + $0x5c] sm:$0x1]
      %v862 = vld [vmem:[%s138 + $0x60] sm:$0xe]
      %v863 = vld [vmem:[%s138 + $0x64] sm:$0xf]
      %v864 = vld [vmem:[%s138 + $0x68] sm:$0x1]
      %v865 = vld [vmem:[%s138 + $0x6c] sm:$0xe]
      %v866 = vld [vmem:[%s138 + $0x70] sm:$0xf]
      %v867 = vld [vmem:[%s138 + $0x74] sm:$0x1]
      %v868 = vld [vmem:[%s138 + $0x78] sm:$0xe]
      %v869 = vld [vmem:[%s138 + $0x7c] sm:$0xf]
      %v870 = vld [vmem:[%s138 + $0x80] sm:$0x1]
      %v871 = vld [vmem:[%s138 + $0x84] sm:$0xe]
      %v872 = vld [vmem:[%s138 + $0x88] sm:$0xf]
      %v873 = vld [vmem:[%s138 + $0x8c] sm:$0x1]
      %v874 = vld [vmem:[%s138 + $0x90] sm:$0xe]
      %v875 = vld [vmem:[%s138 + $0x94] sm:$0xf]
      %v876 = vld [vmem:[%s138 + $0x98] sm:$0x1]
      %v877 = vld [vmem:[%s138 + $0x9c] sm:$0xe]
      %v878 = vld [vmem:[%s138 + $0xa0] sm:$0xf]
      %v879 = vld [vmem:[%s138 + $0xa4] sm:$0x1]
      %v880 = vld [vmem:[%s138 + $0xa8] sm:$0xe]
      %v881 = vld [vmem:[%s138 + $0xac] sm:$0xf]
      %v882 = vld [vmem:[%s138 + $0xb0] sm:$0x1]
      %v883 = vld [vmem:[%s138 + $0xb4] sm:$0xe]
      %v884 = vld [vmem:[%s138 + $0xb8] sm:$0xf]
      %v885 = vld [vmem:[%s138 + $0xbc] sm:$0x1]
      %vm934 = vcmask 1042432
      %vm935 = vcmask 1046532
      %vm936 = vmor %vm934, %vm935
      %v937 = vrot.slane %v838, 5
      %v938 = vrot.slane %v937, 4
      %v939 = vrot.slane %v839, 5
      %v940 = vsel %vm936, %v938, %v939
      %v941 = vrot.slane %v939, 4
      %v942 = vrot.slane %v840, 5
      %v943 = vsel %vm936, %v941, %v942
      %v944 = vrot.slane %v841, 5
      %v945 = vrot.slane %v944, 4
      %v946 = vrot.slane %v842, 5
      %v947 = vsel %vm936, %v945, %v946
      %v948 = vrot.slane %v946, 4
      %v949 = vrot.slane %v843, 5
      %v950 = vsel %vm936, %v948, %v949
      %v951 = vrot.slane %v844, 5
      %v952 = vrot.slane %v951, 4
      %v953 = vrot.slane %v845, 5
      %v954 = vsel %vm936, %v952, %v953
      %v955 = vrot.slane %v953, 4
      %v956 = vrot.slane %v846, 5
      %v957 = vsel %vm936, %v955, %v956
      %v958 = vrot.slane %v847, 5
      %v959 = vrot.slane %v958, 4
      %v960 = vrot.slane %v848, 5
      %v961 = vsel %vm936, %v959, %v960
      %v962 = vrot.slane %v960, 4
      %v963 = vrot.slane %v849, 5
      %v964 = vsel %vm936, %v962, %v963
      %v965 = vrot.slane %v850, 5
      %v966 = vrot.slane %v965, 4
      %v967 = vrot.slane %v851, 5
      %v968 = vsel %vm936, %v966, %v967
      %v969 = vrot.slane %v967, 4
      %v970 = vrot.slane %v852, 5
      %v971 = vsel %vm936, %v969, %v970
      %v972 = vrot.slane %v853, 5
      %v973 = vrot.slane %v972, 4
      %v974 = vrot.slane %v854, 5
      %v975 = vsel %vm936, %v973, %v974
      %v976 = vrot.slane %v974, 4
      %v977 = vrot.slane %v855, 5
      %v978 = vsel %vm936, %v976, %v977
      %v979 = vrot.slane %v856, 5
      %v980 = vrot.slane %v979, 4
      %v981 = vrot.slane %v857, 5
      %v982 = vsel %vm936, %v980, %v981
      %v983 = vrot.slane %v981, 4
      %v984 = vrot.slane %v858, 5
      %v985 = vsel %vm936, %v983, %v984
      %v986 = vrot.slane %v859, 5
      %v987 = vrot.slane %v986, 4
      %v988 = vrot.slane %v860, 5
      %v989 = vsel %vm936, %v987, %v988
      %v990 = vrot.slane %v988, 4
      %v991 = vrot.slane %v861, 5
      %v992 = vsel %vm936, %v990, %v991
      %v993 = vrot.slane %v862, 5
      %v994 = vrot.slane %v993, 4
      %v995 = vrot.slane %v863, 5
      %v996 = vsel %vm936, %v994, %v995
      %v997 = vrot.slane %v995, 4
      %v998 = vrot.slane %v864, 5
      %v999 = vsel %vm936, %v997, %v998
      %v1000 = vrot.slane %v865, 5
      %v1001 = vrot.slane %v1000, 4
      %v1002 = vrot.slane %v866, 5
      %v1003 = vsel %vm936, %v1001, %v1002
      %v1004 = vrot.slane %v1002, 4
      %v1005 = vrot.slane %v867, 5
      %v1006 = vsel %vm936, %v1004, %v1005
      %v1007 = vrot.slane %v868, 5
      %v1008 = vrot.slane %v1007, 4
      %v1009 = vrot.slane %v869, 5
      %v1010 = vsel %vm936, %v1008, %v1009
      %v1011 = vrot.slane %v1009, 4
      %v1012 = vrot.slane %v870, 5
      %v1013 = vsel %vm936, %v1011, %v1012
      %v1014 = vrot.slane %v871, 5
      %v1015 = vrot.slane %v1014, 4
      %v1016 = vrot.slane %v872, 5
      %v1017 = vsel %vm936, %v1015, %v1016
      %v1018 = vrot.slane %v1016, 4
      %v1019 = vrot.slane %v873, 5
      %v1020 = vsel %vm936, %v1018, %v1019
      %v1021 = vrot.slane %v874, 5
      %v1022 = vrot.slane %v1021, 4
      %v1023 = vrot.slane %v875, 5
      %v1024 = vsel %vm936, %v1022, %v1023
      %v1025 = vrot.slane %v1023, 4
      %v1026 = vrot.slane %v876, 5
      %v1027 = vsel %vm936, %v1025, %v1026
      %v1028 = vrot.slane %v877, 5
      %v1029 = vrot.slane %v1028, 4
      %v1030 = vrot.slane %v878, 5
      %v1031 = vsel %vm936, %v1029, %v1030
      %v1032 = vrot.slane %v1030, 4
      %v1033 = vrot.slane %v879, 5
      %v1034 = vsel %vm936, %v1032, %v1033
      %v1035 = vrot.slane %v880, 5
      %v1036 = vrot.slane %v1035, 4
      %v1037 = vrot.slane %v881, 5
      %v1038 = vsel %vm936, %v1036, %v1037
      %v1039 = vrot.slane %v1037, 4
      %v1040 = vrot.slane %v882, 5
      %v1041 = vsel %vm936, %v1039, %v1040
      %v1042 = vrot.slane %v883, 5
      %v1043 = vrot.slane %v1042, 4
      %v1044 = vrot.slane %v884, 5
      %v1045 = vsel %vm936, %v1043, %v1044
      %v1046 = vrot.slane %v1044, 4
      %v1047 = vrot.slane %v885, 5
      %v1048 = vsel %vm936, %v1046, %v1047
      %v1049 = vunpack.c.l.b16 %v940
      %v1050 = vunpack.c.l.b16 %v943
      %v1051 = vunpack.c.l.b16 %v947
      %v1052 = vunpack.c.l.b16 %v950
      %v1053 = vunpack.c.l.b16 %v954
      %v1054 = vunpack.c.l.b16 %v957
      %v1055 = vunpack.c.l.b16 %v961
      %v1056 = vunpack.c.l.b16 %v964
      %v1057 = vunpack.c.l.b16 %v968
      %v1058 = vunpack.c.l.b16 %v971
      %v1059 = vunpack.c.l.b16 %v975
      %v1060 = vunpack.c.l.b16 %v978
      %v1061 = vunpack.c.l.b16 %v982
      %v1062 = vunpack.c.l.b16 %v985
      %v1063 = vunpack.c.l.b16 %v989
      %v1064 = vunpack.c.l.b16 %v992
      %v1065 = vunpack.c.l.b16 %v996
      %v1066 = vunpack.c.l.b16 %v999
      %v1067 = vunpack.c.l.b16 %v1003
      %v1068 = vunpack.c.l.b16 %v1006
      %v1069 = vunpack.c.l.b16 %v1010
      %v1070 = vunpack.c.l.b16 %v1013
      %v1071 = vunpack.c.l.b16 %v1017
      %v1072 = vunpack.c.l.b16 %v1020
      %v1073 = vunpack.c.l.b16 %v1024
      %v1074 = vunpack.c.l.b16 %v1027
      %v1075 = vunpack.c.l.b16 %v1031
      %v1076 = vunpack.c.l.b16 %v1034
      %v1077 = vunpack.c.l.b16 %v1038
      %v1078 = vunpack.c.l.b16 %v1041
      %v1079 = vunpack.c.l.b16 %v1045
      %v1080 = vunpack.c.l.b16 %v1048
      %v1081 = vpack.c.b16 %v1050, %v1049
      %v1082 = vpack.c.b16 %v1052, %v1051
      %v1083 = vpack.c.b16 %v1054, %v1053
      %v1084 = vpack.c.b16 %v1056, %v1055
      %v1085 = vpack.c.b16 %v1058, %v1057
      %v1086 = vpack.c.b16 %v1060, %v1059
      %v1087 = vpack.c.b16 %v1062, %v1061
      %v1088 = vpack.c.b16 %v1064, %v1063
      %v1089 = vpack.c.b16 %v1066, %v1065
      %v1090 = vpack.c.b16 %v1068, %v1067
      %v1091 = vpack.c.b16 %v1070, %v1069
      %v1092 = vpack.c.b16 %v1072, %v1071
      %v1093 = vpack.c.b16 %v1074, %v1073
      %v1094 = vpack.c.b16 %v1076, %v1075
      %v1095 = vpack.c.b16 %v1078, %v1077
      %v1096 = vpack.c.b16 %v1080, %v1079
      %1097 = vrot.lane.b32.xlu0 %v1081, 4
      %v1098 = vpop.permute.xlu0 %1097
      %1099 = vrot.lane.b32.xlu0 %v1082, 4
      %v1100 = vpop.permute.xlu0 %1099
      %1101 = vrot.lane.b32.xlu0 %v1083, 4
      %v1102 = vpop.permute.xlu0 %1101
      %1103 = vrot.lane.b32.xlu0 %v1084, 4
      %v1104 = vpop.permute.xlu0 %1103
      %1105 = vrot.lane.b32.xlu0 %v1085, 4
      %v1106 = vpop.permute.xlu0 %1105
      %1107 = vrot.lane.b32.xlu0 %v1086, 4
      %v1108 = vpop.permute.xlu0 %1107
      %1109 = vrot.lane.b32.xlu0 %v1087, 4
      %v1110 = vpop.permute.xlu0 %1109
      %1111 = vrot.lane.b32.xlu0 %v1088, 4
      %v1112 = vpop.permute.xlu0 %1111
      %1113 = vrot.lane.b32.xlu0 %v1089, 4
      %v1114 = vpop.permute.xlu0 %1113
      %1115 = vrot.lane.b32.xlu0 %v1090, 4
      %v1116 = vpop.permute.xlu0 %1115
      %1117 = vrot.lane.b32.xlu0 %v1091, 4
      %v1118 = vpop.permute.xlu0 %1117
      %1119 = vrot.lane.b32.xlu0 %v1092, 4
      %v1120 = vpop.permute.xlu0 %1119
      %1121 = vrot.lane.b32.xlu0 %v1093, 4
      %v1122 = vpop.permute.xlu0 %1121
      %1123 = vrot.lane.b32.xlu0 %v1094, 4
      %v1124 = vpop.permute.xlu0 %1123
      %1125 = vrot.lane.b32.xlu0 %v1095, 4
      %v1126 = vpop.permute.xlu0 %1125
      %1127 = vrot.lane.b32.xlu0 %v1096, 4
      %v1128 = vpop.permute.xlu0 %1127
      %vm1145 = vcmask 48160
      %1146 = vst.msk [vmem:[#allocation2] sm:$0xff] %vm1145, %v1098
      %1147 = vst.msk [vmem:[#allocation2 + $0x8] sm:$0xff] %vm1145, %v1100
      %1148 = vst.msk [vmem:[#allocation2 + $0x10] sm:$0xff] %vm1145, %v1102
      %1149 = vst.msk [vmem:[#allocation2 + $0x18] sm:$0xff] %vm1145, %v1104
      %1150 = vst.msk [vmem:[#allocation2 + $0x20] sm:$0xff] %vm1145, %v1106
      %1151 = vst.msk [vmem:[#allocation2 + $0x28] sm:$0xff] %vm1145, %v1108
      %1152 = vst.msk [vmem:[#allocation2 + $0x30] sm:$0xff] %vm1145, %v1110
      %1153 = vst.msk [vmem:[#allocation2 + $0x38] sm:$0xff] %vm1145, %v1112
      %1154 = vst.msk [vmem:[#allocation2 + $0x40] sm:$0xff] %vm1145, %v1114
      %1155 = vst.msk [vmem:[#allocation2 + $0x48] sm:$0xff] %vm1145, %v1116
      %1156 = vst.msk [vmem:[#allocation2 + $0x50] sm:$0xff] %vm1145, %v1118
      %1157 = vst.msk [vmem:[#allocation2 + $0x58] sm:$0xff] %vm1145, %v1120
      %1158 = vst.msk [vmem:[#allocation2 + $0x60] sm:$0xff] %vm1145, %v1122
      %1159 = vst.msk [vmem:[#allocation2 + $0x68] sm:$0xff] %vm1145, %v1124
      %1160 = vst.msk [vmem:[#allocation2 + $0x70] sm:$0xff] %vm1145, %v1126
      %1161 = vst.msk [vmem:[#allocation2 + $0x78] sm:$0xff] %vm1145, %v1128
      %s1162 = scalar_lea.vmem %s138, 12
      %v1163 = vld [vmem:[%s1162] sm:$0xf]
      %v1164 = vld [vmem:[%s1162 + $0x4] sm:$0xf]
      %v1165 = vld [vmem:[%s1162 + $0xc] sm:$0xf]
      %v1166 = vld [vmem:[%s1162 + $0x10] sm:$0xf]
      %v1167 = vld [vmem:[%s1162 + $0x18] sm:$0xf]
      %v1168 = vld [vmem:[%s1162 + $0x1c] sm:$0xf]
      %v1169 = vld [vmem:[%s1162 + $0x24] sm:$0xf]
      %v1170 = vld [vmem:[%s1162 + $0x28] sm:$0xf]
      %v1171 = vld [vmem:[%s1162 + $0x30] sm:$0xf]
      %v1172 = vld [vmem:[%s1162 + $0x34] sm:$0xf]
      %v1173 = vld [vmem:[%s1162 + $0x3c] sm:$0xf]
      %v1174 = vld [vmem:[%s1162 + $0x40] sm:$0xf]
      %v1175 = vld [vmem:[%s1162 + $0x48] sm:$0xf]
      %v1176 = vld [vmem:[%s1162 + $0x4c] sm:$0xf]
      %v1177 = vld [vmem:[%s1162 + $0x54] sm:$0xf]
      %v1178 = vld [vmem:[%s1162 + $0x58] sm:$0xf]
      %v1179 = vld [vmem:[%s1162 + $0x60] sm:$0xf]
      %v1180 = vld [vmem:[%s1162 + $0x64] sm:$0xf]
      %v1181 = vld [vmem:[%s1162 + $0x6c] sm:$0xf]
      %v1182 = vld [vmem:[%s1162 + $0x70] sm:$0xf]
      %v1183 = vld [vmem:[%s1162 + $0x78] sm:$0xf]
      %v1184 = vld [vmem:[%s1162 + $0x7c] sm:$0xf]
      %v1185 = vld [vmem:[%s1162 + $0x84] sm:$0xf]
      %v1186 = vld [vmem:[%s1162 + $0x88] sm:$0xf]
      %v1187 = vld [vmem:[%s1162 + $0x90] sm:$0xf]
      %v1188 = vld [vmem:[%s1162 + $0x94] sm:$0xf]
      %v1189 = vld [vmem:[%s1162 + $0x9c] sm:$0xf]
      %v1190 = vld [vmem:[%s1162 + $0xa0] sm:$0xf]
      %v1191 = vld [vmem:[%s1162 + $0xa8] sm:$0xf]
      %v1192 = vld [vmem:[%s1162 + $0xac] sm:$0xf]
      %v1193 = vld [vmem:[%s1162 + $0xb4] sm:$0xf]
      %v1194 = vld [vmem:[%s1162 + $0xb8] sm:$0xf]
      %v1227 = vunpack.c.l.b16 %v1163
      %v1228 = vunpack.c.l.b16 %v1164
      %v1229 = vunpack.c.l.b16 %v1165
      %v1230 = vunpack.c.l.b16 %v1166
      %v1231 = vunpack.c.l.b16 %v1167
      %v1232 = vunpack.c.l.b16 %v1168
      %v1233 = vunpack.c.l.b16 %v1169
      %v1234 = vunpack.c.l.b16 %v1170
      %v1235 = vunpack.c.l.b16 %v1171
      %v1236 = vunpack.c.l.b16 %v1172
      %v1237 = vunpack.c.l.b16 %v1173
      %v1238 = vunpack.c.l.b16 %v1174
      %v1239 = vunpack.c.l.b16 %v1175
      %v1240 = vunpack.c.l.b16 %v1176
      %v1241 = vunpack.c.l.b16 %v1177
      %v1242 = vunpack.c.l.b16 %v1178
      %v1243 = vunpack.c.l.b16 %v1179
      %v1244 = vunpack.c.l.b16 %v1180
      %v1245 = vunpack.c.l.b16 %v1181
      %v1246 = vunpack.c.l.b16 %v1182
      %v1247 = vunpack.c.l.b16 %v1183
      %v1248 = vunpack.c.l.b16 %v1184
      %v1249 = vunpack.c.l.b16 %v1185
      %v1250 = vunpack.c.l.b16 %v1186
      %v1251 = vunpack.c.l.b16 %v1187
      %v1252 = vunpack.c.l.b16 %v1188
      %v1253 = vunpack.c.l.b16 %v1189
      %v1254 = vunpack.c.l.b16 %v1190
      %v1255 = vunpack.c.l.b16 %v1191
      %v1256 = vunpack.c.l.b16 %v1192
      %v1257 = vunpack.c.l.b16 %v1193
      %v1258 = vunpack.c.l.b16 %v1194
      %v1259 = vpack.c.b16 %v1228, %v1227
      %v1260 = vpack.c.b16 %v1230, %v1229
      %v1261 = vpack.c.b16 %v1232, %v1231
      %v1262 = vpack.c.b16 %v1234, %v1233
      %v1263 = vpack.c.b16 %v1236, %v1235
      %v1264 = vpack.c.b16 %v1238, %v1237
      %v1265 = vpack.c.b16 %v1240, %v1239
      %v1266 = vpack.c.b16 %v1242, %v1241
      %v1267 = vpack.c.b16 %v1244, %v1243
      %v1268 = vpack.c.b16 %v1246, %v1245
      %v1269 = vpack.c.b16 %v1248, %v1247
      %v1270 = vpack.c.b16 %v1250, %v1249
      %v1271 = vpack.c.b16 %v1252, %v1251
      %v1272 = vpack.c.b16 %v1254, %v1253
      %v1273 = vpack.c.b16 %v1256, %v1255
      %v1274 = vpack.c.b16 %v1258, %v1257
      %1275 = vrot.lane.b32.xlu0 %v1259, 6
      %v1276 = vpop.permute.xlu0 %1275
      %1277 = vrot.lane.b32.xlu0 %v1260, 6
      %v1278 = vpop.permute.xlu0 %1277
      %1279 = vrot.lane.b32.xlu0 %v1261, 6
      %v1280 = vpop.permute.xlu0 %1279
      %1281 = vrot.lane.b32.xlu0 %v1262, 6
      %v1282 = vpop.permute.xlu0 %1281
      %1283 = vrot.lane.b32.xlu0 %v1263, 6
      %v1284 = vpop.permute.xlu0 %1283
      %1285 = vrot.lane.b32.xlu0 %v1264, 6
      %v1286 = vpop.permute.xlu0 %1285
      %1287 = vrot.lane.b32.xlu0 %v1265, 6
      %v1288 = vpop.permute.xlu0 %1287
      %1289 = vrot.lane.b32.xlu0 %v1266, 6
      %v1290 = vpop.permute.xlu0 %1289
      %1291 = vrot.lane.b32.xlu0 %v1267, 6
      %v1292 = vpop.permute.xlu0 %1291
      %1293 = vrot.lane.b32.xlu0 %v1268, 6
      %v1294 = vpop.permute.xlu0 %1293
      %1295 = vrot.lane.b32.xlu0 %v1269, 6
      %v1296 = vpop.permute.xlu0 %1295
      %1297 = vrot.lane.b32.xlu0 %v1270, 6
      %v1298 = vpop.permute.xlu0 %1297
      %1299 = vrot.lane.b32.xlu0 %v1271, 6
      %v1300 = vpop.permute.xlu0 %1299
      %1301 = vrot.lane.b32.xlu0 %v1272, 6
      %v1302 = vpop.permute.xlu0 %1301
      %1303 = vrot.lane.b32.xlu0 %v1273, 6
      %v1304 = vpop.permute.xlu0 %1303
      %1305 = vrot.lane.b32.xlu0 %v1274, 6
      %v1306 = vpop.permute.xlu0 %1305
      %vm1323 = vcmask 64560
      %1324 = vst.msk [vmem:[#allocation2] sm:$0xff] %vm1323, %v1276
      %1325 = vst.msk [vmem:[#allocation2 + $0x8] sm:$0xff] %vm1323, %v1278
      %1326 = vst.msk [vmem:[#allocation2 + $0x10] sm:$0xff] %vm1323, %v1280
      %1327 = vst.msk [vmem:[#allocation2 + $0x18] sm:$0xff] %vm1323, %v1282
      %1328 = vst.msk [vmem:[#allocation2 + $0x20] sm:$0xff] %vm1323, %v1284
      %1329 = vst.msk [vmem:[#allocation2 + $0x28] sm:$0xff] %vm1323, %v1286
      %1330 = vst.msk [vmem:[#allocation2 + $0x30] sm:$0xff] %vm1323, %v1288
      %1331 = vst.msk [vmem:[#allocation2 + $0x38] sm:$0xff] %vm1323, %v1290
      %1332 = vst.msk [vmem:[#allocation2 + $0x40] sm:$0xff] %vm1323, %v1292
      %1333 = vst.msk [vmem:[#allocation2 + $0x48] sm:$0xff] %vm1323, %v1294
      %1334 = vst.msk [vmem:[#allocation2 + $0x50] sm:$0xff] %vm1323, %v1296
      %1335 = vst.msk [vmem:[#allocation2 + $0x58] sm:$0xff] %vm1323, %v1298
      %1336 = vst.msk [vmem:[#allocation2 + $0x60] sm:$0xff] %vm1323, %v1300
      %1337 = vst.msk [vmem:[#allocation2 + $0x68] sm:$0xff] %vm1323, %v1302
      %1338 = vst.msk [vmem:[#allocation2 + $0x70] sm:$0xff] %vm1323, %v1304
      %1339 = vst.msk [vmem:[#allocation2 + $0x78] sm:$0xff] %vm1323, %v1306
      %v1340 = vld [vmem:[%s1162] sm:$0xf]
      %v1341 = vld [vmem:[%s1162 + $0x4] sm:$0xf]
      %v1342 = vld [vmem:[%s1162 + $0x8] sm:$0x1]
      %v1343 = vld [vmem:[%s1162 + $0xc] sm:$0xf]
      %v1344 = vld [vmem:[%s1162 + $0x10] sm:$0xf]
      %v1345 = vld [vmem:[%s1162 + $0x14] sm:$0x1]
      %v1346 = vld [vmem:[%s1162 + $0x18] sm:$0xf]
      %v1347 = vld [vmem:[%s1162 + $0x1c] sm:$0xf]
      %v1348 = vld [vmem:[%s1162 + $0x20] sm:$0x1]
      %v1349 = vld [vmem:[%s1162 + $0x24] sm:$0xf]
      %v1350 = vld [vmem:[%s1162 + $0x28] sm:$0xf]
      %v1351 = vld [vmem:[%s1162 + $0x2c] sm:$0x1]
      %v1352 = vld [vmem:[%s1162 + $0x30] sm:$0xf]
      %v1353 = vld [vmem:[%s1162 + $0x34] sm:$0xf]
      %v1354 = vld [vmem:[%s1162 + $0x38] sm:$0x1]
      %v1355 = vld [vmem:[%s1162 + $0x3c] sm:$0xf]
      %v1356 = vld [vmem:[%s1162 + $0x40] sm:$0xf]
      %v1357 = vld [vmem:[%s1162 + $0x44] sm:$0x1]
      %v1358 = vld [vmem:[%s1162 + $0x48] sm:$0xf]
      %v1359 = vld [vmem:[%s1162 + $0x4c] sm:$0xf]
      %v1360 = vld [vmem:[%s1162 + $0x50] sm:$0x1]
      %v1361 = vld [vmem:[%s1162 + $0x54] sm:$0xf]
      %v1362 = vld [vmem:[%s1162 + $0x58] sm:$0xf]
      %v1363 = vld [vmem:[%s1162 + $0x5c] sm:$0x1]
      %v1364 = vld [vmem:[%s1162 + $0x60] sm:$0xf]
      %v1365 = vld [vmem:[%s1162 + $0x64] sm:$0xf]
      %v1366 = vld [vmem:[%s1162 + $0x68] sm:$0x1]
      %v1367 = vld [vmem:[%s1162 + $0x6c] sm:$0xf]
      %v1368 = vld [vmem:[%s1162 + $0x70] sm:$0xf]
      %v1369 = vld [vmem:[%s1162 + $0x74] sm:$0x1]
      %v1370 = vld [vmem:[%s1162 + $0x78] sm:$0xf]
      %v1371 = vld [vmem:[%s1162 + $0x7c] sm:$0xf]
      %v1372 = vld [vmem:[%s1162 + $0x80] sm:$0x1]
      %v1373 = vld [vmem:[%s1162 + $0x84] sm:$0xf]
      %v1374 = vld [vmem:[%s1162 + $0x88] sm:$0xf]
      %v1375 = vld [vmem:[%s1162 + $0x8c] sm:$0x1]
      %v1376 = vld [vmem:[%s1162 + $0x90] sm:$0xf]
      %v1377 = vld [vmem:[%s1162 + $0x94] sm:$0xf]
      %v1378 = vld [vmem:[%s1162 + $0x98] sm:$0x1]
      %v1379 = vld [vmem:[%s1162 + $0x9c] sm:$0xf]
      %v1380 = vld [vmem:[%s1162 + $0xa0] sm:$0xf]
      %v1381 = vld [vmem:[%s1162 + $0xa4] sm:$0x1]
      %v1382 = vld [vmem:[%s1162 + $0xa8] sm:$0xf]
      %v1383 = vld [vmem:[%s1162 + $0xac] sm:$0xf]
      %v1384 = vld [vmem:[%s1162 + $0xb0] sm:$0x1]
      %v1385 = vld [vmem:[%s1162 + $0xb4] sm:$0xf]
      %v1386 = vld [vmem:[%s1162 + $0xb8] sm:$0xf]
      %v1387 = vld [vmem:[%s1162 + $0xbc] sm:$0x1]
      %v1389 = vshrl.u32 %v1340, 16
      %v1391 = vrot.slane %v1389, 4
      %v1392 = vshll.u32 %v1340, 16
      %v1394 = vrot.slane %v1392, 5
      %v1395 = vor.u32 %v1391, %v1394
      %v1396 = vrot.slane %v1395, 4
      %v1398 = vshll.u32 %v1341, 16
      %v1400 = vrot.slane %v1398, 5
      %v1401 = vsel %vm340, %v1396, %v1400
      %v1402 = vshrl.u32 %v1341, 16
      %v1404 = vrot.slane %v1402, 4
      %v1405 = vor.u32 %v1404, %v1400
      %v1406 = vrot.slane %v1405, 4
      %v1408 = vshll.u32 %v1342, 16
      %v1410 = vrot.slane %v1408, 5
      %v1411 = vsel %vm340, %v1406, %v1410
      %v1413 = vshrl.u32 %v1343, 16
      %v1415 = vrot.slane %v1413, 4
      %v1416 = vshll.u32 %v1343, 16
      %v1418 = vrot.slane %v1416, 5
      %v1419 = vor.u32 %v1415, %v1418
      %v1420 = vrot.slane %v1419, 4
      %v1422 = vshll.u32 %v1344, 16
      %v1424 = vrot.slane %v1422, 5
      %v1425 = vsel %vm340, %v1420, %v1424
      %v1426 = vshrl.u32 %v1344, 16
      %v1428 = vrot.slane %v1426, 4
      %v1429 = vor.u32 %v1428, %v1424
      %v1430 = vrot.slane %v1429, 4
      %v1432 = vshll.u32 %v1345, 16
      %v1434 = vrot.slane %v1432, 5
      %v1435 = vsel %vm340, %v1430, %v1434
      %v1437 = vshrl.u32 %v1346, 16
      %v1439 = vrot.slane %v1437, 4
      %v1440 = vshll.u32 %v1346, 16
      %v1442 = vrot.slane %v1440, 5
      %v1443 = vor.u32 %v1439, %v1442
      %v1444 = vrot.slane %v1443, 4
      %v1446 = vshll.u32 %v1347, 16
      %v1448 = vrot.slane %v1446, 5
      %v1449 = vsel %vm340, %v1444, %v1448
      %v1450 = vshrl.u32 %v1347, 16
      %v1452 = vrot.slane %v1450, 4
      %v1453 = vor.u32 %v1452, %v1448
      %v1454 = vrot.slane %v1453, 4
      %v1456 = vshll.u32 %v1348, 16
      %v1458 = vrot.slane %v1456, 5
      %v1459 = vsel %vm340, %v1454, %v1458
      %v1461 = vshrl.u32 %v1349, 16
      %v1463 = vrot.slane %v1461, 4
      %v1464 = vshll.u32 %v1349, 16
      %v1466 = vrot.slane %v1464, 5
      %v1467 = vor.u32 %v1463, %v1466
      %v1468 = vrot.slane %v1467, 4
      %v1470 = vshll.u32 %v1350, 16
      %v1472 = vrot.slane %v1470, 5
      %v1473 = vsel %vm340, %v1468, %v1472
      %v1474 = vshrl.u32 %v1350, 16
      %v1476 = vrot.slane %v1474, 4
      %v1477 = vor.u32 %v1476, %v1472
      %v1478 = vrot.slane %v1477, 4
      %v1480 = vshll.u32 %v1351, 16
      %v1482 = vrot.slane %v1480, 5
      %v1483 = vsel %vm340, %v1478, %v1482
      %v1485 = vshrl.u32 %v1352, 16
      %v1487 = vrot.slane %v1485, 4
      %v1488 = vshll.u32 %v1352, 16
      %v1490 = vrot.slane %v1488, 5
      %v1491 = vor.u32 %v1487, %v1490
      %v1492 = vrot.slane %v1491, 4
      %v1494 = vshll.u32 %v1353, 16
      %v1496 = vrot.slane %v1494, 5
      %v1497 = vsel %vm340, %v1492, %v1496
      %v1498 = vshrl.u32 %v1353, 16
      %v1500 = vrot.slane %v1498, 4
      %v1501 = vor.u32 %v1500, %v1496
      %v1502 = vrot.slane %v1501, 4
      %v1504 = vshll.u32 %v1354, 16
      %v1506 = vrot.slane %v1504, 5
      %v1507 = vsel %vm340, %v1502, %v1506
      %v1509 = vshrl.u32 %v1355, 16
      %v1511 = vrot.slane %v1509, 4
      %v1512 = vshll.u32 %v1355, 16
      %v1514 = vrot.slane %v1512, 5
      %v1515 = vor.u32 %v1511, %v1514
      %v1516 = vrot.slane %v1515, 4
      %v1518 = vshll.u32 %v1356, 16
      %v1520 = vrot.slane %v1518, 5
      %v1521 = vsel %vm340, %v1516, %v1520
      %v1522 = vshrl.u32 %v1356, 16
      %v1524 = vrot.slane %v1522, 4
      %v1525 = vor.u32 %v1524, %v1520
      %v1526 = vrot.slane %v1525, 4
      %v1528 = vshll.u32 %v1357, 16
      %v1530 = vrot.slane %v1528, 5
      %v1531 = vsel %vm340, %v1526, %v1530
      %v1533 = vshrl.u32 %v1358, 16
      %v1535 = vrot.slane %v1533, 4
      %v1536 = vshll.u32 %v1358, 16
      %v1538 = vrot.slane %v1536, 5
      %v1539 = vor.u32 %v1535, %v1538
      %v1540 = vrot.slane %v1539, 4
      %v1542 = vshll.u32 %v1359, 16
      %v1544 = vrot.slane %v1542, 5
      %v1545 = vsel %vm340, %v1540, %v1544
      %v1546 = vshrl.u32 %v1359, 16
      %v1548 = vrot.slane %v1546, 4
      %v1549 = vor.u32 %v1548, %v1544
      %v1550 = vrot.slane %v1549, 4
      %v1552 = vshll.u32 %v1360, 16
      %v1554 = vrot.slane %v1552, 5
      %v1555 = vsel %vm340, %v1550, %v1554
      %v1557 = vshrl.u32 %v1361, 16
      %v1559 = vrot.slane %v1557, 4
      %v1560 = vshll.u32 %v1361, 16
      %v1562 = vrot.slane %v1560, 5
      %v1563 = vor.u32 %v1559, %v1562
      %v1564 = vrot.slane %v1563, 4
      %v1566 = vshll.u32 %v1362, 16
      %v1568 = vrot.slane %v1566, 5
      %v1569 = vsel %vm340, %v1564, %v1568
      %v1570 = vshrl.u32 %v1362, 16
      %v1572 = vrot.slane %v1570, 4
      %v1573 = vor.u32 %v1572, %v1568
      %v1574 = vrot.slane %v1573, 4
      %v1576 = vshll.u32 %v1363, 16
      %v1578 = vrot.slane %v1576, 5
      %v1579 = vsel %vm340, %v1574, %v1578
      %v1581 = vshrl.u32 %v1364, 16
      %v1583 = vrot.slane %v1581, 4
      %v1584 = vshll.u32 %v1364, 16
      %v1586 = vrot.slane %v1584, 5
      %v1587 = vor.u32 %v1583, %v1586
      %v1588 = vrot.slane %v1587, 4
      %v1590 = vshll.u32 %v1365, 16
      %v1592 = vrot.slane %v1590, 5
      %v1593 = vsel %vm340, %v1588, %v1592
      %v1594 = vshrl.u32 %v1365, 16
      %v1596 = vrot.slane %v1594, 4
      %v1597 = vor.u32 %v1596, %v1592
      %v1598 = vrot.slane %v1597, 4
      %v1600 = vshll.u32 %v1366, 16
      %v1602 = vrot.slane %v1600, 5
      %v1603 = vsel %vm340, %v1598, %v1602
      %v1605 = vshrl.u32 %v1367, 16
      %v1607 = vrot.slane %v1605, 4
      %v1608 = vshll.u32 %v1367, 16
      %v1610 = vrot.slane %v1608, 5
      %v1611 = vor.u32 %v1607, %v1610
      %v1612 = vrot.slane %v1611, 4
      %v1614 = vshll.u32 %v1368, 16
      %v1616 = vrot.slane %v1614, 5
      %v1617 = vsel %vm340, %v1612, %v1616
      %v1618 = vshrl.u32 %v1368, 16
      %v1620 = vrot.slane %v1618, 4
      %v1621 = vor.u32 %v1620, %v1616
      %v1622 = vrot.slane %v1621, 4
      %v1624 = vshll.u32 %v1369, 16
      %v1626 = vrot.slane %v1624, 5
      %v1627 = vsel %vm340, %v1622, %v1626
      %v1629 = vshrl.u32 %v1370, 16
      %v1631 = vrot.slane %v1629, 4
      %v1632 = vshll.u32 %v1370, 16
      %v1634 = vrot.slane %v1632, 5
      %v1635 = vor.u32 %v1631, %v1634
      %v1636 = vrot.slane %v1635, 4
      %v1638 = vshll.u32 %v1371, 16
      %v1640 = vrot.slane %v1638, 5
      %v1641 = vsel %vm340, %v1636, %v1640
      %v1642 = vshrl.u32 %v1371, 16
      %v1644 = vrot.slane %v1642, 4
      %v1645 = vor.u32 %v1644, %v1640
      %v1646 = vrot.slane %v1645, 4
      %v1648 = vshll.u32 %v1372, 16
      %v1650 = vrot.slane %v1648, 5
      %v1651 = vsel %vm340, %v1646, %v1650
      %v1653 = vshrl.u32 %v1373, 16
      %v1655 = vrot.slane %v1653, 4
      %v1656 = vshll.u32 %v1373, 16
      %v1658 = vrot.slane %v1656, 5
      %v1659 = vor.u32 %v1655, %v1658
      %v1660 = vrot.slane %v1659, 4
      %v1662 = vshll.u32 %v1374, 16
      %v1664 = vrot.slane %v1662, 5
      %v1665 = vsel %vm340, %v1660, %v1664
      %v1666 = vshrl.u32 %v1374, 16
      %v1668 = vrot.slane %v1666, 4
      %v1669 = vor.u32 %v1668, %v1664
      %v1670 = vrot.slane %v1669, 4
      %v1672 = vshll.u32 %v1375, 16
      %v1674 = vrot.slane %v1672, 5
      %v1675 = vsel %vm340, %v1670, %v1674
      %v1677 = vshrl.u32 %v1376, 16
      %v1679 = vrot.slane %v1677, 4
      %v1680 = vshll.u32 %v1376, 16
      %v1682 = vrot.slane %v1680, 5
      %v1683 = vor.u32 %v1679, %v1682
      %v1684 = vrot.slane %v1683, 4
      %v1686 = vshll.u32 %v1377, 16
      %v1688 = vrot.slane %v1686, 5
      %v1689 = vsel %vm340, %v1684, %v1688
      %v1690 = vshrl.u32 %v1377, 16
      %v1692 = vrot.slane %v1690, 4
      %v1693 = vor.u32 %v1692, %v1688
      %v1694 = vrot.slane %v1693, 4
      %v1696 = vshll.u32 %v1378, 16
      %v1698 = vrot.slane %v1696, 5
      %v1699 = vsel %vm340, %v1694, %v1698
      %v1701 = vshrl.u32 %v1379, 16
      %v1703 = vrot.slane %v1701, 4
      %v1704 = vshll.u32 %v1379, 16
      %v1706 = vrot.slane %v1704, 5
      %v1707 = vor.u32 %v1703, %v1706
      %v1708 = vrot.slane %v1707, 4
      %v1710 = vshll.u32 %v1380, 16
      %v1712 = vrot.slane %v1710, 5
      %v1713 = vsel %vm340, %v1708, %v1712
      %v1714 = vshrl.u32 %v1380, 16
      %v1716 = vrot.slane %v1714, 4
      %v1717 = vor.u32 %v1716, %v1712
      %v1718 = vrot.slane %v1717, 4
      %v1720 = vshll.u32 %v1381, 16
      %v1722 = vrot.slane %v1720, 5
      %v1723 = vsel %vm340, %v1718, %v1722
      %v1725 = vshrl.u32 %v1382, 16
      %v1727 = vrot.slane %v1725, 4
      %v1728 = vshll.u32 %v1382, 16
      %v1730 = vrot.slane %v1728, 5
      %v1731 = vor.u32 %v1727, %v1730
      %v1732 = vrot.slane %v1731, 4
      %v1734 = vshll.u32 %v1383, 16
      %v1736 = vrot.slane %v1734, 5
      %v1737 = vsel %vm340, %v1732, %v1736
      %v1738 = vshrl.u32 %v1383, 16
      %v1740 = vrot.slane %v1738, 4
      %v1741 = vor.u32 %v1740, %v1736
      %v1742 = vrot.slane %v1741, 4
      %v1744 = vshll.u32 %v1384, 16
      %v1746 = vrot.slane %v1744, 5
      %v1747 = vsel %vm340, %v1742, %v1746
      %v1749 = vshrl.u32 %v1385, 16
      %v1751 = vrot.slane %v1749, 4
      %v1752 = vshll.u32 %v1385, 16
      %v1754 = vrot.slane %v1752, 5
      %v1755 = vor.u32 %v1751, %v1754
      %v1756 = vrot.slane %v1755, 4
      %v1758 = vshll.u32 %v1386, 16
      %v1760 = vrot.slane %v1758, 5
      %v1761 = vsel %vm340, %v1756, %v1760
      %v1762 = vshrl.u32 %v1386, 16
      %v1764 = vrot.slane %v1762, 4
      %v1765 = vor.u32 %v1764, %v1760
      %v1766 = vrot.slane %v1765, 4
      %v1768 = vshll.u32 %v1387, 16
      %v1770 = vrot.slane %v1768, 5
      %v1771 = vsel %vm340, %v1766, %v1770
      %v1772 = vunpack.c.l.b16 %v1401
      %v1773 = vunpack.c.l.b16 %v1411
      %v1774 = vunpack.c.l.b16 %v1425
      %v1775 = vunpack.c.l.b16 %v1435
      %v1776 = vunpack.c.l.b16 %v1449
      %v1777 = vunpack.c.l.b16 %v1459
      %v1778 = vunpack.c.l.b16 %v1473
      %v1779 = vunpack.c.l.b16 %v1483
      %v1780 = vunpack.c.l.b16 %v1497
      %v1781 = vunpack.c.l.b16 %v1507
      %v1782 = vunpack.c.l.b16 %v1521
      %v1783 = vunpack.c.l.b16 %v1531
      %v1784 = vunpack.c.l.b16 %v1545
      %v1785 = vunpack.c.l.b16 %v1555
      %v1786 = vunpack.c.l.b16 %v1569
      %v1787 = vunpack.c.l.b16 %v1579
      %v1788 = vunpack.c.l.b16 %v1593
      %v1789 = vunpack.c.l.b16 %v1603
      %v1790 = vunpack.c.l.b16 %v1617
      %v1791 = vunpack.c.l.b16 %v1627
      %v1792 = vunpack.c.l.b16 %v1641
      %v1793 = vunpack.c.l.b16 %v1651
      %v1794 = vunpack.c.l.b16 %v1665
      %v1795 = vunpack.c.l.b16 %v1675
      %v1796 = vunpack.c.l.b16 %v1689
      %v1797 = vunpack.c.l.b16 %v1699
      %v1798 = vunpack.c.l.b16 %v1713
      %v1799 = vunpack.c.l.b16 %v1723
      %v1800 = vunpack.c.l.b16 %v1737
      %v1801 = vunpack.c.l.b16 %v1747
      %v1802 = vunpack.c.l.b16 %v1761
      %v1803 = vunpack.c.l.b16 %v1771
      %v1804 = vpack.c.b16 %v1773, %v1772
      %v1805 = vpack.c.b16 %v1775, %v1774
      %v1806 = vpack.c.b16 %v1777, %v1776
      %v1807 = vpack.c.b16 %v1779, %v1778
      %v1808 = vpack.c.b16 %v1781, %v1780
      %v1809 = vpack.c.b16 %v1783, %v1782
      %v1810 = vpack.c.b16 %v1785, %v1784
      %v1811 = vpack.c.b16 %v1787, %v1786
      %v1812 = vpack.c.b16 %v1789, %v1788
      %v1813 = vpack.c.b16 %v1791, %v1790
      %v1814 = vpack.c.b16 %v1793, %v1792
      %v1815 = vpack.c.b16 %v1795, %v1794
      %v1816 = vpack.c.b16 %v1797, %v1796
      %v1817 = vpack.c.b16 %v1799, %v1798
      %v1818 = vpack.c.b16 %v1801, %v1800
      %v1819 = vpack.c.b16 %v1803, %v1802
      %1820 = vrot.lane.b32.xlu0 %v1804, 8
      %v1821 = vpop.permute.xlu0 %1820
      %1822 = vrot.lane.b32.xlu0 %v1805, 8
      %v1823 = vpop.permute.xlu0 %1822
      %1824 = vrot.lane.b32.xlu0 %v1806, 8
      %v1825 = vpop.permute.xlu0 %1824
      %1826 = vrot.lane.b32.xlu0 %v1807, 8
      %v1827 = vpop.permute.xlu0 %1826
      %1828 = vrot.lane.b32.xlu0 %v1808, 8
      %v1829 = vpop.permute.xlu0 %1828
      %1830 = vrot.lane.b32.xlu0 %v1809, 8
      %v1831 = vpop.permute.xlu0 %1830
      %1832 = vrot.lane.b32.xlu0 %v1810, 8
      %v1833 = vpop.permute.xlu0 %1832
      %1834 = vrot.lane.b32.xlu0 %v1811, 8
      %v1835 = vpop.permute.xlu0 %1834
      %1836 = vrot.lane.b32.xlu0 %v1812, 8
      %v1837 = vpop.permute.xlu0 %1836
      %1838 = vrot.lane.b32.xlu0 %v1813, 8
      %v1839 = vpop.permute.xlu0 %1838
      %1840 = vrot.lane.b32.xlu0 %v1814, 8
      %v1841 = vpop.permute.xlu0 %1840
      %1842 = vrot.lane.b32.xlu0 %v1815, 8
      %v1843 = vpop.permute.xlu0 %1842
      %1844 = vrot.lane.b32.xlu0 %v1816, 8
      %v1845 = vpop.permute.xlu0 %1844
      %1846 = vrot.lane.b32.xlu0 %v1817, 8
      %v1847 = vpop.permute.xlu0 %1846
      %1848 = vrot.lane.b32.xlu0 %v1818, 8
      %v1849 = vpop.permute.xlu0 %1848
      %1850 = vrot.lane.b32.xlu0 %v1819, 8
      %v1851 = vpop.permute.xlu0 %1850
      %vm1868 = vcmask 80960
      %1869 = vst.msk [vmem:[#allocation2] sm:$0xff] %vm1868, %v1821
      %1870 = vst.msk [vmem:[#allocation2 + $0x8] sm:$0xff] %vm1868, %v1823
      %1871 = vst.msk [vmem:[#allocation2 + $0x10] sm:$0xff] %vm1868, %v1825
      %1872 = vst.msk [vmem:[#allocation2 + $0x18] sm:$0xff] %vm1868, %v1827
      %1873 = vst.msk [vmem:[#allocation2 + $0x20] sm:$0xff] %vm1868, %v1829
      %1874 = vst.msk [vmem:[#allocation2 + $0x28] sm:$0xff] %vm1868, %v1831
      %1875 = vst.msk [vmem:[#allocation2 + $0x30] sm:$0xff] %vm1868, %v1833
      %1876 = vst.msk [vmem:[#allocation2 + $0x38] sm:$0xff] %vm1868, %v1835
      %1877 = vst.msk [vmem:[#allocation2 + $0x40] sm:$0xff] %vm1868, %v1837
      %1878 = vst.msk [vmem:[#allocation2 + $0x48] sm:$0xff] %vm1868, %v1839
      %1879 = vst.msk [vmem:[#allocation2 + $0x50] sm:$0xff] %vm1868, %v1841
      %1880 = vst.msk [vmem:[#allocation2 + $0x58] sm:$0xff] %vm1868, %v1843
      %1881 = vst.msk [vmem:[#allocation2 + $0x60] sm:$0xff] %vm1868, %v1845
      %1882 = vst.msk [vmem:[#allocation2 + $0x68] sm:$0xff] %vm1868, %v1847
      %1883 = vst.msk [vmem:[#allocation2 + $0x70] sm:$0xff] %vm1868, %v1849
      %1884 = vst.msk [vmem:[#allocation2 + $0x78] sm:$0xff] %vm1868, %v1851
      %v1885 = vld [vmem:[%s1162] sm:$0xe]
      %v1886 = vld [vmem:[%s1162 + $0x4] sm:$0xf]
      %v1887 = vld [vmem:[%s1162 + $0x8] sm:$0x1]
      %v1888 = vld [vmem:[%s1162 + $0xc] sm:$0xe]
      %v1889 = vld [vmem:[%s1162 + $0x10] sm:$0xf]
      %v1890 = vld [vmem:[%s1162 + $0x14] sm:$0x1]
      %v1891 = vld [vmem:[%s1162 + $0x18] sm:$0xe]
      %v1892 = vld [vmem:[%s1162 + $0x1c] sm:$0xf]
      %v1893 = vld [vmem:[%s1162 + $0x20] sm:$0x1]
      %v1894 = vld [vmem:[%s1162 + $0x24] sm:$0xe]
      %v1895 = vld [vmem:[%s1162 + $0x28] sm:$0xf]
      %v1896 = vld [vmem:[%s1162 + $0x2c] sm:$0x1]
      %v1897 = vld [vmem:[%s1162 + $0x30] sm:$0xe]
      %v1898 = vld [vmem:[%s1162 + $0x34] sm:$0xf]
      %v1899 = vld [vmem:[%s1162 + $0x38] sm:$0x1]
      %v1900 = vld [vmem:[%s1162 + $0x3c] sm:$0xe]
      %v1901 = vld [vmem:[%s1162 + $0x40] sm:$0xf]
      %v1902 = vld [vmem:[%s1162 + $0x44] sm:$0x1]
      %v1903 = vld [vmem:[%s1162 + $0x48] sm:$0xe]
      %v1904 = vld [vmem:[%s1162 + $0x4c] sm:$0xf]
      %v1905 = vld [vmem:[%s1162 + $0x50] sm:$0x1]
      %v1906 = vld [vmem:[%s1162 + $0x54] sm:$0xe]
      %v1907 = vld [vmem:[%s1162 + $0x58] sm:$0xf]
      %v1908 = vld [vmem:[%s1162 + $0x5c] sm:$0x1]
      %v1909 = vld [vmem:[%s1162 + $0x60] sm:$0xe]
      %v1910 = vld [vmem:[%s1162 + $0x64] sm:$0xf]
      %v1911 = vld [vmem:[%s1162 + $0x68] sm:$0x1]
      %v1912 = vld [vmem:[%s1162 + $0x6c] sm:$0xe]
      %v1913 = vld [vmem:[%s1162 + $0x70] sm:$0xf]
      %v1914 = vld [vmem:[%s1162 + $0x74] sm:$0x1]
      %v1915 = vld [vmem:[%s1162 + $0x78] sm:$0xe]
      %v1916 = vld [vmem:[%s1162 + $0x7c] sm:$0xf]
      %v1917 = vld [vmem:[%s1162 + $0x80] sm:$0x1]
      %v1918 = vld [vmem:[%s1162 + $0x84] sm:$0xe]
      %v1919 = vld [vmem:[%s1162 + $0x88] sm:$0xf]
      %v1920 = vld [vmem:[%s1162 + $0x8c] sm:$0x1]
      %v1921 = vld [vmem:[%s1162 + $0x90] sm:$0xe]
      %v1922 = vld [vmem:[%s1162 + $0x94] sm:$0xf]
      %v1923 = vld [vmem:[%s1162 + $0x98] sm:$0x1]
      %v1924 = vld [vmem:[%s1162 + $0x9c] sm:$0xe]
      %v1925 = vld [vmem:[%s1162 + $0xa0] sm:$0xf]
      %v1926 = vld [vmem:[%s1162 + $0xa4] sm:$0x1]
      %v1927 = vld [vmem:[%s1162 + $0xa8] sm:$0xe]
      %v1928 = vld [vmem:[%s1162 + $0xac] sm:$0xf]
      %v1929 = vld [vmem:[%s1162 + $0xb0] sm:$0x1]
      %v1930 = vld [vmem:[%s1162 + $0xb4] sm:$0xe]
      %v1931 = vld [vmem:[%s1162 + $0xb8] sm:$0xf]
      %v1932 = vld [vmem:[%s1162 + $0xbc] sm:$0x1]
      %v1981 = vrot.slane %v1885, 5
      %v1982 = vrot.slane %v1981, 4
      %v1983 = vrot.slane %v1886, 5
      %v1984 = vsel %vm936, %v1982, %v1983
      %v1985 = vrot.slane %v1983, 4
      %v1986 = vrot.slane %v1887, 5
      %v1987 = vsel %vm936, %v1985, %v1986
      %v1988 = vrot.slane %v1888, 5
      %v1989 = vrot.slane %v1988, 4
      %v1990 = vrot.slane %v1889, 5
      %v1991 = vsel %vm936, %v1989, %v1990
      %v1992 = vrot.slane %v1990, 4
      %v1993 = vrot.slane %v1890, 5
      %v1994 = vsel %vm936, %v1992, %v1993
      %v1995 = vrot.slane %v1891, 5
      %v1996 = vrot.slane %v1995, 4
      %v1997 = vrot.slane %v1892, 5
      %v1998 = vsel %vm936, %v1996, %v1997
      %v1999 = vrot.slane %v1997, 4
      %v2000 = vrot.slane %v1893, 5
      %v2001 = vsel %vm936, %v1999, %v2000
      %v2002 = vrot.slane %v1894, 5
      %v2003 = vrot.slane %v2002, 4
      %v2004 = vrot.slane %v1895, 5
      %v2005 = vsel %vm936, %v2003, %v2004
      %v2006 = vrot.slane %v2004, 4
      %v2007 = vrot.slane %v1896, 5
      %v2008 = vsel %vm936, %v2006, %v2007
      %v2009 = vrot.slane %v1897, 5
      %v2010 = vrot.slane %v2009, 4
      %v2011 = vrot.slane %v1898, 5
      %v2012 = vsel %vm936, %v2010, %v2011
      %v2013 = vrot.slane %v2011, 4
      %v2014 = vrot.slane %v1899, 5
      %v2015 = vsel %vm936, %v2013, %v2014
      %v2016 = vrot.slane %v1900, 5
      %v2017 = vrot.slane %v2016, 4
      %v2018 = vrot.slane %v1901, 5
      %v2019 = vsel %vm936, %v2017, %v2018
      %v2020 = vrot.slane %v2018, 4
      %v2021 = vrot.slane %v1902, 5
      %v2022 = vsel %vm936, %v2020, %v2021
      %v2023 = vrot.slane %v1903, 5
      %v2024 = vrot.slane %v2023, 4
      %v2025 = vrot.slane %v1904, 5
      %v2026 = vsel %vm936, %v2024, %v2025
      %v2027 = vrot.slane %v2025, 4
      %v2028 = vrot.slane %v1905, 5
      %v2029 = vsel %vm936, %v2027, %v2028
      %v2030 = vrot.slane %v1906, 5
      %v2031 = vrot.slane %v2030, 4
      %v2032 = vrot.slane %v1907, 5
      %v2033 = vsel %vm936, %v2031, %v2032
      %v2034 = vrot.slane %v2032, 4
      %v2035 = vrot.slane %v1908, 5
      %v2036 = vsel %vm936, %v2034, %v2035
      %v2037 = vrot.slane %v1909, 5
      %v2038 = vrot.slane %v2037, 4
      %v2039 = vrot.slane %v1910, 5
      %v2040 = vsel %vm936, %v2038, %v2039
      %v2041 = vrot.slane %v2039, 4
      %v2042 = vrot.slane %v1911, 5
      %v2043 = vsel %vm936, %v2041, %v2042
      %v2044 = vrot.slane %v1912, 5
      %v2045 = vrot.slane %v2044, 4
      %v2046 = vrot.slane %v1913, 5
      %v2047 = vsel %vm936, %v2045, %v2046
      %v2048 = vrot.slane %v2046, 4
      %v2049 = vrot.slane %v1914, 5
      %v2050 = vsel %vm936, %v2048, %v2049
      %v2051 = vrot.slane %v1915, 5
      %v2052 = vrot.slane %v2051, 4
      %v2053 = vrot.slane %v1916, 5
      %v2054 = vsel %vm936, %v2052, %v2053
      %v2055 = vrot.slane %v2053, 4
      %v2056 = vrot.slane %v1917, 5
      %v2057 = vsel %vm936, %v2055, %v2056
      %v2058 = vrot.slane %v1918, 5
      %v2059 = vrot.slane %v2058, 4
      %v2060 = vrot.slane %v1919, 5
      %v2061 = vsel %vm936, %v2059, %v2060
      %v2062 = vrot.slane %v2060, 4
      %v2063 = vrot.slane %v1920, 5
      %v2064 = vsel %vm936, %v2062, %v2063
      %v2065 = vrot.slane %v1921, 5
      %v2066 = vrot.slane %v2065, 4
      %v2067 = vrot.slane %v1922, 5
      %v2068 = vsel %vm936, %v2066, %v2067
      %v2069 = vrot.slane %v2067, 4
      %v2070 = vrot.slane %v1923, 5
      %v2071 = vsel %vm936, %v2069, %v2070
      %v2072 = vrot.slane %v1924, 5
      %v2073 = vrot.slane %v2072, 4
      %v2074 = vrot.slane %v1925, 5
      %v2075 = vsel %vm936, %v2073, %v2074
      %v2076 = vrot.slane %v2074, 4
      %v2077 = vrot.slane %v1926, 5
      %v2078 = vsel %vm936, %v2076, %v2077
      %v2079 = vrot.slane %v1927, 5
      %v2080 = vrot.slane %v2079, 4
      %v2081 = vrot.slane %v1928, 5
      %v2082 = vsel %vm936, %v2080, %v2081
      %v2083 = vrot.slane %v2081, 4
      %v2084 = vrot.slane %v1929, 5
      %v2085 = vsel %vm936, %v2083, %v2084
      %v2086 = vrot.slane %v1930, 5
      %v2087 = vrot.slane %v2086, 4
      %v2088 = vrot.slane %v1931, 5
      %v2089 = vsel %vm936, %v2087, %v2088
      %v2090 = vrot.slane %v2088, 4
      %v2091 = vrot.slane %v1932, 5
      %v2092 = vsel %vm936, %v2090, %v2091
      %v2093 = vunpack.c.l.b16 %v1984
      %v2094 = vunpack.c.l.b16 %v1987
      %v2095 = vunpack.c.l.b16 %v1991
      %v2096 = vunpack.c.l.b16 %v1994
      %v2097 = vunpack.c.l.b16 %v1998
      %v2098 = vunpack.c.l.b16 %v2001
      %v2099 = vunpack.c.l.b16 %v2005
      %v2100 = vunpack.c.l.b16 %v2008
      %v2101 = vunpack.c.l.b16 %v2012
      %v2102 = vunpack.c.l.b16 %v2015
      %v2103 = vunpack.c.l.b16 %v2019
      %v2104 = vunpack.c.l.b16 %v2022
      %v2105 = vunpack.c.l.b16 %v2026
      %v2106 = vunpack.c.l.b16 %v2029
      %v2107 = vunpack.c.l.b16 %v2033
      %v2108 = vunpack.c.l.b16 %v2036
      %v2109 = vunpack.c.l.b16 %v2040
      %v2110 = vunpack.c.l.b16 %v2043
      %v2111 = vunpack.c.l.b16 %v2047
      %v2112 = vunpack.c.l.b16 %v2050
      %v2113 = vunpack.c.l.b16 %v2054
      %v2114 = vunpack.c.l.b16 %v2057
      %v2115 = vunpack.c.l.b16 %v2061
      %v2116 = vunpack.c.l.b16 %v2064
      %v2117 = vunpack.c.l.b16 %v2068
      %v2118 = vunpack.c.l.b16 %v2071
      %v2119 = vunpack.c.l.b16 %v2075
      %v2120 = vunpack.c.l.b16 %v2078
      %v2121 = vunpack.c.l.b16 %v2082
      %v2122 = vunpack.c.l.b16 %v2085
      %v2123 = vunpack.c.l.b16 %v2089
      %v2124 = vunpack.c.l.b16 %v2092
      %v2125 = vpack.c.b16 %v2094, %v2093
      %v2126 = vpack.c.b16 %v2096, %v2095
      %v2127 = vpack.c.b16 %v2098, %v2097
      %v2128 = vpack.c.b16 %v2100, %v2099
      %v2129 = vpack.c.b16 %v2102, %v2101
      %v2130 = vpack.c.b16 %v2104, %v2103
      %v2131 = vpack.c.b16 %v2106, %v2105
      %v2132 = vpack.c.b16 %v2108, %v2107
      %v2133 = vpack.c.b16 %v2110, %v2109
      %v2134 = vpack.c.b16 %v2112, %v2111
      %v2135 = vpack.c.b16 %v2114, %v2113
      %v2136 = vpack.c.b16 %v2116, %v2115
      %v2137 = vpack.c.b16 %v2118, %v2117
      %v2138 = vpack.c.b16 %v2120, %v2119
      %v2139 = vpack.c.b16 %v2122, %v2121
      %v2140 = vpack.c.b16 %v2124, %v2123
      %2141 = vrot.lane.b32.xlu0 %v2125, 10
      %v2142 = vpop.permute.xlu0 %2141
      %2143 = vrot.lane.b32.xlu0 %v2126, 10
      %v2144 = vpop.permute.xlu0 %2143
      %2145 = vrot.lane.b32.xlu0 %v2127, 10
      %v2146 = vpop.permute.xlu0 %2145
      %2147 = vrot.lane.b32.xlu0 %v2128, 10
      %v2148 = vpop.permute.xlu0 %2147
      %2149 = vrot.lane.b32.xlu0 %v2129, 10
      %v2150 = vpop.permute.xlu0 %2149
      %2151 = vrot.lane.b32.xlu0 %v2130, 10
      %v2152 = vpop.permute.xlu0 %2151
      %2153 = vrot.lane.b32.xlu0 %v2131, 10
      %v2154 = vpop.permute.xlu0 %2153
      %2155 = vrot.lane.b32.xlu0 %v2132, 10
      %v2156 = vpop.permute.xlu0 %2155
      %2157 = vrot.lane.b32.xlu0 %v2133, 10
      %v2158 = vpop.permute.xlu0 %2157
      %2159 = vrot.lane.b32.xlu0 %v2134, 10
      %v2160 = vpop.permute.xlu0 %2159
      %2161 = vrot.lane.b32.xlu0 %v2135, 10
      %v2162 = vpop.permute.xlu0 %2161
      %2163 = vrot.lane.b32.xlu0 %v2136, 10
      %v2164 = vpop.permute.xlu0 %2163
      %2165 = vrot.lane.b32.xlu0 %v2137, 10
      %v2166 = vpop.permute.xlu0 %2165
      %2167 = vrot.lane.b32.xlu0 %v2138, 10
      %v2168 = vpop.permute.xlu0 %2167
      %2169 = vrot.lane.b32.xlu0 %v2139, 10
      %v2170 = vpop.permute.xlu0 %2169
      %2171 = vrot.lane.b32.xlu0 %v2140, 10
      %v2172 = vpop.permute.xlu0 %2171
      %vm2189 = vcmask 97360
      %2190 = vst.msk [vmem:[#allocation2] sm:$0xff] %vm2189, %v2142
      %2191 = vst.msk [vmem:[#allocation2 + $0x8] sm:$0xff] %vm2189, %v2144
      %2192 = vst.msk [vmem:[#allocation2 + $0x10] sm:$0xff] %vm2189, %v2146
      %2193 = vst.msk [vmem:[#allocation2 + $0x18] sm:$0xff] %vm2189, %v2148
      %2194 = vst.msk [vmem:[#allocation2 + $0x20] sm:$0xff] %vm2189, %v2150
      %2195 = vst.msk [vmem:[#allocation2 + $0x28] sm:$0xff] %vm2189, %v2152
      %2196 = vst.msk [vmem:[#allocation2 + $0x30] sm:$0xff] %vm2189, %v2154
      %2197 = vst.msk [vmem:[#allocation2 + $0x38] sm:$0xff] %vm2189, %v2156
      %2198 = vst.msk [vmem:[#allocation2 + $0x40] sm:$0xff] %vm2189, %v2158
      %2199 = vst.msk [vmem:[#allocation2 + $0x48] sm:$0xff] %vm2189, %v2160
      %2200 = vst.msk [vmem:[#allocation2 + $0x50] sm:$0xff] %vm2189, %v2162
      %2201 = vst.msk [vmem:[#allocation2 + $0x58] sm:$0xff] %vm2189, %v2164
      %2202 = vst.msk [vmem:[#allocation2 + $0x60] sm:$0xff] %vm2189, %v2166
      %2203 = vst.msk [vmem:[#allocation2 + $0x68] sm:$0xff] %vm2189, %v2168
      %2204 = vst.msk [vmem:[#allocation2 + $0x70] sm:$0xff] %vm2189, %v2170
      %2205 = vst.msk [vmem:[#allocation2 + $0x78] sm:$0xff] %vm2189, %v2172
      %s2206 = scalar_lea.vmem %s138, 24
      %v2207 = vld [vmem:[%s2206] sm:$0xf]
      %v2208 = vld [vmem:[%s2206 + $0x4] sm:$0xf]
      %v2209 = vld [vmem:[%s2206 + $0xc] sm:$0xf]
      %v2210 = vld [vmem:[%s2206 + $0x10] sm:$0xf]
      %v2211 = vld [vmem:[%s2206 + $0x18] sm:$0xf]
      %v2212 = vld [vmem:[%s2206 + $0x1c] sm:$0xf]
      %v2213 = vld [vmem:[%s2206 + $0x24] sm:$0xf]
      %v2214 = vld [vmem:[%s2206 + $0x28] sm:$0xf]
      %v2215 = vld [vmem:[%s2206 + $0x30] sm:$0xf]
      %v2216 = vld [vmem:[%s2206 + $0x34] sm:$0xf]
      %v2217 = vld [vmem:[%s2206 + $0x3c] sm:$0xf]
      %v2218 = vld [vmem:[%s2206 + $0x40] sm:$0xf]
      %v2219 = vld [vmem:[%s2206 + $0x48] sm:$0xf]
      %v2220 = vld [vmem:[%s2206 + $0x4c] sm:$0xf]
      %v2221 = vld [vmem:[%s2206 + $0x54] sm:$0xf]
      %v2222 = vld [vmem:[%s2206 + $0x58] sm:$0xf]
      %v2223 = vld [vmem:[%s2206 + $0x60] sm:$0xf]
      %v2224 = vld [vmem:[%s2206 + $0x64] sm:$0xf]
      %v2225 = vld [vmem:[%s2206 + $0x6c] sm:$0xf]
      %v2226 = vld [vmem:[%s2206 + $0x70] sm:$0xf]
      %v2227 = vld [vmem:[%s2206 + $0x78] sm:$0xf]
      %v2228 = vld [vmem:[%s2206 + $0x7c] sm:$0xf]
      %v2229 = vld [vmem:[%s2206 + $0x84] sm:$0xf]
      %v2230 = vld [vmem:[%s2206 + $0x88] sm:$0xf]
      %v2231 = vld [vmem:[%s2206 + $0x90] sm:$0xf]
      %v2232 = vld [vmem:[%s2206 + $0x94] sm:$0xf]
      %v2233 = vld [vmem:[%s2206 + $0x9c] sm:$0xf]
      %v2234 = vld [vmem:[%s2206 + $0xa0] sm:$0xf]
      %v2235 = vld [vmem:[%s2206 + $0xa8] sm:$0xf]
      %v2236 = vld [vmem:[%s2206 + $0xac] sm:$0xf]
      %v2237 = vld [vmem:[%s2206 + $0xb4] sm:$0xf]
      %v2238 = vld [vmem:[%s2206 + $0xb8] sm:$0xf]
      %v2271 = vunpack.c.l.b16 %v2207
      %v2272 = vunpack.c.l.b16 %v2208
      %v2273 = vunpack.c.l.b16 %v2209
      %v2274 = vunpack.c.l.b16 %v2210
      %v2275 = vunpack.c.l.b16 %v2211
      %v2276 = vunpack.c.l.b16 %v2212
      %v2277 = vunpack.c.l.b16 %v2213
      %v2278 = vunpack.c.l.b16 %v2214
      %v2279 = vunpack.c.l.b16 %v2215
      %v2280 = vunpack.c.l.b16 %v2216
      %v2281 = vunpack.c.l.b16 %v2217
      %v2282 = vunpack.c.l.b16 %v2218
      %v2283 = vunpack.c.l.b16 %v2219
      %v2284 = vunpack.c.l.b16 %v2220
      %v2285 = vunpack.c.l.b16 %v2221
      %v2286 = vunpack.c.l.b16 %v2222
      %v2287 = vunpack.c.l.b16 %v2223
      %v2288 = vunpack.c.l.b16 %v2224
      %v2289 = vunpack.c.l.b16 %v2225
      %v2290 = vunpack.c.l.b16 %v2226
      %v2291 = vunpack.c.l.b16 %v2227
      %v2292 = vunpack.c.l.b16 %v2228
      %v2293 = vunpack.c.l.b16 %v2229
      %v2294 = vunpack.c.l.b16 %v2230
      %v2295 = vunpack.c.l.b16 %v2231
      %v2296 = vunpack.c.l.b16 %v2232
      %v2297 = vunpack.c.l.b16 %v2233
      %v2298 = vunpack.c.l.b16 %v2234
      %v2299 = vunpack.c.l.b16 %v2235
      %v2300 = vunpack.c.l.b16 %v2236
      %v2301 = vunpack.c.l.b16 %v2237
      %v2302 = vunpack.c.l.b16 %v2238
      %v2303 = vpack.c.b16 %v2272, %v2271
      %v2304 = vpack.c.b16 %v2274, %v2273
      %v2305 = vpack.c.b16 %v2276, %v2275
      %v2306 = vpack.c.b16 %v2278, %v2277
      %v2307 = vpack.c.b16 %v2280, %v2279
      %v2308 = vpack.c.b16 %v2282, %v2281
      %v2309 = vpack.c.b16 %v2284, %v2283
      %v2310 = vpack.c.b16 %v2286, %v2285
      %v2311 = vpack.c.b16 %v2288, %v2287
      %v2312 = vpack.c.b16 %v2290, %v2289
      %v2313 = vpack.c.b16 %v2292, %v2291
      %v2314 = vpack.c.b16 %v2294, %v2293
      %v2315 = vpack.c.b16 %v2296, %v2295
      %v2316 = vpack.c.b16 %v2298, %v2297
      %v2317 = vpack.c.b16 %v2300, %v2299
      %v2318 = vpack.c.b16 %v2302, %v2301
      %2319 = vrot.lane.b32.xlu0 %v2303, 12
      %v2320 = vpop.permute.xlu0 %2319
      %2321 = vrot.lane.b32.xlu0 %v2304, 12
      %v2322 = vpop.permute.xlu0 %2321
      %2323 = vrot.lane.b32.xlu0 %v2305, 12
      %v2324 = vpop.permute.xlu0 %2323
      %2325 = vrot.lane.b32.xlu0 %v2306, 12
      %v2326 = vpop.permute.xlu0 %2325
      %2327 = vrot.lane.b32.xlu0 %v2307, 12
      %v2328 = vpop.permute.xlu0 %2327
      %2329 = vrot.lane.b32.xlu0 %v2308, 12
      %v2330 = vpop.permute.xlu0 %2329
      %2331 = vrot.lane.b32.xlu0 %v2309, 12
      %v2332 = vpop.permute.xlu0 %2331
      %2333 = vrot.lane.b32.xlu0 %v2310, 12
      %v2334 = vpop.permute.xlu0 %2333
      %2335 = vrot.lane.b32.xlu0 %v2311, 12
      %v2336 = vpop.permute.xlu0 %2335
      %2337 = vrot.lane.b32.xlu0 %v2312, 12
      %v2338 = vpop.permute.xlu0 %2337
      %2339 = vrot.lane.b32.xlu0 %v2313, 12
      %v2340 = vpop.permute.xlu0 %2339
      %2341 = vrot.lane.b32.xlu0 %v2314, 12
      %v2342 = vpop.permute.xlu0 %2341
      %2343 = vrot.lane.b32.xlu0 %v2315, 12
      %v2344 = vpop.permute.xlu0 %2343
      %2345 = vrot.lane.b32.xlu0 %v2316, 12
      %v2346 = vpop.permute.xlu0 %2345
      %2347 = vrot.lane.b32.xlu0 %v2317, 12
      %v2348 = vpop.permute.xlu0 %2347
      %2349 = vrot.lane.b32.xlu0 %v2318, 12
      %v2350 = vpop.permute.xlu0 %2349
      %vm2367 = vcmask 113760
      %2368 = vst.msk [vmem:[#allocation2] sm:$0xff] %vm2367, %v2320
      %2369 = vst.msk [vmem:[#allocation2 + $0x8] sm:$0xff] %vm2367, %v2322
      %2370 = vst.msk [vmem:[#allocation2 + $0x10] sm:$0xff] %vm2367, %v2324
      %2371 = vst.msk [vmem:[#allocation2 + $0x18] sm:$0xff] %vm2367, %v2326
      %2372 = vst.msk [vmem:[#allocation2 + $0x20] sm:$0xff] %vm2367, %v2328
      %2373 = vst.msk [vmem:[#allocation2 + $0x28] sm:$0xff] %vm2367, %v2330
      %2374 = vst.msk [vmem:[#allocation2 + $0x30] sm:$0xff] %vm2367, %v2332
      %2375 = vst.msk [vmem:[#allocation2 + $0x38] sm:$0xff] %vm2367, %v2334
      %2376 = vst.msk [vmem:[#allocation2 + $0x40] sm:$0xff] %vm2367, %v2336
      %2377 = vst.msk [vmem:[#allocation2 + $0x48] sm:$0xff] %vm2367, %v2338
      %2378 = vst.msk [vmem:[#allocation2 + $0x50] sm:$0xff] %vm2367, %v2340
      %2379 = vst.msk [vmem:[#allocation2 + $0x58] sm:$0xff] %vm2367, %v2342
      %2380 = vst.msk [vmem:[#allocation2 + $0x60] sm:$0xff] %vm2367, %v2344
      %2381 = vst.msk [vmem:[#allocation2 + $0x68] sm:$0xff] %vm2367, %v2346
      %2382 = vst.msk [vmem:[#allocation2 + $0x70] sm:$0xff] %vm2367, %v2348
      %2383 = vst.msk [vmem:[#allocation2 + $0x78] sm:$0xff] %vm2367, %v2350
      %v2384 = vld [vmem:[%s2206] sm:$0xf]
      %v2385 = vld [vmem:[%s2206 + $0x4] sm:$0xf]
      %v2386 = vld [vmem:[%s2206 + $0x8] sm:$0x1]
      %v2387 = vld [vmem:[%s2206 + $0xc] sm:$0xf]
      %v2388 = vld [vmem:[%s2206 + $0x10] sm:$0xf]
      %v2389 = vld [vmem:[%s2206 + $0x14] sm:$0x1]
      %v2390 = vld [vmem:[%s2206 + $0x18] sm:$0xf]
      %v2391 = vld [vmem:[%s2206 + $0x1c] sm:$0xf]
      %v2392 = vld [vmem:[%s2206 + $0x20] sm:$0x1]
      %v2393 = vld [vmem:[%s2206 + $0x24] sm:$0xf]
      %v2394 = vld [vmem:[%s2206 + $0x28] sm:$0xf]
      %v2395 = vld [vmem:[%s2206 + $0x2c] sm:$0x1]
      %v2396 = vld [vmem:[%s2206 + $0x30] sm:$0xf]
      %v2397 = vld [vmem:[%s2206 + $0x34] sm:$0xf]
      %v2398 = vld [vmem:[%s2206 + $0x38] sm:$0x1]
      %v2399 = vld [vmem:[%s2206 + $0x3c] sm:$0xf]
      %v2400 = vld [vmem:[%s2206 + $0x40] sm:$0xf]
      %v2401 = vld [vmem:[%s2206 + $0x44] sm:$0x1]
      %v2402 = vld [vmem:[%s2206 + $0x48] sm:$0xf]
      %v2403 = vld [vmem:[%s2206 + $0x4c] sm:$0xf]
      %v2404 = vld [vmem:[%s2206 + $0x50] sm:$0x1]
      %v2405 = vld [vmem:[%s2206 + $0x54] sm:$0xf]
      %v2406 = vld [vmem:[%s2206 + $0x58] sm:$0xf]
      %v2407 = vld [vmem:[%s2206 + $0x5c] sm:$0x1]
      %v2408 = vld [vmem:[%s2206 + $0x60] sm:$0xf]
      %v2409 = vld [vmem:[%s2206 + $0x64] sm:$0xf]
      %v2410 = vld [vmem:[%s2206 + $0x68] sm:$0x1]
      %v2411 = vld [vmem:[%s2206 + $0x6c] sm:$0xf]
      %v2412 = vld [vmem:[%s2206 + $0x70] sm:$0xf]
      %v2413 = vld [vmem:[%s2206 + $0x74] sm:$0x1]
      %v2414 = vld [vmem:[%s2206 + $0x78] sm:$0xf]
      %v2415 = vld [vmem:[%s2206 + $0x7c] sm:$0xf]
      %v2416 = vld [vmem:[%s2206 + $0x80] sm:$0x1]
      %v2417 = vld [vmem:[%s2206 + $0x84] sm:$0xf]
      %v2418 = vld [vmem:[%s2206 + $0x88] sm:$0xf]
      %v2419 = vld [vmem:[%s2206 + $0x8c] sm:$0x1]
      %v2420 = vld [vmem:[%s2206 + $0x90] sm:$0xf]
      %v2421 = vld [vmem:[%s2206 + $0x94] sm:$0xf]
      %v2422 = vld [vmem:[%s2206 + $0x98] sm:$0x1]
      %v2423 = vld [vmem:[%s2206 + $0x9c] sm:$0xf]
      %v2424 = vld [vmem:[%s2206 + $0xa0] sm:$0xf]
      %v2425 = vld [vmem:[%s2206 + $0xa4] sm:$0x1]
      %v2426 = vld [vmem:[%s2206 + $0xa8] sm:$0xf]
      %v2427 = vld [vmem:[%s2206 + $0xac] sm:$0xf]
      %v2428 = vld [vmem:[%s2206 + $0xb0] sm:$0x1]
      %v2429 = vld [vmem:[%s2206 + $0xb4] sm:$0xf]
      %v2430 = vld [vmem:[%s2206 + $0xb8] sm:$0xf]
      %v2431 = vld [vmem:[%s2206 + $0xbc] sm:$0x1]
      %v2433 = vshrl.u32 %v2384, 16
      %v2435 = vrot.slane %v2433, 4
      %v2436 = vshll.u32 %v2384, 16
      %v2438 = vrot.slane %v2436, 5
      %v2439 = vor.u32 %v2435, %v2438
      %v2440 = vrot.slane %v2439, 4
      %v2442 = vshll.u32 %v2385, 16
      %v2444 = vrot.slane %v2442, 5
      %v2445 = vsel %vm340, %v2440, %v2444
      %v2446 = vshrl.u32 %v2385, 16
      %v2448 = vrot.slane %v2446, 4
      %v2449 = vor.u32 %v2448, %v2444
      %v2450 = vrot.slane %v2449, 4
      %v2452 = vshll.u32 %v2386, 16
      %v2454 = vrot.slane %v2452, 5
      %v2455 = vsel %vm340, %v2450, %v2454
      %v2457 = vshrl.u32 %v2387, 16
      %v2459 = vrot.slane %v2457, 4
      %v2460 = vshll.u32 %v2387, 16
      %v2462 = vrot.slane %v2460, 5
      %v2463 = vor.u32 %v2459, %v2462
      %v2464 = vrot.slane %v2463, 4
      %v2466 = vshll.u32 %v2388, 16
      %v2468 = vrot.slane %v2466, 5
      %v2469 = vsel %vm340, %v2464, %v2468
      %v2470 = vshrl.u32 %v2388, 16
      %v2472 = vrot.slane %v2470, 4
      %v2473 = vor.u32 %v2472, %v2468
      %v2474 = vrot.slane %v2473, 4
      %v2476 = vshll.u32 %v2389, 16
      %v2478 = vrot.slane %v2476, 5
      %v2479 = vsel %vm340, %v2474, %v2478
      %v2481 = vshrl.u32 %v2390, 16
      %v2483 = vrot.slane %v2481, 4
      %v2484 = vshll.u32 %v2390, 16
      %v2486 = vrot.slane %v2484, 5
      %v2487 = vor.u32 %v2483, %v2486
      %v2488 = vrot.slane %v2487, 4
      %v2490 = vshll.u32 %v2391, 16
      %v2492 = vrot.slane %v2490, 5
      %v2493 = vsel %vm340, %v2488, %v2492
      %v2494 = vshrl.u32 %v2391, 16
      %v2496 = vrot.slane %v2494, 4
      %v2497 = vor.u32 %v2496, %v2492
      %v2498 = vrot.slane %v2497, 4
      %v2500 = vshll.u32 %v2392, 16
      %v2502 = vrot.slane %v2500, 5
      %v2503 = vsel %vm340, %v2498, %v2502
      %v2505 = vshrl.u32 %v2393, 16
      %v2507 = vrot.slane %v2505, 4
      %v2508 = vshll.u32 %v2393, 16
      %v2510 = vrot.slane %v2508, 5
      %v2511 = vor.u32 %v2507, %v2510
      %v2512 = vrot.slane %v2511, 4
      %v2514 = vshll.u32 %v2394, 16
      %v2516 = vrot.slane %v2514, 5
      %v2517 = vsel %vm340, %v2512, %v2516
      %v2518 = vshrl.u32 %v2394, 16
      %v2520 = vrot.slane %v2518, 4
      %v2521 = vor.u32 %v2520, %v2516
      %v2522 = vrot.slane %v2521, 4
      %v2524 = vshll.u32 %v2395, 16
      %v2526 = vrot.slane %v2524, 5
      %v2527 = vsel %vm340, %v2522, %v2526
      %v2529 = vshrl.u32 %v2396, 16
      %v2531 = vrot.slane %v2529, 4
      %v2532 = vshll.u32 %v2396, 16
      %v2534 = vrot.slane %v2532, 5
      %v2535 = vor.u32 %v2531, %v2534
      %v2536 = vrot.slane %v2535, 4
      %v2538 = vshll.u32 %v2397, 16
      %v2540 = vrot.slane %v2538, 5
      %v2541 = vsel %vm340, %v2536, %v2540
      %v2542 = vshrl.u32 %v2397, 16
      %v2544 = vrot.slane %v2542, 4
      %v2545 = vor.u32 %v2544, %v2540
      %v2546 = vrot.slane %v2545, 4
      %v2548 = vshll.u32 %v2398, 16
      %v2550 = vrot.slane %v2548, 5
      %v2551 = vsel %vm340, %v2546, %v2550
      %v2553 = vshrl.u32 %v2399, 16
      %v2555 = vrot.slane %v2553, 4
      %v2556 = vshll.u32 %v2399, 16
      %v2558 = vrot.slane %v2556, 5
      %v2559 = vor.u32 %v2555, %v2558
      %v2560 = vrot.slane %v2559, 4
      %v2562 = vshll.u32 %v2400, 16
      %v2564 = vrot.slane %v2562, 5
      %v2565 = vsel %vm340, %v2560, %v2564
      %v2566 = vshrl.u32 %v2400, 16
      %v2568 = vrot.slane %v2566, 4
      %v2569 = vor.u32 %v2568, %v2564
      %v2570 = vrot.slane %v2569, 4
      %v2572 = vshll.u32 %v2401, 16
      %v2574 = vrot.slane %v2572, 5
      %v2575 = vsel %vm340, %v2570, %v2574
      %v2577 = vshrl.u32 %v2402, 16
      %v2579 = vrot.slane %v2577, 4
      %v2580 = vshll.u32 %v2402, 16
      %v2582 = vrot.slane %v2580, 5
      %v2583 = vor.u32 %v2579, %v2582
      %v2584 = vrot.slane %v2583, 4
      %v2586 = vshll.u32 %v2403, 16
      %v2588 = vrot.slane %v2586, 5
      %v2589 = vsel %vm340, %v2584, %v2588
      %v2590 = vshrl.u32 %v2403, 16
      %v2592 = vrot.slane %v2590, 4
      %v2593 = vor.u32 %v2592, %v2588
      %v2594 = vrot.slane %v2593, 4
      %v2596 = vshll.u32 %v2404, 16
      %v2598 = vrot.slane %v2596, 5
      %v2599 = vsel %vm340, %v2594, %v2598
      %v2601 = vshrl.u32 %v2405, 16
      %v2603 = vrot.slane %v2601, 4
      %v2604 = vshll.u32 %v2405, 16
      %v2606 = vrot.slane %v2604, 5
      %v2607 = vor.u32 %v2603, %v2606
      %v2608 = vrot.slane %v2607, 4
      %v2610 = vshll.u32 %v2406, 16
      %v2612 = vrot.slane %v2610, 5
      %v2613 = vsel %vm340, %v2608, %v2612
      %v2614 = vshrl.u32 %v2406, 16
      %v2616 = vrot.slane %v2614, 4
      %v2617 = vor.u32 %v2616, %v2612
      %v2618 = vrot.slane %v2617, 4
      %v2620 = vshll.u32 %v2407, 16
      %v2622 = vrot.slane %v2620, 5
      %v2623 = vsel %vm340, %v2618, %v2622
      %v2625 = vshrl.u32 %v2408, 16
      %v2627 = vrot.slane %v2625, 4
      %v2628 = vshll.u32 %v2408, 16
      %v2630 = vrot.slane %v2628, 5
      %v2631 = vor.u32 %v2627, %v2630
      %v2632 = vrot.slane %v2631, 4
      %v2634 = vshll.u32 %v2409, 16
      %v2636 = vrot.slane %v2634, 5
      %v2637 = vsel %vm340, %v2632, %v2636
      %v2638 = vshrl.u32 %v2409, 16
      %v2640 = vrot.slane %v2638, 4
      %v2641 = vor.u32 %v2640, %v2636
      %v2642 = vrot.slane %v2641, 4
      %v2644 = vshll.u32 %v2410, 16
      %v2646 = vrot.slane %v2644, 5
      %v2647 = vsel %vm340, %v2642, %v2646
      %v2649 = vshrl.u32 %v2411, 16
      %v2651 = vrot.slane %v2649, 4
      %v2652 = vshll.u32 %v2411, 16
      %v2654 = vrot.slane %v2652, 5
      %v2655 = vor.u32 %v2651, %v2654
      %v2656 = vrot.slane %v2655, 4
      %v2658 = vshll.u32 %v2412, 16
      %v2660 = vrot.slane %v2658, 5
      %v2661 = vsel %vm340, %v2656, %v2660
      %v2662 = vshrl.u32 %v2412, 16
      %v2664 = vrot.slane %v2662, 4
      %v2665 = vor.u32 %v2664, %v2660
      %v2666 = vrot.slane %v2665, 4
      %v2668 = vshll.u32 %v2413, 16
      %v2670 = vrot.slane %v2668, 5
      %v2671 = vsel %vm340, %v2666, %v2670
      %v2673 = vshrl.u32 %v2414, 16
      %v2675 = vrot.slane %v2673, 4
      %v2676 = vshll.u32 %v2414, 16
      %v2678 = vrot.slane %v2676, 5
      %v2679 = vor.u32 %v2675, %v2678
      %v2680 = vrot.slane %v2679, 4
      %v2682 = vshll.u32 %v2415, 16
      %v2684 = vrot.slane %v2682, 5
      %v2685 = vsel %vm340, %v2680, %v2684
      %v2686 = vshrl.u32 %v2415, 16
      %v2688 = vrot.slane %v2686, 4
      %v2689 = vor.u32 %v2688, %v2684
      %v2690 = vrot.slane %v2689, 4
      %v2692 = vshll.u32 %v2416, 16
      %v2694 = vrot.slane %v2692, 5
      %v2695 = vsel %vm340, %v2690, %v2694
      %v2697 = vshrl.u32 %v2417, 16
      %v2699 = vrot.slane %v2697, 4
      %v2700 = vshll.u32 %v2417, 16
      %v2702 = vrot.slane %v2700, 5
      %v2703 = vor.u32 %v2699, %v2702
      %v2704 = vrot.slane %v2703, 4
      %v2706 = vshll.u32 %v2418, 16
      %v2708 = vrot.slane %v2706, 5
      %v2709 = vsel %vm340, %v2704, %v2708
      %v2710 = vshrl.u32 %v2418, 16
      %v2712 = vrot.slane %v2710, 4
      %v2713 = vor.u32 %v2712, %v2708
      %v2714 = vrot.slane %v2713, 4
      %v2716 = vshll.u32 %v2419, 16
      %v2718 = vrot.slane %v2716, 5
      %v2719 = vsel %vm340, %v2714, %v2718
      %v2721 = vshrl.u32 %v2420, 16
      %v2723 = vrot.slane %v2721, 4
      %v2724 = vshll.u32 %v2420, 16
      %v2726 = vrot.slane %v2724, 5
      %v2727 = vor.u32 %v2723, %v2726
      %v2728 = vrot.slane %v2727, 4
      %v2730 = vshll.u32 %v2421, 16
      %v2732 = vrot.slane %v2730, 5
      %v2733 = vsel %vm340, %v2728, %v2732
      %v2734 = vshrl.u32 %v2421, 16
      %v2736 = vrot.slane %v2734, 4
      %v2737 = vor.u32 %v2736, %v2732
      %v2738 = vrot.slane %v2737, 4
      %v2740 = vshll.u32 %v2422, 16
      %v2742 = vrot.slane %v2740, 5
      %v2743 = vsel %vm340, %v2738, %v2742
      %v2745 = vshrl.u32 %v2423, 16
      %v2747 = vrot.slane %v2745, 4
      %v2748 = vshll.u32 %v2423, 16
      %v2750 = vrot.slane %v2748, 5
      %v2751 = vor.u32 %v2747, %v2750
      %v2752 = vrot.slane %v2751, 4
      %v2754 = vshll.u32 %v2424, 16
      %v2756 = vrot.slane %v2754, 5
      %v2757 = vsel %vm340, %v2752, %v2756
      %v2758 = vshrl.u32 %v2424, 16
      %v2760 = vrot.slane %v2758, 4
      %v2761 = vor.u32 %v2760, %v2756
      %v2762 = vrot.slane %v2761, 4
      %v2764 = vshll.u32 %v2425, 16
      %v2766 = vrot.slane %v2764, 5
      %v2767 = vsel %vm340, %v2762, %v2766
      %v2769 = vshrl.u32 %v2426, 16
      %v2771 = vrot.slane %v2769, 4
      %v2772 = vshll.u32 %v2426, 16
      %v2774 = vrot.slane %v2772, 5
      %v2775 = vor.u32 %v2771, %v2774
      %v2776 = vrot.slane %v2775, 4
      %v2778 = vshll.u32 %v2427, 16
      %v2780 = vrot.slane %v2778, 5
      %v2781 = vsel %vm340, %v2776, %v2780
      %v2782 = vshrl.u32 %v2427, 16
      %v2784 = vrot.slane %v2782, 4
      %v2785 = vor.u32 %v2784, %v2780
      %v2786 = vrot.slane %v2785, 4
      %v2788 = vshll.u32 %v2428, 16
      %v2790 = vrot.slane %v2788, 5
      %v2791 = vsel %vm340, %v2786, %v2790
      %v2793 = vshrl.u32 %v2429, 16
      %v2795 = vrot.slane %v2793, 4
      %v2796 = vshll.u32 %v2429, 16
      %v2798 = vrot.slane %v2796, 5
      %v2799 = vor.u32 %v2795, %v2798
      %v2800 = vrot.slane %v2799, 4
      %v2802 = vshll.u32 %v2430, 16
      %v2804 = vrot.slane %v2802, 5
      %v2805 = vsel %vm340, %v2800, %v2804
      %v2806 = vshrl.u32 %v2430, 16
      %v2808 = vrot.slane %v2806, 4
      %v2809 = vor.u32 %v2808, %v2804
      %v2810 = vrot.slane %v2809, 4
      %v2812 = vshll.u32 %v2431, 16
      %v2814 = vrot.slane %v2812, 5
      %v2815 = vsel %vm340, %v2810, %v2814
      %v2816 = vunpack.c.l.b16 %v2445
      %v2817 = vunpack.c.l.b16 %v2455
      %v2818 = vunpack.c.l.b16 %v2469
      %v2819 = vunpack.c.l.b16 %v2479
      %v2820 = vunpack.c.l.b16 %v2493
      %v2821 = vunpack.c.l.b16 %v2503
      %v2822 = vunpack.c.l.b16 %v2517
      %v2823 = vunpack.c.l.b16 %v2527
      %v2824 = vunpack.c.l.b16 %v2541
      %v2825 = vunpack.c.l.b16 %v2551
      %v2826 = vunpack.c.l.b16 %v2565
      %v2827 = vunpack.c.l.b16 %v2575
      %v2828 = vunpack.c.l.b16 %v2589
      %v2829 = vunpack.c.l.b16 %v2599
      %v2830 = vunpack.c.l.b16 %v2613
      %v2831 = vunpack.c.l.b16 %v2623
      %v2832 = vunpack.c.l.b16 %v2637
      %v2833 = vunpack.c.l.b16 %v2647
      %v2834 = vunpack.c.l.b16 %v2661
      %v2835 = vunpack.c.l.b16 %v2671
      %v2836 = vunpack.c.l.b16 %v2685
      %v2837 = vunpack.c.l.b16 %v2695
      %v2838 = vunpack.c.l.b16 %v2709
      %v2839 = vunpack.c.l.b16 %v2719
      %v2840 = vunpack.c.l.b16 %v2733
      %v2841 = vunpack.c.l.b16 %v2743
      %v2842 = vunpack.c.l.b16 %v2757
      %v2843 = vunpack.c.l.b16 %v2767
      %v2844 = vunpack.c.l.b16 %v2781
      %v2845 = vunpack.c.l.b16 %v2791
      %v2846 = vunpack.c.l.b16 %v2805
      %v2847 = vunpack.c.l.b16 %v2815
      %v2848 = vpack.c.b16 %v2817, %v2816
      %v2849 = vpack.c.b16 %v2819, %v2818
      %v2850 = vpack.c.b16 %v2821, %v2820
      %v2851 = vpack.c.b16 %v2823, %v2822
      %v2852 = vpack.c.b16 %v2825, %v2824
      %v2853 = vpack.c.b16 %v2827, %v2826
      %v2854 = vpack.c.b16 %v2829, %v2828
      %v2855 = vpack.c.b16 %v2831, %v2830
      %v2856 = vpack.c.b16 %v2833, %v2832
      %v2857 = vpack.c.b16 %v2835, %v2834
      %v2858 = vpack.c.b16 %v2837, %v2836
      %v2859 = vpack.c.b16 %v2839, %v2838
      %v2860 = vpack.c.b16 %v2841, %v2840
      %v2861 = vpack.c.b16 %v2843, %v2842
      %v2862 = vpack.c.b16 %v2845, %v2844
      %v2863 = vpack.c.b16 %v2847, %v2846
      %2864 = vrot.lane.b32.xlu0 %v2848, 14
      %v2865 = vpop.permute.xlu0 %2864
      %2866 = vrot.lane.b32.xlu0 %v2849, 14
      %v2867 = vpop.permute.xlu0 %2866
      %2868 = vrot.lane.b32.xlu0 %v2850, 14
      %v2869 = vpop.permute.xlu0 %2868
      %2870 = vrot.lane.b32.xlu0 %v2851, 14
      %v2871 = vpop.permute.xlu0 %2870
      %2872 = vrot.lane.b32.xlu0 %v2852, 14
      %v2873 = vpop.permute.xlu0 %2872
      %2874 = vrot.lane.b32.xlu0 %v2853, 14
      %v2875 = vpop.permute.xlu0 %2874
      %2876 = vrot.lane.b32.xlu0 %v2854, 14
      %v2877 = vpop.permute.xlu0 %2876
      %2878 = vrot.lane.b32.xlu0 %v2855, 14
      %v2879 = vpop.permute.xlu0 %2878
      %2880 = vrot.lane.b32.xlu0 %v2856, 14
      %v2881 = vpop.permute.xlu0 %2880
      %2882 = vrot.lane.b32.xlu0 %v2857, 14
      %v2883 = vpop.permute.xlu0 %2882
      %2884 = vrot.lane.b32.xlu0 %v2858, 14
      %v2885 = vpop.permute.xlu0 %2884
      %2886 = vrot.lane.b32.xlu0 %v2859, 14
      %v2887 = vpop.permute.xlu0 %2886
      %2888 = vrot.lane.b32.xlu0 %v2860, 14
      %v2889 = vpop.permute.xlu0 %2888
      %2890 = vrot.lane.b32.xlu0 %v2861, 14
      %v2891 = vpop.permute.xlu0 %2890
      %2892 = vrot.lane.b32.xlu0 %v2862, 14
      %v2893 = vpop.permute.xlu0 %2892
      %2894 = vrot.lane.b32.xlu0 %v2863, 14
      %v2895 = vpop.permute.xlu0 %2894
      %vm2912 = vcmask 130160
      %2913 = vst.msk [vmem:[#allocation2] sm:$0xff] %vm2912, %v2865
      %2914 = vst.msk [vmem:[#allocation2 + $0x8] sm:$0xff] %vm2912, %v2867
      %2915 = vst.msk [vmem:[#allocation2 + $0x10] sm:$0xff] %vm2912, %v2869
      %2916 = vst.msk [vmem:[#allocation2 + $0x18] sm:$0xff] %vm2912, %v2871
      %2917 = vst.msk [vmem:[#allocation2 + $0x20] sm:$0xff] %vm2912, %v2873
      %2918 = vst.msk [vmem:[#allocation2 + $0x28] sm:$0xff] %vm2912, %v2875
      %2919 = vst.msk [vmem:[#allocation2 + $0x30] sm:$0xff] %vm2912, %v2877
      %2920 = vst.msk [vmem:[#allocation2 + $0x38] sm:$0xff] %vm2912, %v2879
      %2921 = vst.msk [vmem:[#allocation2 + $0x40] sm:$0xff] %vm2912, %v2881
      %2922 = vst.msk [vmem:[#allocation2 + $0x48] sm:$0xff] %vm2912, %v2883
      %2923 = vst.msk [vmem:[#allocation2 + $0x50] sm:$0xff] %vm2912, %v2885
      %2924 = vst.msk [vmem:[#allocation2 + $0x58] sm:$0xff] %vm2912, %v2887
      %2925 = vst.msk [vmem:[#allocation2 + $0x60] sm:$0xff] %vm2912, %v2889
      %2926 = vst.msk [vmem:[#allocation2 + $0x68] sm:$0xff] %vm2912, %v2891
      %2927 = vst.msk [vmem:[#allocation2 + $0x70] sm:$0xff] %vm2912, %v2893
      %2928 = vst.msk [vmem:[#allocation2 + $0x78] sm:$0xff] %vm2912, %v2895
      %v2929 = vld [vmem:[%s2206] sm:$0xe]
      %v2930 = vld [vmem:[%s2206 + $0x4] sm:$0xf]
      %v2931 = vld [vmem:[%s2206 + $0x8] sm:$0x1]
      %v2932 = vld [vmem:[%s2206 + $0xc] sm:$0xe]
      %v2933 = vld [vmem:[%s2206 + $0x10] sm:$0xf]
      %v2934 = vld [vmem:[%s2206 + $0x14] sm:$0x1]
      %v2935 = vld [vmem:[%s2206 + $0x18] sm:$0xe]
      %v2936 = vld [vmem:[%s2206 + $0x1c] sm:$0xf]
      %v2937 = vld [vmem:[%s2206 + $0x20] sm:$0x1]
      %v2938 = vld [vmem:[%s2206 + $0x24] sm:$0xe]
      %v2939 = vld [vmem:[%s2206 + $0x28] sm:$0xf]
      %v2940 = vld [vmem:[%s2206 + $0x2c] sm:$0x1]
      %v2941 = vld [vmem:[%s2206 + $0x30] sm:$0xe]
      %v2942 = vld [vmem:[%s2206 + $0x34] sm:$0xf]
      %v2943 = vld [vmem:[%s2206 + $0x38] sm:$0x1]
      %v2944 = vld [vmem:[%s2206 + $0x3c] sm:$0xe]
      %v2945 = vld [vmem:[%s2206 + $0x40] sm:$0xf]
      %v2946 = vld [vmem:[%s2206 + $0x44] sm:$0x1]
      %v2947 = vld [vmem:[%s2206 + $0x48] sm:$0xe]
      %v2948 = vld [vmem:[%s2206 + $0x4c] sm:$0xf]
      %v2949 = vld [vmem:[%s2206 + $0x50] sm:$0x1]
      %v2950 = vld [vmem:[%s2206 + $0x54] sm:$0xe]
      %v2951 = vld [vmem:[%s2206 + $0x58] sm:$0xf]
      %v2952 = vld [vmem:[%s2206 + $0x5c] sm:$0x1]
      %v2953 = vld [vmem:[%s2206 + $0x60] sm:$0xe]
      %v2954 = vld [vmem:[%s2206 + $0x64] sm:$0xf]
      %v2955 = vld [vmem:[%s2206 + $0x68] sm:$0x1]
      %v2956 = vld [vmem:[%s2206 + $0x6c] sm:$0xe]
      %v2957 = vld [vmem:[%s2206 + $0x70] sm:$0xf]
      %v2958 = vld [vmem:[%s2206 + $0x74] sm:$0x1]
      %v2959 = vld [vmem:[%s2206 + $0x78] sm:$0xe]
      %v2960 = vld [vmem:[%s2206 + $0x7c] sm:$0xf]
      %v2961 = vld [vmem:[%s2206 + $0x80] sm:$0x1]
      %v2962 = vld [vmem:[%s2206 + $0x84] sm:$0xe]
      %v2963 = vld [vmem:[%s2206 + $0x88] sm:$0xf]
      %v2964 = vld [vmem:[%s2206 + $0x8c] sm:$0x1]
      %v2965 = vld [vmem:[%s2206 + $0x90] sm:$0xe]
      %v2966 = vld [vmem:[%s2206 + $0x94] sm:$0xf]
      %v2967 = vld [vmem:[%s2206 + $0x98] sm:$0x1]
      %v2968 = vld [vmem:[%s2206 + $0x9c] sm:$0xe]
      %v2969 = vld [vmem:[%s2206 + $0xa0] sm:$0xf]
      %v2970 = vld [vmem:[%s2206 + $0xa4] sm:$0x1]
      %v2971 = vld [vmem:[%s2206 + $0xa8] sm:$0xe]
      %v2972 = vld [vmem:[%s2206 + $0xac] sm:$0xf]
      %v2973 = vld [vmem:[%s2206 + $0xb0] sm:$0x1]
      %v2974 = vld [vmem:[%s2206 + $0xb4] sm:$0xe]
      %v2975 = vld [vmem:[%s2206 + $0xb8] sm:$0xf]
      %v2976 = vld [vmem:[%s2206 + $0xbc] sm:$0x1]
      %v3025 = vrot.slane %v2929, 5
      %v3026 = vrot.slane %v3025, 4
      %v3027 = vrot.slane %v2930, 5
      %v3028 = vsel %vm936, %v3026, %v3027
      %v3029 = vrot.slane %v3027, 4
      %v3030 = vrot.slane %v2931, 5
      %v3031 = vsel %vm936, %v3029, %v3030
      %v3032 = vrot.slane %v2932, 5
      %v3033 = vrot.slane %v3032, 4
      %v3034 = vrot.slane %v2933, 5
      %v3035 = vsel %vm936, %v3033, %v3034
      %v3036 = vrot.slane %v3034, 4
      %v3037 = vrot.slane %v2934, 5
      %v3038 = vsel %vm936, %v3036, %v3037
      %v3039 = vrot.slane %v2935, 5
      %v3040 = vrot.slane %v3039, 4
      %v3041 = vrot.slane %v2936, 5
      %v3042 = vsel %vm936, %v3040, %v3041
      %v3043 = vrot.slane %v3041, 4
      %v3044 = vrot.slane %v2937, 5
      %v3045 = vsel %vm936, %v3043, %v3044
      %v3046 = vrot.slane %v2938, 5
      %v3047 = vrot.slane %v3046, 4
      %v3048 = vrot.slane %v2939, 5
      %v3049 = vsel %vm936, %v3047, %v3048
      %v3050 = vrot.slane %v3048, 4
      %v3051 = vrot.slane %v2940, 5
      %v3052 = vsel %vm936, %v3050, %v3051
      %v3053 = vrot.slane %v2941, 5
      %v3054 = vrot.slane %v3053, 4
      %v3055 = vrot.slane %v2942, 5
      %v3056 = vsel %vm936, %v3054, %v3055
      %v3057 = vrot.slane %v3055, 4
      %v3058 = vrot.slane %v2943, 5
      %v3059 = vsel %vm936, %v3057, %v3058
      %v3060 = vrot.slane %v2944, 5
      %v3061 = vrot.slane %v3060, 4
      %v3062 = vrot.slane %v2945, 5
      %v3063 = vsel %vm936, %v3061, %v3062
      %v3064 = vrot.slane %v3062, 4
      %v3065 = vrot.slane %v2946, 5
      %v3066 = vsel %vm936, %v3064, %v3065
      %v3067 = vrot.slane %v2947, 5
      %v3068 = vrot.slane %v3067, 4
      %v3069 = vrot.slane %v2948, 5
      %v3070 = vsel %vm936, %v3068, %v3069
      %v3071 = vrot.slane %v3069, 4
      %v3072 = vrot.slane %v2949, 5
      %v3073 = vsel %vm936, %v3071, %v3072
      %v3074 = vrot.slane %v2950, 5
      %v3075 = vrot.slane %v3074, 4
      %v3076 = vrot.slane %v2951, 5
      %v3077 = vsel %vm936, %v3075, %v3076
      %v3078 = vrot.slane %v3076, 4
      %v3079 = vrot.slane %v2952, 5
      %v3080 = vsel %vm936, %v3078, %v3079
      %v3081 = vrot.slane %v2953, 5
      %v3082 = vrot.slane %v3081, 4
      %v3083 = vrot.slane %v2954, 5
      %v3084 = vsel %vm936, %v3082, %v3083
      %v3085 = vrot.slane %v3083, 4
      %v3086 = vrot.slane %v2955, 5
      %v3087 = vsel %vm936, %v3085, %v3086
      %v3088 = vrot.slane %v2956, 5
      %v3089 = vrot.slane %v3088, 4
      %v3090 = vrot.slane %v2957, 5
      %v3091 = vsel %vm936, %v3089, %v3090
      %v3092 = vrot.slane %v3090, 4
      %v3093 = vrot.slane %v2958, 5
      %v3094 = vsel %vm936, %v3092, %v3093
      %v3095 = vrot.slane %v2959, 5
      %v3096 = vrot.slane %v3095, 4
      %v3097 = vrot.slane %v2960, 5
      %v3098 = vsel %vm936, %v3096, %v3097
      %v3099 = vrot.slane %v3097, 4
      %v3100 = vrot.slane %v2961, 5
      %v3101 = vsel %vm936, %v3099, %v3100
      %v3102 = vrot.slane %v2962, 5
      %v3103 = vrot.slane %v3102, 4
      %v3104 = vrot.slane %v2963, 5
      %v3105 = vsel %vm936, %v3103, %v3104
      %v3106 = vrot.slane %v3104, 4
      %v3107 = vrot.slane %v2964, 5
      %v3108 = vsel %vm936, %v3106, %v3107
      %v3109 = vrot.slane %v2965, 5
      %v3110 = vrot.slane %v3109, 4
      %v3111 = vrot.slane %v2966, 5
      %v3112 = vsel %vm936, %v3110, %v3111
      %v3113 = vrot.slane %v3111, 4
      %v3114 = vrot.slane %v2967, 5
      %v3115 = vsel %vm936, %v3113, %v3114
      %v3116 = vrot.slane %v2968, 5
      %v3117 = vrot.slane %v3116, 4
      %v3118 = vrot.slane %v2969, 5
      %v3119 = vsel %vm936, %v3117, %v3118
      %v3120 = vrot.slane %v3118, 4
      %v3121 = vrot.slane %v2970, 5
      %v3122 = vsel %vm936, %v3120, %v3121
      %v3123 = vrot.slane %v2971, 5
      %v3124 = vrot.slane %v3123, 4
      %v3125 = vrot.slane %v2972, 5
      %v3126 = vsel %vm936, %v3124, %v3125
      %v3127 = vrot.slane %v3125, 4
      %v3128 = vrot.slane %v2973, 5
      %v3129 = vsel %vm936, %v3127, %v3128
      %v3130 = vrot.slane %v2974, 5
      %v3131 = vrot.slane %v3130, 4
      %v3132 = vrot.slane %v2975, 5
      %v3133 = vsel %vm936, %v3131, %v3132
      %v3134 = vrot.slane %v3132, 4
      %v3135 = vrot.slane %v2976, 5
      %v3136 = vsel %vm936, %v3134, %v3135
      %v3137 = vunpack.c.l.b16 %v3028
      %v3138 = vunpack.c.l.b16 %v3031
      %v3139 = vunpack.c.l.b16 %v3035
      %v3140 = vunpack.c.l.b16 %v3038
      %v3141 = vunpack.c.l.b16 %v3042
      %v3142 = vunpack.c.l.b16 %v3045
      %v3143 = vunpack.c.l.b16 %v3049
      %v3144 = vunpack.c.l.b16 %v3052
      %v3145 = vunpack.c.l.b16 %v3056
      %v3146 = vunpack.c.l.b16 %v3059
      %v3147 = vunpack.c.l.b16 %v3063
      %v3148 = vunpack.c.l.b16 %v3066
      %v3149 = vunpack.c.l.b16 %v3070
      %v3150 = vunpack.c.l.b16 %v3073
      %v3151 = vunpack.c.l.b16 %v3077
      %v3152 = vunpack.c.l.b16 %v3080
      %v3153 = vunpack.c.l.b16 %v3084
      %v3154 = vunpack.c.l.b16 %v3087
      %v3155 = vunpack.c.l.b16 %v3091
      %v3156 = vunpack.c.l.b16 %v3094
      %v3157 = vunpack.c.l.b16 %v3098
      %v3158 = vunpack.c.l.b16 %v3101
      %v3159 = vunpack.c.l.b16 %v3105
      %v3160 = vunpack.c.l.b16 %v3108
      %v3161 = vunpack.c.l.b16 %v3112
      %v3162 = vunpack.c.l.b16 %v3115
      %v3163 = vunpack.c.l.b16 %v3119
      %v3164 = vunpack.c.l.b16 %v3122
      %v3165 = vunpack.c.l.b16 %v3126
      %v3166 = vunpack.c.l.b16 %v3129
      %v3167 = vunpack.c.l.b16 %v3133
      %v3168 = vunpack.c.l.b16 %v3136
      %v3169 = vpack.c.b16 %v3138, %v3137
      %v3170 = vpack.c.b16 %v3140, %v3139
      %v3171 = vpack.c.b16 %v3142, %v3141
      %v3172 = vpack.c.b16 %v3144, %v3143
      %v3173 = vpack.c.b16 %v3146, %v3145
      %v3174 = vpack.c.b16 %v3148, %v3147
      %v3175 = vpack.c.b16 %v3150, %v3149
      %v3176 = vpack.c.b16 %v3152, %v3151
      %v3177 = vpack.c.b16 %v3154, %v3153
      %v3178 = vpack.c.b16 %v3156, %v3155
      %v3179 = vpack.c.b16 %v3158, %v3157
      %v3180 = vpack.c.b16 %v3160, %v3159
      %v3181 = vpack.c.b16 %v3162, %v3161
      %v3182 = vpack.c.b16 %v3164, %v3163
      %v3183 = vpack.c.b16 %v3166, %v3165
      %v3184 = vpack.c.b16 %v3168, %v3167
      %3185 = vrot.lane.b32.xlu0 %v3169, 16
      %v3186 = vpop.permute.xlu0 %3185
      %3187 = vrot.lane.b32.xlu0 %v3170, 16
      %v3188 = vpop.permute.xlu0 %3187
      %3189 = vrot.lane.b32.xlu0 %v3171, 16
      %v3190 = vpop.permute.xlu0 %3189
      %3191 = vrot.lane.b32.xlu0 %v3172, 16
      %v3192 = vpop.permute.xlu0 %3191
      %3193 = vrot.lane.b32.xlu0 %v3173, 16
      %v3194 = vpop.permute.xlu0 %3193
      %3195 = vrot.lane.b32.xlu0 %v3174, 16
      %v3196 = vpop.permute.xlu0 %3195
      %3197 = vrot.lane.b32.xlu0 %v3175, 16
      %v3198 = vpop.permute.xlu0 %3197
      %3199 = vrot.lane.b32.xlu0 %v3176, 16
      %v3200 = vpop.permute.xlu0 %3199
      %3201 = vrot.lane.b32.xlu0 %v3177, 16
      %v3202 = vpop.permute.xlu0 %3201
      %3203 = vrot.lane.b32.xlu0 %v3178, 16
      %v3204 = vpop.permute.xlu0 %3203
      %3205 = vrot.lane.b32.xlu0 %v3179, 16
      %v3206 = vpop.permute.xlu0 %3205
      %3207 = vrot.lane.b32.xlu0 %v3180, 16
      %v3208 = vpop.permute.xlu0 %3207
      %3209 = vrot.lane.b32.xlu0 %v3181, 16
      %v3210 = vpop.permute.xlu0 %3209
      %3211 = vrot.lane.b32.xlu0 %v3182, 16
      %v3212 = vpop.permute.xlu0 %3211
      %3213 = vrot.lane.b32.xlu0 %v3183, 16
      %v3214 = vpop.permute.xlu0 %3213
      %3215 = vrot.lane.b32.xlu0 %v3184, 16
      %v3216 = vpop.permute.xlu0 %3215
      %vm3233 = vcmask 146560
      %3234 = vst.msk [vmem:[#allocation2] sm:$0xff] %vm3233, %v3186
      %3235 = vst.msk [vmem:[#allocation2 + $0x8] sm:$0xff] %vm3233, %v3188
      %3236 = vst.msk [vmem:[#allocation2 + $0x10] sm:$0xff] %vm3233, %v3190
      %3237 = vst.msk [vmem:[#allocation2 + $0x18] sm:$0xff] %vm3233, %v3192
      %3238 = vst.msk [vmem:[#allocation2 + $0x20] sm:$0xff] %vm3233, %v3194
      %3239 = vst.msk [vmem:[#allocation2 + $0x28] sm:$0xff] %vm3233, %v3196
      %3240 = vst.msk [vmem:[#allocation2 + $0x30] sm:$0xff] %vm3233, %v3198
      %3241 = vst.msk [vmem:[#allocation2 + $0x38] sm:$0xff] %vm3233, %v3200
      %3242 = vst.msk [vmem:[#allocation2 + $0x40] sm:$0xff] %vm3233, %v3202
      %3243 = vst.msk [vmem:[#allocation2 + $0x48] sm:$0xff] %vm3233, %v3204
      %3244 = vst.msk [vmem:[#allocation2 + $0x50] sm:$0xff] %vm3233, %v3206
      %3245 = vst.msk [vmem:[#allocation2 + $0x58] sm:$0xff] %vm3233, %v3208
      %3246 = vst.msk [vmem:[#allocation2 + $0x60] sm:$0xff] %vm3233, %v3210
      %3247 = vst.msk [vmem:[#allocation2 + $0x68] sm:$0xff] %vm3233, %v3212
      %3248 = vst.msk [vmem:[#allocation2 + $0x70] sm:$0xff] %vm3233, %v3214
      %3249 = vst.msk [vmem:[#allocation2 + $0x78] sm:$0xff] %vm3233, %v3216
      %v3250 = vld [vmem:[#allocation2] sm:$0xff]
      %v3251 = vld [vmem:[#allocation2 + $0x8] sm:$0xff]
      %v3252 = vld [vmem:[#allocation2 + $0x10] sm:$0xff]
      %v3253 = vld [vmem:[#allocation2 + $0x18] sm:$0xff]
      %v3254 = vld [vmem:[#allocation2 + $0x20] sm:$0xff]
      %v3255 = vld [vmem:[#allocation2 + $0x28] sm:$0xff]
      %v3256 = vld [vmem:[#allocation2 + $0x30] sm:$0xff]
      %v3257 = vld [vmem:[#allocation2 + $0x38] sm:$0xff]
      %v3258 = vld [vmem:[#allocation2 + $0x40] sm:$0xff]
      %v3259 = vld [vmem:[#allocation2 + $0x48] sm:$0xff]
      %v3260 = vld [vmem:[#allocation2 + $0x50] sm:$0xff]
      %v3261 = vld [vmem:[#allocation2 + $0x58] sm:$0xff]
      %v3262 = vld [vmem:[#allocation2 + $0x60] sm:$0xff]
      %v3263 = vld [vmem:[#allocation2 + $0x68] sm:$0xff]
      %v3264 = vld [vmem:[#allocation2 + $0x70] sm:$0xff]
      %v3265 = vld [vmem:[#allocation2 + $0x78] sm:$0xff]
      %v3266 = vld [vmem:[%s1] sm:$0xf]
      %v3267 = vld [vmem:[%s1 + $0x4] sm:$0xf]
      %v3268 = vld [vmem:[%s1 + $0x8] sm:$0x1]
      %v3272 = vunpack.c.l.b16 %v3266
      %v3273 = vunpack.c.l.b16 %v3267
      %v3274 = vunpack.c.l.b16 %v3268
      %v3275 = vpack.c.b16 %v3273, %v3272
      %v3276 = vpack.c.b16 %v3274, %v3274
      %vm3278 = vcmask 146432
      %v3280 = vsel %vm3278, %v3250, 0
      %v3283 = vsel %vm3278, %v3251, 0
      %v3286 = vsel %vm3278, %v3252, 0
      %v3289 = vsel %vm3278, %v3253, 0
      %v3292 = vsel %vm3278, %v3254, 0
      %v3295 = vsel %vm3278, %v3255, 0
      %v3298 = vsel %vm3278, %v3256, 0
      %v3301 = vsel %vm3278, %v3257, 0
      %v3304 = vsel %vm3278, %v3258, 0
      %v3307 = vsel %vm3278, %v3259, 0
      %v3310 = vsel %vm3278, %v3260, 0
      %v3313 = vsel %vm3278, %v3261, 0
      %v3316 = vsel %vm3278, %v3262, 0
      %v3319 = vsel %vm3278, %v3263, 0
      %v3322 = vsel %vm3278, %v3264, 0
      %v3325 = vsel %vm3278, %v3265, 0
      %vm3327 = vcmask 1040384
      %v3329 = vsel %vm3327, %v3276, 0
      %3331 = vmatprep.subr.bf16.mxu0 0
      %3332 = vmatpush1.bf16.msra.mxu0 %v3275
      %3333 = vmatprep.subr.bf16.mxu0 0
      %3334 = vmatpush1.bf16.msra.mxu0 %v3329
      %3335 = vmatprep.subr.bf16.mxu0 0
      %3336 = vmatpush1.bf16.msra.mxu0 0
      %3337 = vmatprep.subr.bf16.mxu0 0
      %3338 = vmatpush1.bf16.msra.mxu0 0
      %3339 = vmatprep.subr.bf16.mxu0 0
      %3340 = vmatpush1.bf16.msra.mxu0 0
      %3341 = vmatprep.subr.bf16.mxu0 0
      %3342 = vmatpush1.bf16.msra.mxu0 0
      %3343 = vmatprep.subr.bf16.mxu0 0
      %3344 = vmatpush1.bf16.msra.mxu0 0
      %3345 = vmatprep.subr.bf16.mxu0 0
      %3346 = vmatpush1.bf16.msra.mxu0 0
      %3347 = vmatprep.subr.bf16.mxu0 0
      %3348 = vmatpush1.bf16.msra.mxu0 0
      %3349 = vmatprep.subr.bf16.mxu0 0
      %3350 = vmatpush1.bf16.msra.mxu0 0
      %3351 = vmatprep.subr.bf16.mxu0 0
      %3352 = vmatpush1.bf16.msra.mxu0 0
      %3353 = vmatprep.subr.bf16.mxu0 0
      %3354 = vmatpush1.bf16.msra.mxu0 0
      %3355 = vmatprep.subr.bf16.mxu0 0
      %3356 = vmatpush1.bf16.msra.mxu0 0
      %3357 = vmatprep.subr.bf16.mxu0 0
      %3358 = vmatpush1.bf16.msra.mxu0 0
      %3359 = vmatprep.subr.bf16.mxu0 0
      %3360 = vmatpush1.bf16.msra.mxu0 0
      %3361 = vmatprep.subr.bf16.mxu0 0
      %3362 = vmatpush1.bf16.msra.mxu0 0
      %3363 = vmatprep.mubr.bf16.mxu0 0
      %3364 = vmatmul.mubr.bf16.gmra.mrb[0].mxu0 %v3280
      %v3365 = vpop.f32.mrb[0].mxu0
      %v3366 = vadd.f32 0.0, %v3365
      %v3367 = vpop.f32.mrb[0].mxu0
      %v3368 = vpop.f32.mrb[0].mxu0
      %v3369 = vadd.f32 0.0, %v3368
      %v3370 = vpop.f32.mrb[0].mxu0
      %3371 = vmatprep.mubr.bf16.mxu0 0
      %3372 = vmatmul.mubr.bf16.gmra.mrb[0].mxu0 %v3283
      %v3373 = vpop.f32.mrb[0].mxu0
      %v3374 = vadd.f32 0.0, %v3373
      %v3375 = vpop.f32.mrb[0].mxu0
      %v3376 = vpop.f32.mrb[0].mxu0
      %v3377 = vadd.f32 0.0, %v3376
      %v3378 = vpop.f32.mrb[0].mxu0
      %3379 = vmatprep.mubr.bf16.mxu0 0
      %3380 = vmatmul.mubr.bf16.gmra.mrb[0].mxu0 %v3286
      %v3381 = vpop.f32.mrb[0].mxu0
      %v3382 = vadd.f32 0.0, %v3381
      %v3383 = vpop.f32.mrb[0].mxu0
      %v3384 = vpop.f32.mrb[0].mxu0
      %v3385 = vadd.f32 0.0, %v3384
      %v3386 = vpop.f32.mrb[0].mxu0
      %3387 = vmatprep.mubr.bf16.mxu0 0
      %3388 = vmatmul.mubr.bf16.gmra.mrb[0].mxu0 %v3289
      %v3389 = vpop.f32.mrb[0].mxu0
      %v3390 = vadd.f32 0.0, %v3389
      %v3391 = vpop.f32.mrb[0].mxu0
      %v3392 = vpop.f32.mrb[0].mxu0
      %v3393 = vadd.f32 0.0, %v3392
      %v3394 = vpop.f32.mrb[0].mxu0
      %3395 = vmatprep.mubr.bf16.mxu0 0
      %3396 = vmatmul.mubr.bf16.gmra.mrb[0].mxu0 %v3292
      %v3397 = vpop.f32.mrb[0].mxu0
      %v3398 = vadd.f32 0.0, %v3397
      %v3399 = vpop.f32.mrb[0].mxu0
      %v3400 = vpop.f32.mrb[0].mxu0
      %v3401 = vadd.f32 0.0, %v3400
      %v3402 = vpop.f32.mrb[0].mxu0
      %3403 = vmatprep.mubr.bf16.mxu0 0
      %3404 = vmatmul.mubr.bf16.gmra.mrb[0].mxu0 %v3295
      %v3405 = vpop.f32.mrb[0].mxu0
      %v3406 = vadd.f32 0.0, %v3405
      %v3407 = vpop.f32.mrb[0].mxu0
      %v3408 = vpop.f32.mrb[0].mxu0
      %v3409 = vadd.f32 0.0, %v3408
      %v3410 = vpop.f32.mrb[0].mxu0
      %3411 = vmatprep.mubr.bf16.mxu0 0
      %3412 = vmatmul.mubr.bf16.gmra.mrb[0].mxu0 %v3298
      %v3413 = vpop.f32.mrb[0].mxu0
      %v3414 = vadd.f32 0.0, %v3413
      %v3415 = vpop.f32.mrb[0].mxu0
      %v3416 = vpop.f32.mrb[0].mxu0
      %v3417 = vadd.f32 0.0, %v3416
      %v3418 = vpop.f32.mrb[0].mxu0
      %3419 = vmatprep.mubr.bf16.mxu0 0
      %3420 = vmatmul.mubr.bf16.gmra.mrb[0].mxu0 %v3301
      %v3421 = vpop.f32.mrb[0].mxu0
      %v3422 = vadd.f32 0.0, %v3421
      %v3423 = vpop.f32.mrb[0].mxu0
      %v3424 = vpop.f32.mrb[0].mxu0
      %v3425 = vadd.f32 0.0, %v3424
      %v3426 = vpop.f32.mrb[0].mxu0
      %3427 = vmatprep.mubr.bf16.mxu0 0
      %3428 = vmatmul.mubr.bf16.gmra.mrb[0].mxu0 %v3304
      %v3429 = vpop.f32.mrb[0].mxu0
      %v3430 = vadd.f32 0.0, %v3429
      %v3431 = vpop.f32.mrb[0].mxu0
      %v3432 = vpop.f32.mrb[0].mxu0
      %v3433 = vadd.f32 0.0, %v3432
      %v3434 = vpop.f32.mrb[0].mxu0
      %3435 = vmatprep.mubr.bf16.mxu0 0
      %3436 = vmatmul.mubr.bf16.gmra.mrb[0].mxu0 %v3307
      %v3437 = vpop.f32.mrb[0].mxu0
      %v3438 = vadd.f32 0.0, %v3437
      %v3439 = vpop.f32.mrb[0].mxu0
      %v3440 = vpop.f32.mrb[0].mxu0
      %v3441 = vadd.f32 0.0, %v3440
      %v3442 = vpop.f32.mrb[0].mxu0
      %3443 = vmatprep.mubr.bf16.mxu0 0
      %3444 = vmatmul.mubr.bf16.gmra.mrb[0].mxu0 %v3310
      %v3445 = vpop.f32.mrb[0].mxu0
      %v3446 = vadd.f32 0.0, %v3445
      %v3447 = vpop.f32.mrb[0].mxu0
      %v3448 = vpop.f32.mrb[0].mxu0
      %v3449 = vadd.f32 0.0, %v3448
      %v3450 = vpop.f32.mrb[0].mxu0
      %3451 = vmatprep.mubr.bf16.mxu0 0
      %3452 = vmatmul.mubr.bf16.gmra.mrb[0].mxu0 %v3313
      %v3453 = vpop.f32.mrb[0].mxu0
      %v3454 = vadd.f32 0.0, %v3453
      %v3455 = vpop.f32.mrb[0].mxu0
      %v3456 = vpop.f32.mrb[0].mxu0
      %v3457 = vadd.f32 0.0, %v3456
      %v3458 = vpop.f32.mrb[0].mxu0
      %3459 = vmatprep.mubr.bf16.mxu0 0
      %3460 = vmatmul.mubr.bf16.gmra.mrb[0].mxu0 %v3316
      %v3461 = vpop.f32.mrb[0].mxu0
      %v3462 = vadd.f32 0.0, %v3461
      %v3463 = vpop.f32.mrb[0].mxu0
      %v3464 = vpop.f32.mrb[0].mxu0
      %v3465 = vadd.f32 0.0, %v3464
      %v3466 = vpop.f32.mrb[0].mxu0
      %3467 = vmatprep.mubr.bf16.mxu0 0
      %3468 = vmatmul.mubr.bf16.gmra.mrb[0].mxu0 %v3319
      %v3469 = vpop.f32.mrb[0].mxu0
      %v3470 = vadd.f32 0.0, %v3469
      %v3471 = vpop.f32.mrb[0].mxu0
      %v3472 = vpop.f32.mrb[0].mxu0
      %v3473 = vadd.f32 0.0, %v3472
      %v3474 = vpop.f32.mrb[0].mxu0
      %3475 = vmatprep.mubr.bf16.mxu0 0
      %3476 = vmatmul.mubr.bf16.gmra.mrb[0].mxu0 %v3322
      %v3477 = vpop.f32.mrb[0].mxu0
      %v3478 = vadd.f32 0.0, %v3477
      %v3479 = vpop.f32.mrb[0].mxu0
      %v3480 = vpop.f32.mrb[0].mxu0
      %v3481 = vadd.f32 0.0, %v3480
      %v3482 = vpop.f32.mrb[0].mxu0
      %3483 = vmatprep.mubr.bf16.mxu0 0
      %3484 = vmatmul.mubr.bf16.gmra.mrb[0].mxu0 %v3325
      %v3485 = vpop.f32.mrb[0].mxu0
      %v3486 = vadd.f32 0.0, %v3485
      %v3487 = vpop.f32.mrb[0].mxu0
      %v3488 = vpop.f32.mrb[0].mxu0
      %v3489 = vadd.f32 0.0, %v3488
      %v3490 = vpop.f32.mrb[0].mxu0
      %3491 = vdwg.mxu0
      %v3492 = vpack.c.bf16 %v3369, %v3366
      %v3493 = vpack.c.bf16 %v3377, %v3374
      %v3494 = vpack.c.bf16 %v3385, %v3382
      %v3495 = vpack.c.bf16 %v3393, %v3390
      %v3496 = vpack.c.bf16 %v3401, %v3398
      %v3497 = vpack.c.bf16 %v3409, %v3406
      %v3498 = vpack.c.bf16 %v3417, %v3414
      %v3499 = vpack.c.bf16 %v3425, %v3422
      %v3500 = vpack.c.bf16 %v3433, %v3430
      %v3501 = vpack.c.bf16 %v3441, %v3438
      %v3502 = vpack.c.bf16 %v3449, %v3446
      %v3503 = vpack.c.bf16 %v3457, %v3454
      %v3504 = vpack.c.bf16 %v3465, %v3462
      %v3505 = vpack.c.bf16 %v3473, %v3470
      %v3506 = vpack.c.bf16 %v3481, %v3478
      %v3507 = vpack.c.bf16 %v3489, %v3486
      %v3524 = vunpack.c.l.b16 %v3492
      %v3525 = vunpack.c.h.b16 %v3492
      %v3526 = vunpack.c.l.b16 %v3493
      %v3527 = vunpack.c.h.b16 %v3493
      %v3528 = vunpack.c.l.b16 %v3494
      %v3529 = vunpack.c.h.b16 %v3494
      %v3530 = vunpack.c.l.b16 %v3495
      %v3531 = vunpack.c.h.b16 %v3495
      %v3532 = vunpack.c.l.b16 %v3496
      %v3533 = vunpack.c.h.b16 %v3496
      %v3534 = vunpack.c.l.b16 %v3497
      %v3535 = vunpack.c.h.b16 %v3497
      %v3536 = vunpack.c.l.b16 %v3498
      %v3537 = vunpack.c.h.b16 %v3498
      %v3538 = vunpack.c.l.b16 %v3499
      %v3539 = vunpack.c.h.b16 %v3499
      %v3540 = vunpack.c.l.b16 %v3500
      %v3541 = vunpack.c.h.b16 %v3500
      %v3542 = vunpack.c.l.b16 %v3501
      %v3543 = vunpack.c.h.b16 %v3501
      %v3544 = vunpack.c.l.b16 %v3502
      %v3545 = vunpack.c.h.b16 %v3502
      %v3546 = vunpack.c.l.b16 %v3503
      %v3547 = vunpack.c.h.b16 %v3503
      %v3548 = vunpack.c.l.b16 %v3504
      %v3549 = vunpack.c.h.b16 %v3504
      %v3550 = vunpack.c.l.b16 %v3505
      %v3551 = vunpack.c.h.b16 %v3505
      %v3552 = vunpack.c.l.b16 %v3506
      %v3553 = vunpack.c.h.b16 %v3506
      %v3554 = vunpack.c.l.b16 %v3507
      %v3555 = vunpack.c.h.b16 %v3507
      %v3556 = vpack.c.b16 %v3524, %v3524
      %v3557 = vpack.c.b16 %v3525, %v3525
      %v3558 = vpack.c.b16 %v3526, %v3526
      %v3559 = vpack.c.b16 %v3527, %v3527
      %v3560 = vpack.c.b16 %v3528, %v3528
      %v3561 = vpack.c.b16 %v3529, %v3529
      %v3562 = vpack.c.b16 %v3530, %v3530
      %v3563 = vpack.c.b16 %v3531, %v3531
      %v3564 = vpack.c.b16 %v3532, %v3532
      %v3565 = vpack.c.b16 %v3533, %v3533
      %v3566 = vpack.c.b16 %v3534, %v3534
      %v3567 = vpack.c.b16 %v3535, %v3535
      %v3568 = vpack.c.b16 %v3536, %v3536
      %v3569 = vpack.c.b16 %v3537, %v3537
      %v3570 = vpack.c.b16 %v3538, %v3538
      %v3571 = vpack.c.b16 %v3539, %v3539
      %v3572 = vpack.c.b16 %v3540, %v3540
      %v3573 = vpack.c.b16 %v3541, %v3541
      %v3574 = vpack.c.b16 %v3542, %v3542
      %v3575 = vpack.c.b16 %v3543, %v3543
      %v3576 = vpack.c.b16 %v3544, %v3544
      %v3577 = vpack.c.b16 %v3545, %v3545
      %v3578 = vpack.c.b16 %v3546, %v3546
      %v3579 = vpack.c.b16 %v3547, %v3547
      %v3580 = vpack.c.b16 %v3548, %v3548
      %v3581 = vpack.c.b16 %v3549, %v3549
      %v3582 = vpack.c.b16 %v3550, %v3550
      %v3583 = vpack.c.b16 %v3551, %v3551
      %v3584 = vpack.c.b16 %v3552, %v3552
      %v3585 = vpack.c.b16 %v3553, %v3553
      %v3586 = vpack.c.b16 %v3554, %v3554
      %v3587 = vpack.c.b16 %v3555, %v3555
      %vm3620 = vcmask 388096
      %3621 = vst.msk [vmem:[%s143] sm:$0xf] %vm3620, %v3556
      %3622 = vst.msk [vmem:[%s143 + $0x4] sm:$0xf] %vm3620, %v3557
      %3623 = vst.msk [vmem:[%s143 + $0x8] sm:$0xf] %vm3620, %v3558
      %3624 = vst.msk [vmem:[%s143 + $0xc] sm:$0xf] %vm3620, %v3559
      %3625 = vst.msk [vmem:[%s143 + $0x10] sm:$0xf] %vm3620, %v3560
      %3626 = vst.msk [vmem:[%s143 + $0x14] sm:$0xf] %vm3620, %v3561
      %3627 = vst.msk [vmem:[%s143 + $0x18] sm:$0xf] %vm3620, %v3562
      %3628 = vst.msk [vmem:[%s143 + $0x1c] sm:$0xf] %vm3620, %v3563
      %3629 = vst.msk [vmem:[%s143 + $0x20] sm:$0xf] %vm3620, %v3564
      %3630 = vst.msk [vmem:[%s143 + $0x24] sm:$0xf] %vm3620, %v3565
      %3631 = vst.msk [vmem:[%s143 + $0x28] sm:$0xf] %vm3620, %v3566
      %3632 = vst.msk [vmem:[%s143 + $0x2c] sm:$0xf] %vm3620, %v3567
      %3633 = vst.msk [vmem:[%s143 + $0x30] sm:$0xf] %vm3620, %v3568
      %3634 = vst.msk [vmem:[%s143 + $0x34] sm:$0xf] %vm3620, %v3569
      %3635 = vst.msk [vmem:[%s143 + $0x38] sm:$0xf] %vm3620, %v3570
      %3636 = vst.msk [vmem:[%s143 + $0x3c] sm:$0xf] %vm3620, %v3571
      %3637 = vst.msk [vmem:[%s143 + $0x40] sm:$0xf] %vm3620, %v3572
      %3638 = vst.msk [vmem:[%s143 + $0x44] sm:$0xf] %vm3620, %v3573
      %3639 = vst.msk [vmem:[%s143 + $0x48] sm:$0xf] %vm3620, %v3574
      %3640 = vst.msk [vmem:[%s143 + $0x4c] sm:$0xf] %vm3620, %v3575
      %3641 = vst.msk [vmem:[%s143 + $0x50] sm:$0xf] %vm3620, %v3576
      %3642 = vst.msk [vmem:[%s143 + $0x54] sm:$0xf] %vm3620, %v3577
      %3643 = vst.msk [vmem:[%s143 + $0x58] sm:$0xf] %vm3620, %v3578
      %3644 = vst.msk [vmem:[%s143 + $0x5c] sm:$0xf] %vm3620, %v3579
      %3645 = vst.msk [vmem:[%s143 + $0x60] sm:$0xf] %vm3620, %v3580
      %3646 = vst.msk [vmem:[%s143 + $0x64] sm:$0xf] %vm3620, %v3581
      %3647 = vst.msk [vmem:[%s143 + $0x68] sm:$0xf] %vm3620, %v3582
      %3648 = vst.msk [vmem:[%s143 + $0x6c] sm:$0xf] %vm3620, %v3583
      %3649 = vst.msk [vmem:[%s143 + $0x70] sm:$0xf] %vm3620, %v3584
      %3650 = vst.msk [vmem:[%s143 + $0x74] sm:$0xf] %vm3620, %v3585
      %3651 = vst.msk [vmem:[%s143 + $0x78] sm:$0xf] %vm3620, %v3586
      %3652 = vst.msk [vmem:[%s143 + $0x7c] sm:$0xf] %vm3620, %v3587
      %p3653 = scmp.lt.s32.totalorder %s13, 1
      %s3654 = scalar_select %p3653, %s13, 1
      %s3655 = smul.addr %s3654, 32
      %s3656 = smul.addr %s3655, 4
      %s3657 = scalar_lea.vmem %s2, %s3656
      // Predicated region
      $region29: #{a_call__.3} parent=27 // pred_check
        %p3658 = pneg %p78
      $region30: #{a_call__.3} parent=27 // pred_check_branch
        %3660 = sbr.rel (%p3658) target = $region32
      $region31: #{a_call__.3} parent=27 // pred_region
        _
      $region32: #{a_call__.3} parent=27 // pred_fallthru
        _
    $region28: #{a_call__.3} parent=5 // pred_fallthru
      _
    %p3661 = scmp.le.s32.totalorder 2, %s8
    // Predicated region
    $region33: #{a_call__.3} parent=5 // pred_check
      %p3662 = pneg %p3661
    $region34: #{a_call__.3} parent=5 // pred_check_branch
      %3664 = sbr.rel (%p3662) target = $region36
    $region35: #{a_call__.3} parent=5 // pred_region
      %s3665 = ssub.s32 %s8, 2
      // Predicated region
      $region37: #{a_call__.3} parent=35 // pred_check
        %p3666 = pneg %p84
      $region38: #{a_call__.3} parent=35 // pred_check_branch
        %3668 = sbr.rel (%p3666) target = $region40
      $region39: #{a_call__.3} parent=35 // pred_region
        %p3669 = scmp.lt.s32.totalorder %s14, 1
        %s3670 = scalar_select %p3669, %s14, 1
        %s3671 = smul.addr %s3670, 32
        %s3672 = smul.addr %s3671, 4
        %s3673 = scalar_lea.vmem %s2, %s3672
      $region40: #{a_call__.3} parent=35 // pred_fallthru
        _
    $region36: #{a_call__.3} parent=5 // pred_fallthru
      _
  $region6: #{a_call__.3} parent=0 // loop_footer
    %s12 = sadd.s32 1, %s8
  $region7: #{a_call__.3} parent=0 // loop_footer_branch
    %7 = sbr.rel target = $region3
  $region8: #{a_call__.3} parent=0 // loop_exit
    _

</llo_original>
